<compile_context>
chip_gen: v6e
topology: v6e:2x2x1
jax: 0.10.0
libtpu: 0.0.40
codegen_flags: <defaults>
</compile_context>

<pallas_src>
import jax
import jax.numpy as jnp
from jax.experimental import pallas as pl
from jax.experimental.pallas import tpu as pltpu

NUM_CLASSES = 11
LANE = 128


def _round_up(n, m):
    return ((n + m - 1) // m) * m


# ----------------------------------------------------------------------------
# Fused kernel: 2-layer masked LSTM recurrence + FC head.
# Single gridless invocation, every operand is a whole-array VMEM block.
# ----------------------------------------------------------------------------
def fused_lstm_fc_kernel(x2d_ref, len_ref,
                         wih0_ref, whh0_ref, b0_ref,     # layer 0
                         wih1_ref, whh1_ref, b1_ref,     # layer 1
                         wfc1_ref, bfc1_ref,             # fc1 Linear(H, 512)
                         w2_ref, b2_ref,                 # fc2 (BN folded, padded)
                         hn_ref, out_ref,                # outputs
                         h0_all_ref):                    # scratch: (T*B, H)
    TB, _ = x2d_ref.shape
    B = len_ref.shape[0]
    T = TB // B
    H = whh0_ref.shape[0]

    lengths = len_ref[...]                  # (B, 1) int32
    whh0 = whh0_ref[...]                    # (H, 4H) f32 (recurrent dot in f32)
    whh1 = whh1_ref[...]                    # (H, 4H) f32

    def lstm_cell(gates, c_prev):
        # gates: (B, 4H) f32, PyTorch gate order i, f, g, o along 4H.
        # Full 128-lane activations: 1 sigmoid + 1 tanh on the whole register
        # (tanh-form sigmoid -> single EUP push), then slice the gates out.
        sig = 0.5 * jnp.tanh(0.5 * gates) + 0.5
        th = jnp.tanh(gates)
        i_g = sig[:, 0 * H:1 * H]
        f_g = sig[:, 1 * H:2 * H]
        g_g = th[:, 2 * H:3 * H]
        o_g = sig[:, 3 * H:4 * H]
        c_new = f_g * c_prev + i_g * g_g
        h_new = o_g * jnp.tanh(c_new)
        return h_new, c_new

    # ---- layer 0: hoisted input projection over the whole sequence --------
    # One (T*B, I) x (I, 4H) bf16 GEMM; bias added once (no per-step adds).
    xproj0 = jnp.dot(x2d_ref[...], wih0_ref[...],
                     preferred_element_type=jnp.float32) + b0_ref[...]

    h0 = jnp.zeros((B, H), jnp.float32)
    c0 = jnp.zeros((B, H), jnp.float32)
    for t in range(T):                       # T static & small -> full unroll
        mask = lengths > t                   # (B, 1): sequence still active
        g0 = xproj0[t * B:(t + 1) * B, :] + jnp.dot(
            h0, whh0, preferred_element_type=jnp.float32)
        h_new, c_new = lstm_cell(g0, c0)
        h0 = jnp.where(mask, h_new, h0)
        c0 = jnp.where(mask, c_new, c0)
        # Side-write (not on the recurrent chain); rows [t*B, (t+1)*B) so the
        # whole (T*B, H) scratch is fully overwritten before it is read.
        h0_all_ref[t * B:(t + 1) * B, :] = h0

    # ---- layer 1: hoisted input projection (one GEMM over all timesteps) --
    # Inter-layer dropout is identity in eval mode.
    xproj1 = jnp.dot(h0_all_ref[...].astype(wih1_ref.dtype), wih1_ref[...],
                     preferred_element_type=jnp.float32) + b1_ref[...]

    h1 = jnp.zeros((B, H), jnp.float32)
    c1 = jnp.zeros((B, H), jnp.float32)
    for t in range(T):
        mask = lengths > t
        g1 = xproj1[t * B:(t + 1) * B, :] + jnp.dot(
            h1, whh1, preferred_element_type=jnp.float32)
        h_new, c_new = lstm_cell(g1, c1)
        h1 = jnp.where(mask, h_new, h1)
        c1 = jnp.where(mask, c_new, c1)

    hn = h1                                  # hidden_output = hn[-1]

    # ---- fused FC head: Linear -> LeakyReLU(0.05) -> (BN folded) Linear ---
    y = jnp.dot(hn.astype(wfc1_ref.dtype), wfc1_ref[...],
                preferred_element_type=jnp.float32) + bfc1_ref[...]
    y = jnp.where(y >= 0.0, y, 0.05 * y)
    logits = jnp.dot(y.astype(w2_ref.dtype), w2_ref[...],
                     preferred_element_type=jnp.float32) + b2_ref[...]

    # Lane-padded hn store (zero spare lanes, then write the H valid lanes);
    # wrapper slices back to H. Logits are already lane-dense (128 wide).
    hn_ref[...] = jnp.zeros(hn_ref.shape, jnp.float32)
    hn_ref[:, :H] = hn
    out_ref[...] = logits


# ----------------------------------------------------------------------------
# Offline parameter fusion / folding (done once, outside the kernel).
# ----------------------------------------------------------------------------
def prepare_kernel_params(p, compute_dtype=jnp.bfloat16):
    kp = dict(
        # Input-projection weights (big hoisted GEMMs) in bf16 for the MXU.
        wih0=p["wih0"].astype(compute_dtype),
        wih1=p["wih1"].astype(compute_dtype),
        # Recurrent weights stay f32 -> no per-step requantization of h.
        whh0=p["whh0"].astype(jnp.float32),
        whh1=p["whh1"].astype(jnp.float32),
        # Biases summed offline (b_ih + b_hh) and folded into the projections.
        b0=(p["b_ih0"] + p["b_hh0"]).astype(jnp.float32),
        b1=(p["b_ih1"] + p["b_hh1"]).astype(jnp.float32),
        wfc1=p["fc1_w"].astype(compute_dtype),
        bfc1=p["fc1_b"].astype(jnp.float32),
    )

    # Fold eval-mode BatchNorm1d (between LeakyReLU and fc2) into fc2:
    #   y_bn = y*scale + shift;  logits = y @ (diag(scale) W2) + (shift@W2+b2)
    scale = p["bn_gamma"] * jax.lax.rsqrt(p["bn_var"] + 1e-5)       # (1, F)
    shift = p["bn_beta"] - p["bn_mean"] * scale                     # (1, F)
    w2 = p["fc2_w"] * scale.reshape(-1, 1)                          # (F, C)
    b2 = p["fc2_b"] + shift @ p["fc2_w"]                            # (1, C)

    # Pad fc2 output columns to a multiple of 128 -> lane-dense store.
    c = w2.shape[1]
    c_pad = _round_up(c, LANE)
    kp["w2"] = jnp.pad(w2, ((0, 0), (0, c_pad - c))).astype(compute_dtype)
    kp["b2"] = jnp.pad(b2, ((0, 0), (0, c_pad - c))).astype(jnp.float32)
    return kp


# ----------------------------------------------------------------------------
# Full model forward: (outputs, hidden_output)
# ----------------------------------------------------------------------------
@jax.jit
def lstm_model_forward(x, lengths, kp):
    T, B, I = x.shape
    H = kp["whh0"].shape[0]
    c_pad = kp["w2"].shape[1]

    # Cast x to bf16 once (MXU input) and flatten time into the GEMM M dim.
    x2d = x.reshape(T * B, I).astype(jnp.bfloat16)
    lengths2d = lengths.reshape(B, 1).astype(jnp.int32)

    hn_padded, logits_padded = pl.pallas_call(
        fused_lstm_fc_kernel,
        out_shape=(jax.ShapeDtypeStruct((B, LANE), jnp.float32),
                   jax.ShapeDtypeStruct((B, c_pad), jnp.float32)),
        scratch_shapes=[
            pltpu.VMEM((T * B, H), jnp.float32),   # layer-0 hidden states
        ],
    )(x2d, lengths2d,
      kp["wih0"], kp["whh0"], kp["b0"],
      kp["wih1"], kp["whh1"], kp["b1"],
      kp["wfc1"], kp["bfc1"], kp["w2"], kp["b2"])

    return logits_padded[:, :NUM_CLASSES], hn_padded[:, :H]


# ----------------------------------------------------------------------------
# Deterministic PyTorch-like parameter init (uniform(-k, k), k = 1/sqrt(fan)).
# Weights stored pre-transposed: (in_features, out_features).
# ----------------------------------------------------------------------------
def init_params(key, input_size, hidden_size, fc_dim=512, num_classes=NUM_CLASSES):
    H = hidden_size
    keys = jax.random.split(key, 12)
    k_lstm = H ** -0.5
    k_fc1 = H ** -0.5
    k_fc2 = fc_dim ** -0.5

    def u(kk, shape, bound):
        return jax.random.uniform(kk, shape, jnp.float32, -bound, bound)

    return {
        # LSTM layer 0
        "wih0": u(keys[0], (input_size, 4 * H), k_lstm),
        "whh0": u(keys[1], (H, 4 * H), k_lstm),
        "b_ih0": u(keys[2], (1, 4 * H), k_lstm),
        "b_hh0": u(keys[3], (1, 4 * H), k_lstm),
        # LSTM layer 1
        "wih1": u(keys[4], (H, 4 * H), k_lstm),
        "whh1": u(keys[5], (H, 4 * H), k_lstm),
        "b_ih1": u(keys[6], (1, 4 * H), k_lstm),
        "b_hh1": u(keys[7], (1, 4 * H), k_lstm),
        # fc1: Linear(H, 512)
        "fc1_w": u(keys[8], (H, fc_dim), k_fc1),
        "fc1_b": u(keys[9], (1, fc_dim), k_fc1),
        # BatchNorm1d(512) eval-mode stats
        "bn_gamma": jnp.ones((1, fc_dim), jnp.float32),
        "bn_beta": jnp.zeros((1, fc_dim), jnp.float32),
        "bn_mean": jnp.zeros((1, fc_dim), jnp.float32),
        "bn_var": jnp.ones((1, fc_dim), jnp.float32),
        # fc2: Linear(512, 11)
        "fc2_w": u(keys[10], (fc_dim, num_classes), k_fc2),
        "fc2_b": u(keys[11], (1, num_classes), k_fc2),
    }


# ----------------------------------------------------------------------------
# Pure-JAX f32 reference (unfused, un-folded) for correctness checking.
# ----------------------------------------------------------------------------
def reference_forward(x, lengths, p):
    T, B, _ = x.shape
    H = p["whh0"].shape[0]
    h = [jnp.zeros((B, H), jnp.float32), jnp.zeros((B, H), jnp.float32)]
    c = [jnp.zeros((B, H), jnp.float32), jnp.zeros((B, H), jnp.float32)]

    def cell(x_in, h_prev, c_prev, wih, whh, b):
        g = x_in @ wih + h_prev @ whh + b
        i = jax.nn.sigmoid(g[:, :H])
        f = jax.nn.sigmoid(g[:, H:2 * H])
        gg = jnp.tanh(g[:, 2 * H:3 * H])
        o = jax.nn.sigmoid(g[:, 3 * H:])
        c_new = f * c_prev + i * gg
        return o * jnp.tanh(c_new), c_new

    for t in range(T):
        mask = (t < lengths).reshape(B, 1)
        h0n, c0n = cell(x[t], h[0], c[0], p["wih0"], p["whh0"],
                        p["b_ih0"] + p["b_hh0"])
        h[0] = jnp.where(mask, h0n, h[0])
        c[0] = jnp.where(mask, c0n, c[0])
        h1n, c1n = cell(h[0], h[1], c[1], p["wih1"], p["whh1"],
                        p["b_ih1"] + p["b_hh1"])
        h[1] = jnp.where(mask, h1n, h[1])
        c[1] = jnp.where(mask, c1n, c[1])

    hn = h[1]
    y = hn @ p["fc1_w"] + p["fc1_b"]
    y = jnp.where(y >= 0, y, 0.05 * y)
    y = ((y - p["bn_mean"]) * jax.lax.rsqrt(p["bn_var"] + 1e-5)
         * p["bn_gamma"] + p["bn_beta"])
    return y @ p["fc2_w"] + p["fc2_b"], hn


if __name__ == "__main__":
    T, B, INPUT_SIZE, HIDDEN_SIZE = 8, 4, 16, 32

    key = jax.random.PRNGKey(0)
    k_x, k_p = jax.random.split(key)

    x = jax.random.normal(k_x, (T, B, INPUT_SIZE), jnp.float32)
    lengths = jnp.array([8, 7, 5, 3], jnp.int32)   # sorted descending

    params = init_params(k_p, INPUT_SIZE, HIDDEN_SIZE)
    kparams = prepare_kernel_params(params)

    outputs, hidden_output = lstm_model_forward(x, lengths, kparams)
    jax.block_until_ready((outputs, hidden_output))

    assert outputs.shape == (B, NUM_CLASSES)
    assert hidden_output.shape == (B, HIDDEN_SIZE)

    # Correctness vs pure-JAX f32 reference (bf16 MXU inputs -> loose tol).
    ref_out, ref_hn = reference_forward(x, lengths, params)
    assert jnp.allclose(hidden_output, ref_hn, atol=5e-2, rtol=5e-2), (
        float(jnp.max(jnp.abs(hidden_output - ref_hn))))
    assert jnp.allclose(outputs, ref_out, atol=5e-2, rtol=5e-2), (
        float(jnp.max(jnp.abs(outputs - ref_out))))

    print("KERNEL_OK")
</pallas_src>

<mosaic_0001>
module attributes {stable_mosaic.version = 11 : i64} {
  func.func @fused_lstm_fc_kernel(%arg0: memref<32x16xbf16, #tpu.memory_space<vmem>>, %arg1: memref<4x1xi32, #tpu.memory_space<vmem>>, %arg2: memref<16x128xbf16, #tpu.memory_space<vmem>>, %arg3: memref<32x128xf32, #tpu.memory_space<vmem>>, %arg4: memref<1x128xf32, #tpu.memory_space<vmem>>, %arg5: memref<32x128xbf16, #tpu.memory_space<vmem>>, %arg6: memref<32x128xf32, #tpu.memory_space<vmem>>, %arg7: memref<1x128xf32, #tpu.memory_space<vmem>>, %arg8: memref<32x512xbf16, #tpu.memory_space<vmem>>, %arg9: memref<1x512xf32, #tpu.memory_space<vmem>>, %arg10: memref<512x128xbf16, #tpu.memory_space<vmem>>, %arg11: memref<1x128xf32, #tpu.memory_space<vmem>>, %arg12: memref<4x128xf32, #tpu.memory_space<vmem>>, %arg13: memref<4x128xf32, #tpu.memory_space<vmem>>, %arg14: memref<32x32xf32, #tpu.memory_space<vmem>>) attributes {dimension_semantics = [], scalar_prefetch = 0 : i64, scratch_operands = 1 : i64, tpu.core_type = #tpu.core_type<tc>} {
    %c0 = arith.constant 0 : index
    %c0_0 = arith.constant 0 : index
    %0 = vector.load %arg1[%c0, %c0_0] : memref<4x1xi32, #tpu.memory_space<vmem>>, vector<4x1xi32>
    %c0_1 = arith.constant 0 : index
    %c0_2 = arith.constant 0 : index
    %1 = vector.load %arg3[%c0_1, %c0_2] : memref<32x128xf32, #tpu.memory_space<vmem>>, vector<32x128xf32>
    %c0_3 = arith.constant 0 : index
    %c0_4 = arith.constant 0 : index
    %2 = vector.load %arg6[%c0_3, %c0_4] : memref<32x128xf32, #tpu.memory_space<vmem>>, vector<32x128xf32>
    %c0_5 = arith.constant 0 : index
    %c0_6 = arith.constant 0 : index
    %3 = vector.load %arg0[%c0_5, %c0_6] : memref<32x16xbf16, #tpu.memory_space<vmem>>, vector<32x16xbf16>
    %c0_7 = arith.constant 0 : index
    %c0_8 = arith.constant 0 : index
    %4 = vector.load %arg2[%c0_7, %c0_8] : memref<16x128xbf16, #tpu.memory_space<vmem>>, vector<16x128xbf16>
    %cst = arith.constant dense<0.000000e+00> : vector<32x128xf32>
    %5 = tpu.matmul %3, %4, %cst {dimension_numbers = #tpu.dot_dimension_numbers<[1], [0], [0], [1], [0, 0, 1, 1], [], []>} : vector<32x16xbf16>, vector<16x128xbf16>, vector<32x128xf32> -> vector<32x128xf32>
    %c0_9 = arith.constant 0 : index
    %c0_10 = arith.constant 0 : index
    %6 = vector.load %arg4[%c0_9, %c0_10] : memref<1x128xf32, #tpu.memory_space<vmem>>, vector<1x128xf32>
    %7 = vector.broadcast %6 : vector<1x128xf32> to vector<32x128xf32>
    %8 = arith.addf %5, %7 : vector<32x128xf32>
    %cst_11 = arith.constant 0.000000e+00 : f32
    %9 = vector.broadcast %cst_11 : f32 to vector<4x32xf32>
    %cst_12 = arith.constant 0.000000e+00 : f32
    %10 = vector.broadcast %cst_12 : f32 to vector<4x32xf32>
    %c0_i32 = arith.constant 0 : i32
    %11 = vector.broadcast %c0_i32 : i32 to vector<4x1xi32>
    %12 = arith.cmpi sgt, %0, %11 : vector<4x1xi32>
    %13 = vector.extract_strided_slice %8 {offsets = [0, 0], sizes = [4, 128], strides = [1, 1]} : vector<32x128xf32> to vector<4x128xf32>
    %cst_13 = arith.constant dense<0.000000e+00> : vector<4x128xf32>
    %14 = tpu.matmul %9, %1, %cst_13 {dimension_numbers = #tpu.dot_dimension_numbers<[1], [0], [0], [1], [0, 0, 1, 1], [], []>} : vector<4x32xf32>, vector<32x128xf32>, vector<4x128xf32> -> vector<4x128xf32>
    %15 = arith.addf %13, %14 : vector<4x128xf32>
    %cst_14 = arith.constant 5.000000e-01 : f32
    %16 = vector.broadcast %cst_14 : f32 to vector<4x128xf32>
    %17 = arith.mulf %16, %15 : vector<4x128xf32>
    %18 = math.tanh %17 : vector<4x128xf32>
    %cst_15 = arith.constant 5.000000e-01 : f32
    %19 = vector.broadcast %cst_15 : f32 to vector<4x128xf32>
    %20 = arith.mulf %19, %18 : vector<4x128xf32>
    %cst_16 = arith.constant 5.000000e-01 : f32
    %21 = vector.broadcast %cst_16 : f32 to vector<4x128xf32>
    %22 = arith.addf %20, %21 : vector<4x128xf32>
    %23 = math.tanh %15 : vector<4x128xf32>
    %24 = vector.extract_strided_slice %22 {offsets = [0, 0], sizes = [4, 32], strides = [1, 1]} : vector<4x128xf32> to vector<4x32xf32>
    %25 = vector.extract_strided_slice %22 {offsets = [0, 32], sizes = [4, 32], strides = [1, 1]} : vector<4x128xf32> to vector<4x32xf32>
    %26 = vector.extract_strided_slice %23 {offsets = [0, 64], sizes = [4, 32], strides = [1, 1]} : vector<4x128xf32> to vector<4x32xf32>
    %27 = vector.extract_strided_slice %22 {offsets = [0, 96], sizes = [4, 32], strides = [1, 1]} : vector<4x128xf32> to vector<4x32xf32>
    %28 = arith.mulf %25, %10 : vector<4x32xf32>
    %29 = arith.mulf %24, %26 : vector<4x32xf32>
    %30 = arith.addf %28, %29 : vector<4x32xf32>
    %31 = math.tanh %30 : vector<4x32xf32>
    %32 = arith.mulf %27, %31 : vector<4x32xf32>
    %33 = vector.shape_cast %12 : vector<4x1xi1> to vector<4x1xi1>
    %34 = vector.broadcast %33 : vector<4x1xi1> to vector<4x32xi1>
    %35 = arith.select %34, %32, %9 : vector<4x32xi1>, vector<4x32xf32>
    %36 = vector.shape_cast %12 : vector<4x1xi1> to vector<4x1xi1>
    %37 = vector.broadcast %36 : vector<4x1xi1> to vector<4x32xi1>
    %38 = arith.select %37, %30, %10 : vector<4x32xi1>, vector<4x32xf32>
    %c0_17 = arith.constant 0 : index
    %c0_18 = arith.constant 0 : index
    %39 = vector.load %arg14[%c0_17, %c0_18] : memref<32x32xf32, #tpu.memory_space<vmem>>, vector<4x32xf32>
    tpu.vector_store %arg14[%c0_17, %c0_18], %35 {strides = array<i32>} : memref<32x32xf32, #tpu.memory_space<vmem>>, vector<4x32xf32>,
    %c1_i32 = arith.constant 1 : i32
    %40 = vector.broadcast %c1_i32 : i32 to vector<4x1xi32>
    %41 = arith.cmpi sgt, %0, %40 : vector<4x1xi32>
    %42 = vector.extract_strided_slice %8 {offsets = [4, 0], sizes = [4, 128], strides = [1, 1]} : vector<32x128xf32> to vector<4x128xf32>
    %cst_19 = arith.constant dense<0.000000e+00> : vector<4x128xf32>
    %43 = tpu.matmul %35, %1, %cst_19 {dimension_numbers = #tpu.dot_dimension_numbers<[1], [0], [0], [1], [0, 0, 1, 1], [], []>} : vector<4x32xf32>, vector<32x128xf32>, vector<4x128xf32> -> vector<4x128xf32>
    %44 = arith.addf %42, %43 : vector<4x128xf32>
    %cst_20 = arith.constant 5.000000e-01 : f32
    %45 = vector.broadcast %cst_20 : f32 to vector<4x128xf32>
    %46 = arith.mulf %45, %44 : vector<4x128xf32>
    %47 = math.tanh %46 : vector<4x128xf32>
    %cst_21 = arith.constant 5.000000e-01 : f32
    %48 = vector.broadcast %cst_21 : f32 to vector<4x128xf32>
    %49 = arith.mulf %48, %47 : vector<4x128xf32>
    %cst_22 = arith.constant 5.000000e-01 : f32
    %50 = vector.broadcast %cst_22 : f32 to vector<4x128xf32>
    %51 = arith.addf %49, %50 : vector<4x128xf32>
    %52 = math.tanh %44 : vector<4x128xf32>
    %53 = vector.extract_strided_slice %51 {offsets = [0, 0], sizes = [4, 32], strides = [1, 1]} : vector<4x128xf32> to vector<4x32xf32>
    %54 = vector.extract_strided_slice %51 {offsets = [0, 32], sizes = [4, 32], strides = [1, 1]} : vector<4x128xf32> to vector<4x32xf32>
    %55 = vector.extract_strided_slice %52 {offsets = [0, 64], sizes = [4, 32], strides = [1, 1]} : vector<4x128xf32> to vector<4x32xf32>
    %56 = vector.extract_strided_slice %51 {offsets = [0, 96], sizes = [4, 32], strides = [1, 1]} : vector<4x128xf32> to vector<4x32xf32>
    %57 = arith.mulf %54, %38 : vector<4x32xf32>
    %58 = arith.mulf %53, %55 : vector<4x32xf32>
    %59 = arith.addf %57, %58 : vector<4x32xf32>
    %60 = math.tanh %59 : vector<4x32xf32>
    %61 = arith.mulf %56, %60 : vector<4x32xf32>
    %62 = vector.shape_cast %41 : vector<4x1xi1> to vector<4x1xi1>
    %63 = vector.broadcast %62 : vector<4x1xi1> to vector<4x32xi1>
    %64 = arith.select %63, %61, %35 : vector<4x32xi1>, vector<4x32xf32>
    %65 = vector.shape_cast %41 : vector<4x1xi1> to vector<4x1xi1>
    %66 = vector.broadcast %65 : vector<4x1xi1> to vector<4x32xi1>
    %67 = arith.select %66, %59, %38 : vector<4x32xi1>, vector<4x32xf32>
    %c4 = arith.constant 4 : index
    %c0_23 = arith.constant 0 : index
    %68 = vector.load %arg14[%c4, %c0_23] : memref<32x32xf32, #tpu.memory_space<vmem>>, vector<4x32xf32>
    tpu.vector_store %arg14[%c4, %c0_23], %64 {strides = array<i32>} : memref<32x32xf32, #tpu.memory_space<vmem>>, vector<4x32xf32>,
    %c2_i32 = arith.constant 2 : i32
    %69 = vector.broadcast %c2_i32 : i32 to vector<4x1xi32>
    %70 = arith.cmpi sgt, %0, %69 : vector<4x1xi32>
    %71 = vector.extract_strided_slice %8 {offsets = [8, 0], sizes = [4, 128], strides = [1, 1]} : vector<32x128xf32> to vector<4x128xf32>
    %cst_24 = arith.constant dense<0.000000e+00> : vector<4x128xf32>
    %72 = tpu.matmul %64, %1, %cst_24 {dimension_numbers = #tpu.dot_dimension_numbers<[1], [0], [0], [1], [0, 0, 1, 1], [], []>} : vector<4x32xf32>, vector<32x128xf32>, vector<4x128xf32> -> vector<4x128xf32>
    %73 = arith.addf %71, %72 : vector<4x128xf32>
    %cst_25 = arith.constant 5.000000e-01 : f32
    %74 = vector.broadcast %cst_25 : f32 to vector<4x128xf32>
    %75 = arith.mulf %74, %73 : vector<4x128xf32>
    %76 = math.tanh %75 : vector<4x128xf32>
    %cst_26 = arith.constant 5.000000e-01 : f32
    %77 = vector.broadcast %cst_26 : f32 to vector<4x128xf32>
    %78 = arith.mulf %77, %76 : vector<4x128xf32>
    %cst_27 = arith.constant 5.000000e-01 : f32
    %79 = vector.broadcast %cst_27 : f32 to vector<4x128xf32>
    %80 = arith.addf %78, %79 : vector<4x128xf32>
    %81 = math.tanh %73 : vector<4x128xf32>
    %82 = vector.extract_strided_slice %80 {offsets = [0, 0], sizes = [4, 32], strides = [1, 1]} : vector<4x128xf32> to vector<4x32xf32>
    %83 = vector.extract_strided_slice %80 {offsets = [0, 32], sizes = [4, 32], strides = [1, 1]} : vector<4x128xf32> to vector<4x32xf32>
    %84 = vector.extract_strided_slice %81 {offsets = [0, 64], sizes = [4, 32], strides = [1, 1]} : vector<4x128xf32> to vector<4x32xf32>
    %85 = vector.extract_strided_slice %80 {offsets = [0, 96], sizes = [4, 32], strides = [1, 1]} : vector<4x128xf32> to vector<4x32xf32>
    %86 = arith.mulf %83, %67 : vector<4x32xf32>
    %87 = arith.mulf %82, %84 : vector<4x32xf32>
    %88 = arith.addf %86, %87 : vector<4x32xf32>
    %89 = math.tanh %88 : vector<4x32xf32>
    %90 = arith.mulf %85, %89 : vector<4x32xf32>
    %91 = vector.shape_cast %70 : vector<4x1xi1> to vector<4x1xi1>
    %92 = vector.broadcast %91 : vector<4x1xi1> to vector<4x32xi1>
    %93 = arith.select %92, %90, %64 : vector<4x32xi1>, vector<4x32xf32>
    %94 = vector.shape_cast %70 : vector<4x1xi1> to vector<4x1xi1>
    %95 = vector.broadcast %94 : vector<4x1xi1> to vector<4x32xi1>
    %96 = arith.select %95, %88, %67 : vector<4x32xi1>, vector<4x32xf32>
    %c8 = arith.constant 8 : index
    %c0_28 = arith.constant 0 : index
    %97 = vector.load %arg14[%c8, %c0_28] : memref<32x32xf32, #tpu.memory_space<vmem>>, vector<4x32xf32>
    tpu.vector_store %arg14[%c8, %c0_28], %93 {strides = array<i32>} : memref<32x32xf32, #tpu.memory_space<vmem>>, vector<4x32xf32>,
    %c3_i32 = arith.constant 3 : i32
    %98 = vector.broadcast %c3_i32 : i32 to vector<4x1xi32>
    %99 = arith.cmpi sgt, %0, %98 : vector<4x1xi32>
    %100 = vector.extract_strided_slice %8 {offsets = [12, 0], sizes = [4, 128], strides = [1, 1]} : vector<32x128xf32> to vector<4x128xf32>
    %cst_29 = arith.constant dense<0.000000e+00> : vector<4x128xf32>
    %101 = tpu.matmul %93, %1, %cst_29 {dimension_numbers = #tpu.dot_dimension_numbers<[1], [0], [0], [1], [0, 0, 1, 1], [], []>} : vector<4x32xf32>, vector<32x128xf32>, vector<4x128xf32> -> vector<4x128xf32>
    %102 = arith.addf %100, %101 : vector<4x128xf32>
    %cst_30 = arith.constant 5.000000e-01 : f32
    %103 = vector.broadcast %cst_30 : f32 to vector<4x128xf32>
    %104 = arith.mulf %103, %102 : vector<4x128xf32>
    %105 = math.tanh %104 : vector<4x128xf32>
    %cst_31 = arith.constant 5.000000e-01 : f32
    %106 = vector.broadcast %cst_31 : f32 to vector<4x128xf32>
    %107 = arith.mulf %106, %105 : vector<4x128xf32>
    %cst_32 = arith.constant 5.000000e-01 : f32
    %108 = vector.broadcast %cst_32 : f32 to vector<4x128xf32>
    %109 = arith.addf %107, %108 : vector<4x128xf32>
    %110 = math.tanh %102 : vector<4x128xf32>
    %111 = vector.extract_strided_slice %109 {offsets = [0, 0], sizes = [4, 32], strides = [1, 1]} : vector<4x128xf32> to vector<4x32xf32>
    %112 = vector.extract_strided_slice %109 {offsets = [0, 32], sizes = [4, 32], strides = [1, 1]} : vector<4x128xf32> to vector<4x32xf32>
    %113 = vector.extract_strided_slice %110 {offsets = [0, 64], sizes = [4, 32], strides = [1, 1]} : vector<4x128xf32> to vector<4x32xf32>
    %114 = vector.extract_strided_slice %109 {offsets = [0, 96], sizes = [4, 32], strides = [1, 1]} : vector<4x128xf32> to vector<4x32xf32>
    %115 = arith.mulf %112, %96 : vector<4x32xf32>
    %116 = arith.mulf %111, %113 : vector<4x32xf32>
    %117 = arith.addf %115, %116 : vector<4x32xf32>
    %118 = math.tanh %117 : vector<4x32xf32>
    %119 = arith.mulf %114, %118 : vector<4x32xf32>
    %120 = vector.shape_cast %99 : vector<4x1xi1> to vector<4x1xi1>
    %121 = vector.broadcast %120 : vector<4x1xi1> to vector<4x32xi1>
    %122 = arith.select %121, %119, %93 : vector<4x32xi1>, vector<4x32xf32>
    %123 = vector.shape_cast %99 : vector<4x1xi1> to vector<4x1xi1>
    %124 = vector.broadcast %123 : vector<4x1xi1> to vector<4x32xi1>
    %125 = arith.select %124, %117, %96 : vector<4x32xi1>, vector<4x32xf32>
    %c12 = arith.constant 12 : index
    %c0_33 = arith.constant 0 : index
    %126 = vector.load %arg14[%c12, %c0_33] : memref<32x32xf32, #tpu.memory_space<vmem>>, vector<4x32xf32>
    tpu.vector_store %arg14[%c12, %c0_33], %122 {strides = array<i32>} : memref<32x32xf32, #tpu.memory_space<vmem>>, vector<4x32xf32>,
    %c4_i32 = arith.constant 4 : i32
    %127 = vector.broadcast %c4_i32 : i32 to vector<4x1xi32>
    %128 = arith.cmpi sgt, %0, %127 : vector<4x1xi32>
    %129 = vector.extract_strided_slice %8 {offsets = [16, 0], sizes = [4, 128], strides = [1, 1]} : vector<32x128xf32> to vector<4x128xf32>
    %cst_34 = arith.constant dense<0.000000e+00> : vector<4x128xf32>
    %130 = tpu.matmul %122, %1, %cst_34 {dimension_numbers = #tpu.dot_dimension_numbers<[1], [0], [0], [1], [0, 0, 1, 1], [], []>} : vector<4x32xf32>, vector<32x128xf32>, vector<4x128xf32> -> vector<4x128xf32>
    %131 = arith.addf %129, %130 : vector<4x128xf32>
    %cst_35 = arith.constant 5.000000e-01 : f32
    %132 = vector.broadcast %cst_35 : f32 to vector<4x128xf32>
    %133 = arith.mulf %132, %131 : vector<4x128xf32>
    %134 = math.tanh %133 : vector<4x128xf32>
    %cst_36 = arith.constant 5.000000e-01 : f32
    %135 = vector.broadcast %cst_36 : f32 to vector<4x128xf32>
    %136 = arith.mulf %135, %134 : vector<4x128xf32>
    %cst_37 = arith.constant 5.000000e-01 : f32
    %137 = vector.broadcast %cst_37 : f32 to vector<4x128xf32>
    %138 = arith.addf %136, %137 : vector<4x128xf32>
    %139 = math.tanh %131 : vector<4x128xf32>
    %140 = vector.extract_strided_slice %138 {offsets = [0, 0], sizes = [4, 32], strides = [1, 1]} : vector<4x128xf32> to vector<4x32xf32>
    %141 = vector.extract_strided_slice %138 {offsets = [0, 32], sizes = [4, 32], strides = [1, 1]} : vector<4x128xf32> to vector<4x32xf32>
    %142 = vector.extract_strided_slice %139 {offsets = [0, 64], sizes = [4, 32], strides = [1, 1]} : vector<4x128xf32> to vector<4x32xf32>
    %143 = vector.extract_strided_slice %138 {offsets = [0, 96], sizes = [4, 32], strides = [1, 1]} : vector<4x128xf32> to vector<4x32xf32>
    %144 = arith.mulf %141, %125 : vector<4x32xf32>
    %145 = arith.mulf %140, %142 : vector<4x32xf32>
    %146 = arith.addf %144, %145 : vector<4x32xf32>
    %147 = math.tanh %146 : vector<4x32xf32>
    %148 = arith.mulf %143, %147 : vector<4x32xf32>
    %149 = vector.shape_cast %128 : vector<4x1xi1> to vector<4x1xi1>
    %150 = vector.broadcast %149 : vector<4x1xi1> to vector<4x32xi1>
    %151 = arith.select %150, %148, %122 : vector<4x32xi1>, vector<4x32xf32>
    %152 = vector.shape_cast %128 : vector<4x1xi1> to vector<4x1xi1>
    %153 = vector.broadcast %152 : vector<4x1xi1> to vector<4x32xi1>
    %154 = arith.select %153, %146, %125 : vector<4x32xi1>, vector<4x32xf32>
    %c16 = arith.constant 16 : index
    %c0_38 = arith.constant 0 : index
    %155 = vector.load %arg14[%c16, %c0_38] : memref<32x32xf32, #tpu.memory_space<vmem>>, vector<4x32xf32>
    tpu.vector_store %arg14[%c16, %c0_38], %151 {strides = array<i32>} : memref<32x32xf32, #tpu.memory_space<vmem>>, vector<4x32xf32>,
    %c5_i32 = arith.constant 5 : i32
    %156 = vector.broadcast %c5_i32 : i32 to vector<4x1xi32>
    %157 = arith.cmpi sgt, %0, %156 : vector<4x1xi32>
    %158 = vector.extract_strided_slice %8 {offsets = [20, 0], sizes = [4, 128], strides = [1, 1]} : vector<32x128xf32> to vector<4x128xf32>
    %cst_39 = arith.constant dense<0.000000e+00> : vector<4x128xf32>
    %159 = tpu.matmul %151, %1, %cst_39 {dimension_numbers = #tpu.dot_dimension_numbers<[1], [0], [0], [1], [0, 0, 1, 1], [], []>} : vector<4x32xf32>, vector<32x128xf32>, vector<4x128xf32> -> vector<4x128xf32>
    %160 = arith.addf %158, %159 : vector<4x128xf32>
    %cst_40 = arith.constant 5.000000e-01 : f32
    %161 = vector.broadcast %cst_40 : f32 to vector<4x128xf32>
    %162 = arith.mulf %161, %160 : vector<4x128xf32>
    %163 = math.tanh %162 : vector<4x128xf32>
    %cst_41 = arith.constant 5.000000e-01 : f32
    %164 = vector.broadcast %cst_41 : f32 to vector<4x128xf32>
    %165 = arith.mulf %164, %163 : vector<4x128xf32>
    %cst_42 = arith.constant 5.000000e-01 : f32
    %166 = vector.broadcast %cst_42 : f32 to vector<4x128xf32>
    %167 = arith.addf %165, %166 : vector<4x128xf32>
    %168 = math.tanh %160 : vector<4x128xf32>
    %169 = vector.extract_strided_slice %167 {offsets = [0, 0], sizes = [4, 32], strides = [1, 1]} : vector<4x128xf32> to vector<4x32xf32>
    %170 = vector.extract_strided_slice %167 {offsets = [0, 32], sizes = [4, 32], strides = [1, 1]} : vector<4x128xf32> to vector<4x32xf32>
    %171 = vector.extract_strided_slice %168 {offsets = [0, 64], sizes = [4, 32], strides = [1, 1]} : vector<4x128xf32> to vector<4x32xf32>
    %172 = vector.extract_strided_slice %167 {offsets = [0, 96], sizes = [4, 32], strides = [1, 1]} : vector<4x128xf32> to vector<4x32xf32>
    %173 = arith.mulf %170, %154 : vector<4x32xf32>
    %174 = arith.mulf %169, %171 : vector<4x32xf32>
    %175 = arith.addf %173, %174 : vector<4x32xf32>
    %176 = math.tanh %175 : vector<4x32xf32>
    %177 = arith.mulf %172, %176 : vector<4x32xf32>
    %178 = vector.shape_cast %157 : vector<4x1xi1> to vector<4x1xi1>
    %179 = vector.broadcast %178 : vector<4x1xi1> to vector<4x32xi1>
    %180 = arith.select %179, %177, %151 : vector<4x32xi1>, vector<4x32xf32>
    %181 = vector.shape_cast %157 : vector<4x1xi1> to vector<4x1xi1>
    %182 = vector.broadcast %181 : vector<4x1xi1> to vector<4x32xi1>
    %183 = arith.select %182, %175, %154 : vector<4x32xi1>, vector<4x32xf32>
    %c20 = arith.constant 20 : index
    %c0_43 = arith.constant 0 : index
    %184 = vector.load %arg14[%c20, %c0_43] : memref<32x32xf32, #tpu.memory_space<vmem>>, vector<4x32xf32>
    tpu.vector_store %arg14[%c20, %c0_43], %180 {strides = array<i32>} : memref<32x32xf32, #tpu.memory_space<vmem>>, vector<4x32xf32>,
    %c6_i32 = arith.constant 6 : i32
    %185 = vector.broadcast %c6_i32 : i32 to vector<4x1xi32>
    %186 = arith.cmpi sgt, %0, %185 : vector<4x1xi32>
    %187 = vector.extract_strided_slice %8 {offsets = [24, 0], sizes = [4, 128], strides = [1, 1]} : vector<32x128xf32> to vector<4x128xf32>
    %cst_44 = arith.constant dense<0.000000e+00> : vector<4x128xf32>
    %188 = tpu.matmul %180, %1, %cst_44 {dimension_numbers = #tpu.dot_dimension_numbers<[1], [0], [0], [1], [0, 0, 1, 1], [], []>} : vector<4x32xf32>, vector<32x128xf32>, vector<4x128xf32> -> vector<4x128xf32>
    %189 = arith.addf %187, %188 : vector<4x128xf32>
    %cst_45 = arith.constant 5.000000e-01 : f32
    %190 = vector.broadcast %cst_45 : f32 to vector<4x128xf32>
    %191 = arith.mulf %190, %189 : vector<4x128xf32>
    %192 = math.tanh %191 : vector<4x128xf32>
    %cst_46 = arith.constant 5.000000e-01 : f32
    %193 = vector.broadcast %cst_46 : f32 to vector<4x128xf32>
    %194 = arith.mulf %193, %192 : vector<4x128xf32>
    %cst_47 = arith.constant 5.000000e-01 : f32
    %195 = vector.broadcast %cst_47 : f32 to vector<4x128xf32>
    %196 = arith.addf %194, %195 : vector<4x128xf32>
    %197 = math.tanh %189 : vector<4x128xf32>
    %198 = vector.extract_strided_slice %196 {offsets = [0, 0], sizes = [4, 32], strides = [1, 1]} : vector<4x128xf32> to vector<4x32xf32>
    %199 = vector.extract_strided_slice %196 {offsets = [0, 32], sizes = [4, 32], strides = [1, 1]} : vector<4x128xf32> to vector<4x32xf32>
    %200 = vector.extract_strided_slice %197 {offsets = [0, 64], sizes = [4, 32], strides = [1, 1]} : vector<4x128xf32> to vector<4x32xf32>
    %201 = vector.extract_strided_slice %196 {offsets = [0, 96], sizes = [4, 32], strides = [1, 1]} : vector<4x128xf32> to vector<4x32xf32>
    %202 = arith.mulf %199, %183 : vector<4x32xf32>
    %203 = arith.mulf %198, %200 : vector<4x32xf32>
    %204 = arith.addf %202, %203 : vector<4x32xf32>
    %205 = math.tanh %204 : vector<4x32xf32>
    %206 = arith.mulf %201, %205 : vector<4x32xf32>
    %207 = vector.shape_cast %186 : vector<4x1xi1> to vector<4x1xi1>
    %208 = vector.broadcast %207 : vector<4x1xi1> to vector<4x32xi1>
    %209 = arith.select %208, %206, %180 : vector<4x32xi1>, vector<4x32xf32>
    %210 = vector.shape_cast %186 : vector<4x1xi1> to vector<4x1xi1>
    %211 = vector.broadcast %210 : vector<4x1xi1> to vector<4x32xi1>
    %212 = arith.select %211, %204, %183 : vector<4x32xi1>, vector<4x32xf32>
    %c24 = arith.constant 24 : index
    %c0_48 = arith.constant 0 : index
    %213 = vector.load %arg14[%c24, %c0_48] : memref<32x32xf32, #tpu.memory_space<vmem>>, vector<4x32xf32>
    tpu.vector_store %arg14[%c24, %c0_48], %209 {strides = array<i32>} : memref<32x32xf32, #tpu.memory_space<vmem>>, vector<4x32xf32>,
    %c7_i32 = arith.constant 7 : i32
    %214 = vector.broadcast %c7_i32 : i32 to vector<4x1xi32>
    %215 = arith.cmpi sgt, %0, %214 : vector<4x1xi32>
    %216 = vector.extract_strided_slice %8 {offsets = [28, 0], sizes = [4, 128], strides = [1, 1]} : vector<32x128xf32> to vector<4x128xf32>
    %cst_49 = arith.constant dense<0.000000e+00> : vector<4x128xf32>
    %217 = tpu.matmul %209, %1, %cst_49 {dimension_numbers = #tpu.dot_dimension_numbers<[1], [0], [0], [1], [0, 0, 1, 1], [], []>} : vector<4x32xf32>, vector<32x128xf32>, vector<4x128xf32> -> vector<4x128xf32>
    %218 = arith.addf %216, %217 : vector<4x128xf32>
    %cst_50 = arith.constant 5.000000e-01 : f32
    %219 = vector.broadcast %cst_50 : f32 to vector<4x128xf32>
    %220 = arith.mulf %219, %218 : vector<4x128xf32>
    %221 = math.tanh %220 : vector<4x128xf32>
    %cst_51 = arith.constant 5.000000e-01 : f32
    %222 = vector.broadcast %cst_51 : f32 to vector<4x128xf32>
    %223 = arith.mulf %222, %221 : vector<4x128xf32>
    %cst_52 = arith.constant 5.000000e-01 : f32
    %224 = vector.broadcast %cst_52 : f32 to vector<4x128xf32>
    %225 = arith.addf %223, %224 : vector<4x128xf32>
    %226 = math.tanh %218 : vector<4x128xf32>
    %227 = vector.extract_strided_slice %225 {offsets = [0, 0], sizes = [4, 32], strides = [1, 1]} : vector<4x128xf32> to vector<4x32xf32>
    %228 = vector.extract_strided_slice %225 {offsets = [0, 32], sizes = [4, 32], strides = [1, 1]} : vector<4x128xf32> to vector<4x32xf32>
    %229 = vector.extract_strided_slice %226 {offsets = [0, 64], sizes = [4, 32], strides = [1, 1]} : vector<4x128xf32> to vector<4x32xf32>
    %230 = vector.extract_strided_slice %225 {offsets = [0, 96], sizes = [4, 32], strides = [1, 1]} : vector<4x128xf32> to vector<4x32xf32>
    %231 = arith.mulf %228, %212 : vector<4x32xf32>
    %232 = arith.mulf %227, %229 : vector<4x32xf32>
    %233 = arith.addf %231, %232 : vector<4x32xf32>
    %234 = math.tanh %233 : vector<4x32xf32>
    %235 = arith.mulf %230, %234 : vector<4x32xf32>
    %236 = vector.shape_cast %215 : vector<4x1xi1> to vector<4x1xi1>
    %237 = vector.broadcast %236 : vector<4x1xi1> to vector<4x32xi1>
    %238 = arith.select %237, %235, %209 : vector<4x32xi1>, vector<4x32xf32>
    %c28 = arith.constant 28 : index
    %c0_53 = arith.constant 0 : index
    %239 = vector.load %arg14[%c28, %c0_53] : memref<32x32xf32, #tpu.memory_space<vmem>>, vector<4x32xf32>
    tpu.vector_store %arg14[%c28, %c0_53], %238 {strides = array<i32>} : memref<32x32xf32, #tpu.memory_space<vmem>>, vector<4x32xf32>,
    %c0_54 = arith.constant 0 : index
    %c0_55 = arith.constant 0 : index
    %240 = vector.load %arg14[%c0_54, %c0_55] : memref<32x32xf32, #tpu.memory_space<vmem>>, vector<32x32xf32>
    %241 = arith.truncf %240 : vector<32x32xf32> to vector<32x32xbf16>
    %c0_56 = arith.constant 0 : index
    %c0_57 = arith.constant 0 : index
    %242 = vector.load %arg5[%c0_56, %c0_57] : memref<32x128xbf16, #tpu.memory_space<vmem>>, vector<32x128xbf16>
    %cst_58 = arith.constant dense<0.000000e+00> : vector<32x128xf32>
    %243 = tpu.matmul %241, %242, %cst_58 {dimension_numbers = #tpu.dot_dimension_numbers<[1], [0], [0], [1], [0, 0, 1, 1], [], []>} : vector<32x32xbf16>, vector<32x128xbf16>, vector<32x128xf32> -> vector<32x128xf32>
    %c0_59 = arith.constant 0 : index
    %c0_60 = arith.constant 0 : index
    %244 = vector.load %arg7[%c0_59, %c0_60] : memref<1x128xf32, #tpu.memory_space<vmem>>, vector<1x128xf32>
    %245 = vector.broadcast %244 : vector<1x128xf32> to vector<32x128xf32>
    %246 = arith.addf %243, %245 : vector<32x128xf32>
    %cst_61 = arith.constant 0.000000e+00 : f32
    %247 = vector.broadcast %cst_61 : f32 to vector<4x32xf32>
    %cst_62 = arith.constant 0.000000e+00 : f32
    %248 = vector.broadcast %cst_62 : f32 to vector<4x32xf32>
    %c0_i32_63 = arith.constant 0 : i32
    %249 = vector.broadcast %c0_i32_63 : i32 to vector<4x1xi32>
    %250 = arith.cmpi sgt, %0, %249 : vector<4x1xi32>
    %251 = vector.extract_strided_slice %246 {offsets = [0, 0], sizes = [4, 128], strides = [1, 1]} : vector<32x128xf32> to vector<4x128xf32>
    %cst_64 = arith.constant dense<0.000000e+00> : vector<4x128xf32>
    %252 = tpu.matmul %247, %2, %cst_64 {dimension_numbers = #tpu.dot_dimension_numbers<[1], [0], [0], [1], [0, 0, 1, 1], [], []>} : vector<4x32xf32>, vector<32x128xf32>, vector<4x128xf32> -> vector<4x128xf32>
    %253 = arith.addf %251, %252 : vector<4x128xf32>
    %cst_65 = arith.constant 5.000000e-01 : f32
    %254 = vector.broadcast %cst_65 : f32 to vector<4x128xf32>
    %255 = arith.mulf %254, %253 : vector<4x128xf32>
    %256 = math.tanh %255 : vector<4x128xf32>
    %cst_66 = arith.constant 5.000000e-01 : f32
    %257 = vector.broadcast %cst_66 : f32 to vector<4x128xf32>
    %258 = arith.mulf %257, %256 : vector<4x128xf32>
    %cst_67 = arith.constant 5.000000e-01 : f32
    %259 = vector.broadcast %cst_67 : f32 to vector<4x128xf32>
    %260 = arith.addf %258, %259 : vector<4x128xf32>
    %261 = math.tanh %253 : vector<4x128xf32>
    %262 = vector.extract_strided_slice %260 {offsets = [0, 0], sizes = [4, 32], strides = [1, 1]} : vector<4x128xf32> to vector<4x32xf32>
    %263 = vector.extract_strided_slice %260 {offsets = [0, 32], sizes = [4, 32], strides = [1, 1]} : vector<4x128xf32> to vector<4x32xf32>
    %264 = vector.extract_strided_slice %261 {offsets = [0, 64], sizes = [4, 32], strides = [1, 1]} : vector<4x128xf32> to vector<4x32xf32>
    %265 = vector.extract_strided_slice %260 {offsets = [0, 96], sizes = [4, 32], strides = [1, 1]} : vector<4x128xf32> to vector<4x32xf32>
    %266 = arith.mulf %263, %248 : vector<4x32xf32>
    %267 = arith.mulf %262, %264 : vector<4x32xf32>
    %268 = arith.addf %266, %267 : vector<4x32xf32>
    %269 = math.tanh %268 : vector<4x32xf32>
    %270 = arith.mulf %265, %269 : vector<4x32xf32>
    %271 = vector.shape_cast %250 : vector<4x1xi1> to vector<4x1xi1>
    %272 = vector.broadcast %271 : vector<4x1xi1> to vector<4x32xi1>
    %273 = arith.select %272, %270, %247 : vector<4x32xi1>, vector<4x32xf32>
    %274 = vector.shape_cast %250 : vector<4x1xi1> to vector<4x1xi1>
    %275 = vector.broadcast %274 : vector<4x1xi1> to vector<4x32xi1>
    %276 = arith.select %275, %268, %248 : vector<4x32xi1>, vector<4x32xf32>
    %c1_i32_68 = arith.constant 1 : i32
    %277 = vector.broadcast %c1_i32_68 : i32 to vector<4x1xi32>
    %278 = arith.cmpi sgt, %0, %277 : vector<4x1xi32>
    %279 = vector.extract_strided_slice %246 {offsets = [4, 0], sizes = [4, 128], strides = [1, 1]} : vector<32x128xf32> to vector<4x128xf32>
    %cst_69 = arith.constant dense<0.000000e+00> : vector<4x128xf32>
    %280 = tpu.matmul %273, %2, %cst_69 {dimension_numbers = #tpu.dot_dimension_numbers<[1], [0], [0], [1], [0, 0, 1, 1], [], []>} : vector<4x32xf32>, vector<32x128xf32>, vector<4x128xf32> -> vector<4x128xf32>
    %281 = arith.addf %279, %280 : vector<4x128xf32>
    %cst_70 = arith.constant 5.000000e-01 : f32
    %282 = vector.broadcast %cst_70 : f32 to vector<4x128xf32>
    %283 = arith.mulf %282, %281 : vector<4x128xf32>
    %284 = math.tanh %283 : vector<4x128xf32>
    %cst_71 = arith.constant 5.000000e-01 : f32
    %285 = vector.broadcast %cst_71 : f32 to vector<4x128xf32>
    %286 = arith.mulf %285, %284 : vector<4x128xf32>
    %cst_72 = arith.constant 5.000000e-01 : f32
    %287 = vector.broadcast %cst_72 : f32 to vector<4x128xf32>
    %288 = arith.addf %286, %287 : vector<4x128xf32>
    %289 = math.tanh %281 : vector<4x128xf32>
    %290 = vector.extract_strided_slice %288 {offsets = [0, 0], sizes = [4, 32], strides = [1, 1]} : vector<4x128xf32> to vector<4x32xf32>
    %291 = vector.extract_strided_slice %288 {offsets = [0, 32], sizes = [4, 32], strides = [1, 1]} : vector<4x128xf32> to vector<4x32xf32>
    %292 = vector.extract_strided_slice %289 {offsets = [0, 64], sizes = [4, 32], strides = [1, 1]} : vector<4x128xf32> to vector<4x32xf32>
    %293 = vector.extract_strided_slice %288 {offsets = [0, 96], sizes = [4, 32], strides = [1, 1]} : vector<4x128xf32> to vector<4x32xf32>
    %294 = arith.mulf %291, %276 : vector<4x32xf32>
    %295 = arith.mulf %290, %292 : vector<4x32xf32>
    %296 = arith.addf %294, %295 : vector<4x32xf32>
    %297 = math.tanh %296 : vector<4x32xf32>
    %298 = arith.mulf %293, %297 : vector<4x32xf32>
    %299 = vector.shape_cast %278 : vector<4x1xi1> to vector<4x1xi1>
    %300 = vector.broadcast %299 : vector<4x1xi1> to vector<4x32xi1>
    %301 = arith.select %300, %298, %273 : vector<4x32xi1>, vector<4x32xf32>
    %302 = vector.shape_cast %278 : vector<4x1xi1> to vector<4x1xi1>
    %303 = vector.broadcast %302 : vector<4x1xi1> to vector<4x32xi1>
    %304 = arith.select %303, %296, %276 : vector<4x32xi1>, vector<4x32xf32>
    %c2_i32_73 = arith.constant 2 : i32
    %305 = vector.broadcast %c2_i32_73 : i32 to vector<4x1xi32>
    %306 = arith.cmpi sgt, %0, %305 : vector<4x1xi32>
    %307 = vector.extract_strided_slice %246 {offsets = [8, 0], sizes = [4, 128], strides = [1, 1]} : vector<32x128xf32> to vector<4x128xf32>
    %cst_74 = arith.constant dense<0.000000e+00> : vector<4x128xf32>
    %308 = tpu.matmul %301, %2, %cst_74 {dimension_numbers = #tpu.dot_dimension_numbers<[1], [0], [0], [1], [0, 0, 1, 1], [], []>} : vector<4x32xf32>, vector<32x128xf32>, vector<4x128xf32> -> vector<4x128xf32>
    %309 = arith.addf %307, %308 : vector<4x128xf32>
    %cst_75 = arith.constant 5.000000e-01 : f32
    %310 = vector.broadcast %cst_75 : f32 to vector<4x128xf32>
    %311 = arith.mulf %310, %309 : vector<4x128xf32>
    %312 = math.tanh %311 : vector<4x128xf32>
    %cst_76 = arith.constant 5.000000e-01 : f32
    %313 = vector.broadcast %cst_76 : f32 to vector<4x128xf32>
    %314 = arith.mulf %313, %312 : vector<4x128xf32>
    %cst_77 = arith.constant 5.000000e-01 : f32
    %315 = vector.broadcast %cst_77 : f32 to vector<4x128xf32>
    %316 = arith.addf %314, %315 : vector<4x128xf32>
    %317 = math.tanh %309 : vector<4x128xf32>
    %318 = vector.extract_strided_slice %316 {offsets = [0, 0], sizes = [4, 32], strides = [1, 1]} : vector<4x128xf32> to vector<4x32xf32>
    %319 = vector.extract_strided_slice %316 {offsets = [0, 32], sizes = [4, 32], strides = [1, 1]} : vector<4x128xf32> to vector<4x32xf32>
    %320 = vector.extract_strided_slice %317 {offsets = [0, 64], sizes = [4, 32], strides = [1, 1]} : vector<4x128xf32> to vector<4x32xf32>
    %321 = vector.extract_strided_slice %316 {offsets = [0, 96], sizes = [4, 32], strides = [1, 1]} : vector<4x128xf32> to vector<4x32xf32>
    %322 = arith.mulf %319, %304 : vector<4x32xf32>
    %323 = arith.mulf %318, %320 : vector<4x32xf32>
    %324 = arith.addf %322, %323 : vector<4x32xf32>
    %325 = math.tanh %324 : vector<4x32xf32>
    %326 = arith.mulf %321, %325 : vector<4x32xf32>
    %327 = vector.shape_cast %306 : vector<4x1xi1> to vector<4x1xi1>
    %328 = vector.broadcast %327 : vector<4x1xi1> to vector<4x32xi1>
    %329 = arith.select %328, %326, %301 : vector<4x32xi1>, vector<4x32xf32>
    %330 = vector.shape_cast %306 : vector<4x1xi1> to vector<4x1xi1>
    %331 = vector.broadcast %330 : vector<4x1xi1> to vector<4x32xi1>
    %332 = arith.select %331, %324, %304 : vector<4x32xi1>, vector<4x32xf32>
    %c3_i32_78 = arith.constant 3 : i32
    %333 = vector.broadcast %c3_i32_78 : i32 to vector<4x1xi32>
    %334 = arith.cmpi sgt, %0, %333 : vector<4x1xi32>
    %335 = vector.extract_strided_slice %246 {offsets = [12, 0], sizes = [4, 128], strides = [1, 1]} : vector<32x128xf32> to vector<4x128xf32>
    %cst_79 = arith.constant dense<0.000000e+00> : vector<4x128xf32>
    %336 = tpu.matmul %329, %2, %cst_79 {dimension_numbers = #tpu.dot_dimension_numbers<[1], [0], [0], [1], [0, 0, 1, 1], [], []>} : vector<4x32xf32>, vector<32x128xf32>, vector<4x128xf32> -> vector<4x128xf32>
    %337 = arith.addf %335, %336 : vector<4x128xf32>
    %cst_80 = arith.constant 5.000000e-01 : f32
    %338 = vector.broadcast %cst_80 : f32 to vector<4x128xf32>
    %339 = arith.mulf %338, %337 : vector<4x128xf32>
    %340 = math.tanh %339 : vector<4x128xf32>
    %cst_81 = arith.constant 5.000000e-01 : f32
    %341 = vector.broadcast %cst_81 : f32 to vector<4x128xf32>
    %342 = arith.mulf %341, %340 : vector<4x128xf32>
    %cst_82 = arith.constant 5.000000e-01 : f32
    %343 = vector.broadcast %cst_82 : f32 to vector<4x128xf32>
    %344 = arith.addf %342, %343 : vector<4x128xf32>
    %345 = math.tanh %337 : vector<4x128xf32>
    %346 = vector.extract_strided_slice %344 {offsets = [0, 0], sizes = [4, 32], strides = [1, 1]} : vector<4x128xf32> to vector<4x32xf32>
    %347 = vector.extract_strided_slice %344 {offsets = [0, 32], sizes = [4, 32], strides = [1, 1]} : vector<4x128xf32> to vector<4x32xf32>
    %348 = vector.extract_strided_slice %345 {offsets = [0, 64], sizes = [4, 32], strides = [1, 1]} : vector<4x128xf32> to vector<4x32xf32>
    %349 = vector.extract_strided_slice %344 {offsets = [0, 96], sizes = [4, 32], strides = [1, 1]} : vector<4x128xf32> to vector<4x32xf32>
    %350 = arith.mulf %347, %332 : vector<4x32xf32>
    %351 = arith.mulf %346, %348 : vector<4x32xf32>
    %352 = arith.addf %350, %351 : vector<4x32xf32>
    %353 = math.tanh %352 : vector<4x32xf32>
    %354 = arith.mulf %349, %353 : vector<4x32xf32>
    %355 = vector.shape_cast %334 : vector<4x1xi1> to vector<4x1xi1>
    %356 = vector.broadcast %355 : vector<4x1xi1> to vector<4x32xi1>
    %357 = arith.select %356, %354, %329 : vector<4x32xi1>, vector<4x32xf32>
    %358 = vector.shape_cast %334 : vector<4x1xi1> to vector<4x1xi1>
    %359 = vector.broadcast %358 : vector<4x1xi1> to vector<4x32xi1>
    %360 = arith.select %359, %352, %332 : vector<4x32xi1>, vector<4x32xf32>
    %c4_i32_83 = arith.constant 4 : i32
    %361 = vector.broadcast %c4_i32_83 : i32 to vector<4x1xi32>
    %362 = arith.cmpi sgt, %0, %361 : vector<4x1xi32>
    %363 = vector.extract_strided_slice %246 {offsets = [16, 0], sizes = [4, 128], strides = [1, 1]} : vector<32x128xf32> to vector<4x128xf32>
    %cst_84 = arith.constant dense<0.000000e+00> : vector<4x128xf32>
    %364 = tpu.matmul %357, %2, %cst_84 {dimension_numbers = #tpu.dot_dimension_numbers<[1], [0], [0], [1], [0, 0, 1, 1], [], []>} : vector<4x32xf32>, vector<32x128xf32>, vector<4x128xf32> -> vector<4x128xf32>
    %365 = arith.addf %363, %364 : vector<4x128xf32>
    %cst_85 = arith.constant 5.000000e-01 : f32
    %366 = vector.broadcast %cst_85 : f32 to vector<4x128xf32>
    %367 = arith.mulf %366, %365 : vector<4x128xf32>
    %368 = math.tanh %367 : vector<4x128xf32>
    %cst_86 = arith.constant 5.000000e-01 : f32
    %369 = vector.broadcast %cst_86 : f32 to vector<4x128xf32>
    %370 = arith.mulf %369, %368 : vector<4x128xf32>
    %cst_87 = arith.constant 5.000000e-01 : f32
    %371 = vector.broadcast %cst_87 : f32 to vector<4x128xf32>
    %372 = arith.addf %370, %371 : vector<4x128xf32>
    %373 = math.tanh %365 : vector<4x128xf32>
    %374 = vector.extract_strided_slice %372 {offsets = [0, 0], sizes = [4, 32], strides = [1, 1]} : vector<4x128xf32> to vector<4x32xf32>
    %375 = vector.extract_strided_slice %372 {offsets = [0, 32], sizes = [4, 32], strides = [1, 1]} : vector<4x128xf32> to vector<4x32xf32>
    %376 = vector.extract_strided_slice %373 {offsets = [0, 64], sizes = [4, 32], strides = [1, 1]} : vector<4x128xf32> to vector<4x32xf32>
    %377 = vector.extract_strided_slice %372 {offsets = [0, 96], sizes = [4, 32], strides = [1, 1]} : vector<4x128xf32> to vector<4x32xf32>
    %378 = arith.mulf %375, %360 : vector<4x32xf32>
    %379 = arith.mulf %374, %376 : vector<4x32xf32>
    %380 = arith.addf %378, %379 : vector<4x32xf32>
    %381 = math.tanh %380 : vector<4x32xf32>
    %382 = arith.mulf %377, %381 : vector<4x32xf32>
    %383 = vector.shape_cast %362 : vector<4x1xi1> to vector<4x1xi1>
    %384 = vector.broadcast %383 : vector<4x1xi1> to vector<4x32xi1>
    %385 = arith.select %384, %382, %357 : vector<4x32xi1>, vector<4x32xf32>
    %386 = vector.shape_cast %362 : vector<4x1xi1> to vector<4x1xi1>
    %387 = vector.broadcast %386 : vector<4x1xi1> to vector<4x32xi1>
    %388 = arith.select %387, %380, %360 : vector<4x32xi1>, vector<4x32xf32>
    %c5_i32_88 = arith.constant 5 : i32
    %389 = vector.broadcast %c5_i32_88 : i32 to vector<4x1xi32>
    %390 = arith.cmpi sgt, %0, %389 : vector<4x1xi32>
    %391 = vector.extract_strided_slice %246 {offsets = [20, 0], sizes = [4, 128], strides = [1, 1]} : vector<32x128xf32> to vector<4x128xf32>
    %cst_89 = arith.constant dense<0.000000e+00> : vector<4x128xf32>
    %392 = tpu.matmul %385, %2, %cst_89 {dimension_numbers = #tpu.dot_dimension_numbers<[1], [0], [0], [1], [0, 0, 1, 1], [], []>} : vector<4x32xf32>, vector<32x128xf32>, vector<4x128xf32> -> vector<4x128xf32>
    %393 = arith.addf %391, %392 : vector<4x128xf32>
    %cst_90 = arith.constant 5.000000e-01 : f32
    %394 = vector.broadcast %cst_90 : f32 to vector<4x128xf32>
    %395 = arith.mulf %394, %393 : vector<4x128xf32>
    %396 = math.tanh %395 : vector<4x128xf32>
    %cst_91 = arith.constant 5.000000e-01 : f32
    %397 = vector.broadcast %cst_91 : f32 to vector<4x128xf32>
    %398 = arith.mulf %397, %396 : vector<4x128xf32>
    %cst_92 = arith.constant 5.000000e-01 : f32
    %399 = vector.broadcast %cst_92 : f32 to vector<4x128xf32>
    %400 = arith.addf %398, %399 : vector<4x128xf32>
    %401 = math.tanh %393 : vector<4x128xf32>
    %402 = vector.extract_strided_slice %400 {offsets = [0, 0], sizes = [4, 32], strides = [1, 1]} : vector<4x128xf32> to vector<4x32xf32>
    %403 = vector.extract_strided_slice %400 {offsets = [0, 32], sizes = [4, 32], strides = [1, 1]} : vector<4x128xf32> to vector<4x32xf32>
    %404 = vector.extract_strided_slice %401 {offsets = [0, 64], sizes = [4, 32], strides = [1, 1]} : vector<4x128xf32> to vector<4x32xf32>
    %405 = vector.extract_strided_slice %400 {offsets = [0, 96], sizes = [4, 32], strides = [1, 1]} : vector<4x128xf32> to vector<4x32xf32>
    %406 = arith.mulf %403, %388 : vector<4x32xf32>
    %407 = arith.mulf %402, %404 : vector<4x32xf32>
    %408 = arith.addf %406, %407 : vector<4x32xf32>
    %409 = math.tanh %408 : vector<4x32xf32>
    %410 = arith.mulf %405, %409 : vector<4x32xf32>
    %411 = vector.shape_cast %390 : vector<4x1xi1> to vector<4x1xi1>
    %412 = vector.broadcast %411 : vector<4x1xi1> to vector<4x32xi1>
    %413 = arith.select %412, %410, %385 : vector<4x32xi1>, vector<4x32xf32>
    %414 = vector.shape_cast %390 : vector<4x1xi1> to vector<4x1xi1>
    %415 = vector.broadcast %414 : vector<4x1xi1> to vector<4x32xi1>
    %416 = arith.select %415, %408, %388 : vector<4x32xi1>, vector<4x32xf32>
    %c6_i32_93 = arith.constant 6 : i32
    %417 = vector.broadcast %c6_i32_93 : i32 to vector<4x1xi32>
    %418 = arith.cmpi sgt, %0, %417 : vector<4x1xi32>
    %419 = vector.extract_strided_slice %246 {offsets = [24, 0], sizes = [4, 128], strides = [1, 1]} : vector<32x128xf32> to vector<4x128xf32>
    %cst_94 = arith.constant dense<0.000000e+00> : vector<4x128xf32>
    %420 = tpu.matmul %413, %2, %cst_94 {dimension_numbers = #tpu.dot_dimension_numbers<[1], [0], [0], [1], [0, 0, 1, 1], [], []>} : vector<4x32xf32>, vector<32x128xf32>, vector<4x128xf32> -> vector<4x128xf32>
    %421 = arith.addf %419, %420 : vector<4x128xf32>
    %cst_95 = arith.constant 5.000000e-01 : f32
    %422 = vector.broadcast %cst_95 : f32 to vector<4x128xf32>
    %423 = arith.mulf %422, %421 : vector<4x128xf32>
    %424 = math.tanh %423 : vector<4x128xf32>
    %cst_96 = arith.constant 5.000000e-01 : f32
    %425 = vector.broadcast %cst_96 : f32 to vector<4x128xf32>
    %426 = arith.mulf %425, %424 : vector<4x128xf32>
    %cst_97 = arith.constant 5.000000e-01 : f32
    %427 = vector.broadcast %cst_97 : f32 to vector<4x128xf32>
    %428 = arith.addf %426, %427 : vector<4x128xf32>
    %429 = math.tanh %421 : vector<4x128xf32>
    %430 = vector.extract_strided_slice %428 {offsets = [0, 0], sizes = [4, 32], strides = [1, 1]} : vector<4x128xf32> to vector<4x32xf32>
    %431 = vector.extract_strided_slice %428 {offsets = [0, 32], sizes = [4, 32], strides = [1, 1]} : vector<4x128xf32> to vector<4x32xf32>
    %432 = vector.extract_strided_slice %429 {offsets = [0, 64], sizes = [4, 32], strides = [1, 1]} : vector<4x128xf32> to vector<4x32xf32>
    %433 = vector.extract_strided_slice %428 {offsets = [0, 96], sizes = [4, 32], strides = [1, 1]} : vector<4x128xf32> to vector<4x32xf32>
    %434 = arith.mulf %431, %416 : vector<4x32xf32>
    %435 = arith.mulf %430, %432 : vector<4x32xf32>
    %436 = arith.addf %434, %435 : vector<4x32xf32>
    %437 = math.tanh %436 : vector<4x32xf32>
    %438 = arith.mulf %433, %437 : vector<4x32xf32>
    %439 = vector.shape_cast %418 : vector<4x1xi1> to vector<4x1xi1>
    %440 = vector.broadcast %439 : vector<4x1xi1> to vector<4x32xi1>
    %441 = arith.select %440, %438, %413 : vector<4x32xi1>, vector<4x32xf32>
    %442 = vector.shape_cast %418 : vector<4x1xi1> to vector<4x1xi1>
    %443 = vector.broadcast %442 : vector<4x1xi1> to vector<4x32xi1>
    %444 = arith.select %443, %436, %416 : vector<4x32xi1>, vector<4x32xf32>
    %c7_i32_98 = arith.constant 7 : i32
    %445 = vector.broadcast %c7_i32_98 : i32 to vector<4x1xi32>
    %446 = arith.cmpi sgt, %0, %445 : vector<4x1xi32>
    %447 = vector.extract_strided_slice %246 {offsets = [28, 0], sizes = [4, 128], strides = [1, 1]} : vector<32x128xf32> to vector<4x128xf32>
    %cst_99 = arith.constant dense<0.000000e+00> : vector<4x128xf32>
    %448 = tpu.matmul %441, %2, %cst_99 {dimension_numbers = #tpu.dot_dimension_numbers<[1], [0], [0], [1], [0, 0, 1, 1], [], []>} : vector<4x32xf32>, vector<32x128xf32>, vector<4x128xf32> -> vector<4x128xf32>
    %449 = arith.addf %447, %448 : vector<4x128xf32>
    %cst_100 = arith.constant 5.000000e-01 : f32
    %450 = vector.broadcast %cst_100 : f32 to vector<4x128xf32>
    %451 = arith.mulf %450, %449 : vector<4x128xf32>
    %452 = math.tanh %451 : vector<4x128xf32>
    %cst_101 = arith.constant 5.000000e-01 : f32
    %453 = vector.broadcast %cst_101 : f32 to vector<4x128xf32>
    %454 = arith.mulf %453, %452 : vector<4x128xf32>
    %cst_102 = arith.constant 5.000000e-01 : f32
    %455 = vector.broadcast %cst_102 : f32 to vector<4x128xf32>
    %456 = arith.addf %454, %455 : vector<4x128xf32>
    %457 = math.tanh %449 : vector<4x128xf32>
    %458 = vector.extract_strided_slice %456 {offsets = [0, 0], sizes = [4, 32], strides = [1, 1]} : vector<4x128xf32> to vector<4x32xf32>
    %459 = vector.extract_strided_slice %456 {offsets = [0, 32], sizes = [4, 32], strides = [1, 1]} : vector<4x128xf32> to vector<4x32xf32>
    %460 = vector.extract_strided_slice %457 {offsets = [0, 64], sizes = [4, 32], strides = [1, 1]} : vector<4x128xf32> to vector<4x32xf32>
    %461 = vector.extract_strided_slice %456 {offsets = [0, 96], sizes = [4, 32], strides = [1, 1]} : vector<4x128xf32> to vector<4x32xf32>
    %462 = arith.mulf %459, %444 : vector<4x32xf32>
    %463 = arith.mulf %458, %460 : vector<4x32xf32>
    %464 = arith.addf %462, %463 : vector<4x32xf32>
    %465 = math.tanh %464 : vector<4x32xf32>
    %466 = arith.mulf %461, %465 : vector<4x32xf32>
    %467 = vector.shape_cast %446 : vector<4x1xi1> to vector<4x1xi1>
    %468 = vector.broadcast %467 : vector<4x1xi1> to vector<4x32xi1>
    %469 = arith.select %468, %466, %441 : vector<4x32xi1>, vector<4x32xf32>
    %470 = arith.truncf %469 : vector<4x32xf32> to vector<4x32xbf16>
    %c0_103 = arith.constant 0 : index
    %c0_104 = arith.constant 0 : index
    %471 = vector.load %arg8[%c0_103, %c0_104] : memref<32x512xbf16, #tpu.memory_space<vmem>>, vector<32x512xbf16>
    %cst_105 = arith.constant dense<0.000000e+00> : vector<4x512xf32>
    %472 = tpu.matmul %470, %471, %cst_105 {dimension_numbers = #tpu.dot_dimension_numbers<[1], [0], [0], [1], [0, 0, 1, 1], [], []>} : vector<4x32xbf16>, vector<32x512xbf16>, vector<4x512xf32> -> vector<4x512xf32>
    %c0_106 = arith.constant 0 : index
    %c0_107 = arith.constant 0 : index
    %473 = vector.load %arg9[%c0_106, %c0_107] : memref<1x512xf32, #tpu.memory_space<vmem>>, vector<1x512xf32>
    %474 = vector.broadcast %473 : vector<1x512xf32> to vector<4x512xf32>
    %475 = arith.addf %472, %474 : vector<4x512xf32>
    %cst_108 = arith.constant 0.000000e+00 : f32
    %476 = vector.broadcast %cst_108 : f32 to vector<4x512xf32>
    %477 = arith.cmpf oge, %475, %476 : vector<4x512xf32>
    %cst_109 = arith.constant 5.000000e-02 : f32
    %478 = vector.broadcast %cst_109 : f32 to vector<4x512xf32>
    %479 = arith.mulf %478, %475 : vector<4x512xf32>
    %480 = arith.select %477, %475, %479 : vector<4x512xi1>, vector<4x512xf32>
    %481 = arith.truncf %480 : vector<4x512xf32> to vector<4x512xbf16>
    %c0_110 = arith.constant 0 : index
    %c0_111 = arith.constant 0 : index
    %482 = vector.load %arg10[%c0_110, %c0_111] : memref<512x128xbf16, #tpu.memory_space<vmem>>, vector<512x128xbf16>
    %cst_112 = arith.constant dense<0.000000e+00> : vector<4x128xf32>
    %483 = tpu.matmul %481, %482, %cst_112 {dimension_numbers = #tpu.dot_dimension_numbers<[1], [0], [0], [1], [0, 0, 1, 1], [], []>} : vector<4x512xbf16>, vector<512x128xbf16>, vector<4x128xf32> -> vector<4x128xf32>
    %c0_113 = arith.constant 0 : index
    %c0_114 = arith.constant 0 : index
    %484 = vector.load %arg11[%c0_113, %c0_114] : memref<1x128xf32, #tpu.memory_space<vmem>>, vector<1x128xf32>
    %485 = vector.broadcast %484 : vector<1x128xf32> to vector<4x128xf32>
    %486 = arith.addf %483, %485 : vector<4x128xf32>
    %cst_115 = arith.constant 0.000000e+00 : f32
    %487 = vector.broadcast %cst_115 : f32 to vector<4x128xf32>
    %c0_116 = arith.constant 0 : index
    %c0_117 = arith.constant 0 : index
    %488 = vector.load %arg12[%c0_116, %c0_117] : memref<4x128xf32, #tpu.memory_space<vmem>>, vector<4x128xf32>
    tpu.vector_store %arg12[%c0_116, %c0_117], %487 {strides = array<i32>} : memref<4x128xf32, #tpu.memory_space<vmem>>, vector<4x128xf32>,
    %c0_118 = arith.constant 0 : index
    %c0_119 = arith.constant 0 : index
    %489 = vector.load %arg12[%c0_118, %c0_119] : memref<4x128xf32, #tpu.memory_space<vmem>>, vector<4x32xf32>
    tpu.vector_store %arg12[%c0_118, %c0_119], %469 {strides = array<i32>} : memref<4x128xf32, #tpu.memory_space<vmem>>, vector<4x32xf32>,
    %c0_120 = arith.constant 0 : index
    %c0_121 = arith.constant 0 : index
    %490 = vector.load %arg13[%c0_120, %c0_121] : memref<4x128xf32, #tpu.memory_space<vmem>>, vector<4x128xf32>
    tpu.vector_store %arg13[%c0_120, %c0_121], %486 {strides = array<i32>} : memref<4x128xf32, #tpu.memory_space<vmem>>, vector<4x128xf32>,
    return
  }
}

</mosaic_0001>

<llo_original>
// kernel: lstm_model_forward.1
$region0: #{lstm_model_forward.1}
  #allocation0 [shape = 'u32[]', space=smem, size = 0x4, offset = 0x4, fixed_abs, tag = 'smem constant byte address 0x4 - core index']
  #allocation1 [shape = 'u32[144,128]{1,0:T(1,128)}', space=vmem, size = 0x12000, scoped, tag = 'internal scratch']
  #allocation2 [shape = 'f32[32,32]{1,0:T(8,128)}', space=vmem, size = 0x4000, scoped, tag = 'scratch operand']
  %s0 = inlined_call_operand.vmem [shape: bf16[32,16], index: 0, kind: input, shape index: {}]
  %s1 = inlined_call_operand.vmem [shape: s32[4,1], index: 1, kind: input, shape index: {}]
  %s2 = inlined_call_operand.vmem [shape: bf16[16,128], index: 2, kind: input, shape index: {}]
  %s3 = inlined_call_operand.hbm [shape: f32[32,128], index: 3, kind: input, shape index: {}]
  %s4 = inlined_call_operand.vmem [shape: f32[1,128], index: 4, kind: input, shape index: {}]
  %s5 = inlined_call_operand.hbm [shape: bf16[32,128], index: 5, kind: input, shape index: {}]
  %s6 = inlined_call_operand.hbm [shape: f32[32,128], index: 6, kind: input, shape index: {}]
  %s7 = inlined_call_operand.hbm [shape: f32[1,128], index: 7, kind: input, shape index: {}]
  %s8 = inlined_call_operand.vmem [shape: bf16[32,512], index: 8, kind: input, shape index: {}]
  %s9 = inlined_call_operand.hbm [shape: f32[1,512], index: 9, kind: input, shape index: {}]
  %s10 = inlined_call_operand.hbm [shape: bf16[512,128], index: 10, kind: input, shape index: {}]
  %s11 = inlined_call_operand.hbm [shape: f32[1,128], index: 11, kind: input, shape index: {}]
  %s12 = inlined_call_operand.hbm [shape: f32[4,128], index: 12, kind: output, shape index: {0}]
  %s13 = inlined_call_operand.hbm [shape: f32[4,128], index: 13, kind: output, shape index: {1}]
  %14 = xla_tuple %s12, %s13
  %s15 = sld [smem:[#allocation0]]
  $region94: #{lstm_model_forward.1} parent=0
    _
  %s17 = ssub.s32 1, %s15
  %s18 = scalar_select 0, %s17, %s15
  $region1: #{lstm_model_forward.1} parent=0
    #allocation3 [shape = 'u8[16384]{0}', space=vmem, size = 0x4000, scoped, tag = 'input window, operand 3, single buffered']
    #allocation4 [shape = 's32[1]{0}', space=sflag, size = 0x4, scoped, tag = 'scoped memory for lstm_model_forward.1']
    #allocation5 [shape = 's32[1]{0}', space=sflag, size = 0x4, scoped, tag = 'scoped memory for lstm_model_forward.1']
    #allocation6 [shape = 'u8[8192]{0}', space=vmem, size = 0x2000, scoped, tag = 'input window, operand 5, single buffered']
    #allocation7 [shape = 's32[1]{0}', space=sflag, size = 0x4, scoped, tag = 'scoped memory for lstm_model_forward.1']
    #allocation8 [shape = 'u8[16384]{0}', space=vmem, size = 0x4000, scoped, tag = 'input window, operand 6, single buffered']
    #allocation9 [shape = 'u8[512]{0}', space=vmem, size = 0x400, scoped, tag = 'input window, operand 7, single buffered']
    #allocation10 [shape = 's32[1]{0}', space=sflag, size = 0x4, scoped, tag = 'scoped memory for lstm_model_forward.1']
    #allocation11 [shape = 'u8[2048]{0}', space=vmem, size = 0x800, scoped, tag = 'input window, operand 9, single buffered']
    #allocation12 [shape = 'u8[131072]{0}', space=vmem, size = 0x20000, scoped, tag = 'input window, operand 10, single buffered']
    #allocation13 [shape = 's32[1]{0}', space=sflag, size = 0x4, scoped, tag = 'scoped memory for lstm_model_forward.1']
    #allocation14 [shape = 'u8[512]{0}', space=vmem, size = 0x400, scoped, tag = 'input window, operand 11, single buffered']
    #allocation15 [shape = 'u8[2048]{0}', space=vmem, size = 0x800, scoped, tag = 'output window, operand 0, single buffered']
    #allocation16 [shape = 'u8[2048]{0}', space=vmem, size = 0x800, scoped, tag = 'output window, operand 1, single buffered']
    #allocation17 [shape = 's32[1]{0}', space=sflag, size = 0x4, scoped, tag = 'scoped memory for lstm_model_forward.1']
    %19 = vsyncpa [#allocation4], 0
    %20 = vsyncpa [#allocation7], 0
    %21 = vsyncpa [#allocation10], 0
    %22 = vsyncpa [#allocation13], 0
    %23 = vsyncpa [#allocation5], 0
    %24 = vsyncpa [#allocation17], 0
    // Predicated region
    $region2: #{lstm_model_forward.1} parent=1 // pred_check
      _
    $region3: #{lstm_model_forward.1} parent=1 // pred_check_branch
      %26 = sbr.rel (0) target = $region5
    $region4: #{lstm_model_forward.1} parent=1 // pred_region
      _
    $region5: #{lstm_model_forward.1} parent=1 // pred_fallthru
      _
    // Predicated region
    $region6: #{lstm_model_forward.1} parent=1 // pred_check
      _
    $region7: #{lstm_model_forward.1} parent=1 // pred_check_branch
      %28 = sbr.rel (0) target = $region9
    $region8: #{lstm_model_forward.1} parent=1 // pred_region
      _
    $region9: #{lstm_model_forward.1} parent=1 // pred_fallthru
      _
    // Predicated region
    $region10: #{lstm_model_forward.1} parent=1 // pred_check
      _
    $region11: #{lstm_model_forward.1} parent=1 // pred_check_branch
      %30 = sbr.rel (0) target = $region13
    $region12: #{lstm_model_forward.1} parent=1 // pred_region
      _
    $region13: #{lstm_model_forward.1} parent=1 // pred_fallthru
      _
    // Predicated region
    $region14: #{lstm_model_forward.1} parent=1 // pred_check
      _
    $region15: #{lstm_model_forward.1} parent=1 // pred_check_branch
      %32 = sbr.rel (0) target = $region17
    $region16: #{lstm_model_forward.1} parent=1 // pred_region
      %s34 = ssub.s32 512, 512
      %35 = vsyncadd [#allocation4], %s34
      %s36 = sshll.u32 [#allocation3], 4
      %s37 = int_to_ptr.vmem [resolvable:$true] %s36
      %42 = dma.hbm_to_vmem [thread:$0]  %s3, 512, %s37, [#allocation4], 128, 128, 8
    $region17: #{lstm_model_forward.1} parent=1 // pred_fallthru
      _
    // Predicated region
    $region18: #{lstm_model_forward.1} parent=1 // pred_check
      _
    $region19: #{lstm_model_forward.1} parent=1 // pred_check_branch
      %44 = sbr.rel (0) target = $region21
    $region20: #{lstm_model_forward.1} parent=1 // pred_region
      _
    $region21: #{lstm_model_forward.1} parent=1 // pred_fallthru
      _
    // Predicated region
    $region22: #{lstm_model_forward.1} parent=1 // pred_check
      _
    $region23: #{lstm_model_forward.1} parent=1 // pred_check_branch
      %46 = sbr.rel (0) target = $region25
    $region24: #{lstm_model_forward.1} parent=1 // pred_region
      %s48 = ssub.s32 256, 256
      %49 = vsyncadd [#allocation7], %s48
      %s50 = sshll.u32 [#allocation6], 4
      %s51 = int_to_ptr.vmem [resolvable:$true] %s50
      %56 = dma.hbm_to_vmem [thread:$0]  %s5, 256, %s51, [#allocation7], 64, 64, 4
    $region25: #{lstm_model_forward.1} parent=1 // pred_fallthru
      _
    // Predicated region
    $region26: #{lstm_model_forward.1} parent=1 // pred_check
      _
    $region27: #{lstm_model_forward.1} parent=1 // pred_check_branch
      %58 = sbr.rel (0) target = $region29
    $region28: #{lstm_model_forward.1} parent=1 // pred_region
      %s60 = ssub.s32 512, 512
      %61 = vsyncadd [#allocation7], %s60
      %s62 = sshll.u32 [#allocation8], 4
      %s63 = int_to_ptr.vmem [resolvable:$true] %s62
      %68 = dma.hbm_to_vmem [thread:$0]  %s6, 512, %s63, [#allocation7], 128, 128, 8
    $region29: #{lstm_model_forward.1} parent=1 // pred_fallthru
      _
    // Predicated region
    $region30: #{lstm_model_forward.1} parent=1 // pred_check
      _
    $region31: #{lstm_model_forward.1} parent=1 // pred_check_branch
      %70 = sbr.rel (0) target = $region33
    $region32: #{lstm_model_forward.1} parent=1 // pred_region
      %s72 = ssub.s32 16, 16
      %73 = vsyncadd [#allocation10], %s72
      %s75 = sshll.u32 [#allocation9], 4
      %s76 = int_to_ptr.vmem [resolvable:$true] %s75
      %78 = dma.hbm_to_vmem [thread:$0]  %s7, 16, %s76, [#allocation10]
    $region33: #{lstm_model_forward.1} parent=1 // pred_fallthru
      _
    // Predicated region
    $region34: #{lstm_model_forward.1} parent=1 // pred_check
      _
    $region35: #{lstm_model_forward.1} parent=1 // pred_check_branch
      %80 = sbr.rel (0) target = $region37
    $region36: #{lstm_model_forward.1} parent=1 // pred_region
      _
    $region37: #{lstm_model_forward.1} parent=1 // pred_fallthru
      _
    // Predicated region
    $region38: #{lstm_model_forward.1} parent=1 // pred_check
      _
    $region39: #{lstm_model_forward.1} parent=1 // pred_check_branch
      %82 = sbr.rel (0) target = $region41
    $region40: #{lstm_model_forward.1} parent=1 // pred_region
      %s84 = ssub.s32 64, 64
      %85 = vsyncadd [#allocation10], %s84
      %s87 = sshll.u32 [#allocation11], 4
      %s88 = int_to_ptr.vmem [resolvable:$true] %s87
      %90 = dma.hbm_to_vmem [thread:$0]  %s9, 64, %s88, [#allocation10]
    $region41: #{lstm_model_forward.1} parent=1 // pred_fallthru
      _
    // Predicated region
    $region42: #{lstm_model_forward.1} parent=1 // pred_check
      _
    $region43: #{lstm_model_forward.1} parent=1 // pred_check_branch
      %92 = sbr.rel (0) target = $region45
    $region44: #{lstm_model_forward.1} parent=1 // pred_region
      %s94 = ssub.s32 4096, 4096
      %95 = vsyncadd [#allocation13], %s94
      %s96 = sshll.u32 [#allocation12], 4
      %s97 = int_to_ptr.vmem [resolvable:$true] %s96
      %102 = dma.hbm_to_vmem [thread:$0]  %s10, 4096, %s97, [#allocation13], 64, 64, 4
    $region45: #{lstm_model_forward.1} parent=1 // pred_fallthru
      _
    // Predicated region
    $region46: #{lstm_model_forward.1} parent=1 // pred_check
      _
    $region47: #{lstm_model_forward.1} parent=1 // pred_check_branch
      %104 = sbr.rel (0) target = $region49
    $region48: #{lstm_model_forward.1} parent=1 // pred_region
      %s106 = ssub.s32 16, 16
      %107 = vsyncadd [#allocation13], %s106
      %s109 = sshll.u32 [#allocation14], 4
      %s110 = int_to_ptr.vmem [resolvable:$true] %s109
      %112 = dma.hbm_to_vmem [thread:$0]  %s11, 16, %s110, [#allocation13]
    $region49: #{lstm_model_forward.1} parent=1 // pred_fallthru
      _
    // Predicated region
    $region50: #{lstm_model_forward.1} parent=1 // pred_check
      _
    $region51: #{lstm_model_forward.1} parent=1 // pred_check_branch
      %114 = sbr.rel (0) target = $region53
    $region52: #{lstm_model_forward.1} parent=1 // pred_region
      %115 = dma.done [#allocation4], 512
    $region53: #{lstm_model_forward.1} parent=1 // pred_fallthru
      _
    // Predicated region
    $region54: #{lstm_model_forward.1} parent=1 // pred_check
      _
    $region55: #{lstm_model_forward.1} parent=1 // pred_check_branch
      %117 = sbr.rel (0) target = $region57
    $region56: #{lstm_model_forward.1} parent=1 // pred_region
      %118 = dma.done [#allocation7], 256
    $region57: #{lstm_model_forward.1} parent=1 // pred_fallthru
      _
    // Predicated region
    $region58: #{lstm_model_forward.1} parent=1 // pred_check
      _
    $region59: #{lstm_model_forward.1} parent=1 // pred_check_branch
      %120 = sbr.rel (0) target = $region61
    $region60: #{lstm_model_forward.1} parent=1 // pred_region
      %121 = dma.done [#allocation7], 512
    $region61: #{lstm_model_forward.1} parent=1 // pred_fallthru
      _
    // Predicated region
    $region62: #{lstm_model_forward.1} parent=1 // pred_check
      _
    $region63: #{lstm_model_forward.1} parent=1 // pred_check_branch
      %123 = sbr.rel (0) target = $region65
    $region64: #{lstm_model_forward.1} parent=1 // pred_region
      %124 = dma.done [#allocation10], 16
    $region65: #{lstm_model_forward.1} parent=1 // pred_fallthru
      _
    // Predicated region
    $region66: #{lstm_model_forward.1} parent=1 // pred_check
      _
    $region67: #{lstm_model_forward.1} parent=1 // pred_check_branch
      %126 = sbr.rel (0) target = $region69
    $region68: #{lstm_model_forward.1} parent=1 // pred_region
      %127 = dma.done [#allocation10], 64
    $region69: #{lstm_model_forward.1} parent=1 // pred_fallthru
      _
    // Predicated region
    $region70: #{lstm_model_forward.1} parent=1 // pred_check
      _
    $region71: #{lstm_model_forward.1} parent=1 // pred_check_branch
      %129 = sbr.rel (0) target = $region73
    $region72: #{lstm_model_forward.1} parent=1 // pred_region
      %130 = dma.done [#allocation13], 4096
    $region73: #{lstm_model_forward.1} parent=1 // pred_fallthru
      _
    // Predicated region
    $region74: #{lstm_model_forward.1} parent=1 // pred_check
      _
    $region75: #{lstm_model_forward.1} parent=1 // pred_check_branch
      %132 = sbr.rel (0) target = $region77
    $region76: #{lstm_model_forward.1} parent=1 // pred_region
      %133 = dma.done [#allocation13], 16
    $region77: #{lstm_model_forward.1} parent=1 // pred_fallthru
      _
    %v135 = vld [vmem:[%s1] sm:$0xf]
    %v136 = vld [vmem:[#allocation3] sm:$0xff]
    %v137 = vld [vmem:[#allocation3 + $0x8] sm:$0xff]
    %v138 = vld [vmem:[#allocation3 + $0x10] sm:$0xff]
    %v139 = vld [vmem:[#allocation3 + $0x18] sm:$0xff]
    %v140 = vld [vmem:[#allocation8] sm:$0xff]
    %v141 = vld [vmem:[#allocation8 + $0x8] sm:$0xff]
    %v142 = vld [vmem:[#allocation8 + $0x10] sm:$0xff]
    %v143 = vld [vmem:[#allocation8 + $0x18] sm:$0xff]
    %v144 = vld [vmem:[%s0] sm:$0xf]
    %v145 = vld [vmem:[%s0 + $0x4] sm:$0xf]
    %v146 = vld [vmem:[%s0 + $0x8] sm:$0xf]
    %v147 = vld [vmem:[%s0 + $0xc] sm:$0xf]
    %v148 = vld [vmem:[%s2] sm:$0xf]
    %v149 = vld [vmem:[%s2 + $0x4] sm:$0xf]
    %v150 = vld [vmem:[%s4] sm:$0x1]
    %v152 = vlaneseq
    %v153 = vshrl.u32 %v152, 7
    %v154 = vsub.s32 0, %v153
    %v155 = vrot.slane %v150, %v154
    %v161 = vunpack.c.l.b16 %v144
    %v162 = vunpack.c.l.b16 %v145
    %v163 = vunpack.c.l.b16 %v146
    %v164 = vunpack.c.l.b16 %v147
    %v165 = vpack.c.b16 %v162, %v161
    %v166 = vpack.c.b16 %v164, %v163
    %v169 = vunpack.c.l.b16 %v148
    %v170 = vunpack.c.l.b16 %v149
    %v171 = vpack.c.b16 %v170, %v169
    %vm173 = vcmask 130048
    %v175 = vsel %vm173, %v165, 0
    %v178 = vsel %vm173, %v166, 0
    %180 = vmatprep.subr.bf16.mxu0 0
    %181 = vmatpush1.bf16.msra.mxu0 0
    %182 = vmatprep.subr.bf16.mxu0 0
    %183 = vmatpush1.bf16.msra.mxu0 0
    %184 = vmatprep.subr.bf16.mxu0 0
    %185 = vmatpush1.bf16.msra.mxu0 0
    %186 = vmatprep.subr.bf16.mxu0 0
    %187 = vmatpush1.bf16.msra.mxu0 0
    %188 = vmatprep.subr.bf16.mxu0 0
    %189 = vmatpush1.bf16.msra.mxu0 0
    %190 = vmatprep.subr.bf16.mxu0 0
    %191 = vmatpush1.bf16.msra.mxu0 0
    %192 = vmatprep.subr.bf16.mxu0 0
    %193 = vmatpush1.bf16.msra.mxu0 0
    %194 = vmatprep.subr.bf16.mxu0 0
    %195 = vmatpush1.bf16.msra.mxu0 %v171
    %196 = vmatprep.subr.bf16.mxu0 0
    %197 = vmatpush2.bf16.msra.mxu0 0
    %198 = vmatprep.subr.bf16.mxu0 0
    %199 = vmatpush2.bf16.msra.mxu0 0
    %200 = vmatprep.subr.bf16.mxu0 0
    %201 = vmatpush2.bf16.msra.mxu0 0
    %202 = vmatprep.subr.bf16.mxu0 0
    %203 = vmatpush2.bf16.msra.mxu0 0
    %204 = vmatprep.subr.bf16.mxu0 0
    %205 = vmatpush2.bf16.msra.mxu0 0
    %206 = vmatprep.subr.bf16.mxu0 0
    %207 = vmatpush2.bf16.msra.mxu0 0
    %208 = vmatprep.subr.bf16.mxu0 0
    %209 = vmatpush2.bf16.msra.mxu0 0
    %210 = vmatprep.subr.bf16.mxu0 0
    %211 = vmatpush2.bf16.msra.mxu0 0
    %212 = vmatprep.mubr.bf16.mxu0 0
    %213 = vmatmul.mubr.bf16.gmra.mxu0 %v175
    %v214 = vpop.f32.mrf.mxu0
    %v215 = vadd.f32 %v155, %v214
    %v216 = vpop.f32.mrf.mxu0
    %v217 = vpop.f32.mrf.mxu0
    %v218 = vadd.f32 %v155, %v217
    %v219 = vpop.f32.mrf.mxu0
    %220 = vmatprep.mubr.bf16.mxu0 0
    %221 = vmatmul.mubr.bf16.gmra.mxu0 %v178
    %v222 = vpop.f32.mrf.mxu0
    %v223 = vadd.f32 %v155, %v222
    %v224 = vpop.f32.mrf.mxu0
    %v225 = vpop.f32.mrf.mxu0
    %v226 = vadd.f32 %v155, %v225
    %v227 = vpop.f32.mrf.mxu0
    %228 = vdwg.mxu0
    %vm229 = vcmp.gt.s32.totalorder %v135, 0
    %vm230 = vcmask 261120
    %v232 = vsel %vm230, 0.0, 0
    %234 = vmatprep.subr.mxu0 0.0
    %235 = vmatpush1.msra.mxu0 0.0
    %236 = vmatprep.subr.mxu0 0.0
    %237 = vmatpush1.msra.mxu0 0.0
    %238 = vmatprep.subr.mxu0 0.0
    %239 = vmatpush1.msra.mxu0 0.0
    %240 = vmatprep.subr.mxu0 0.0
    %241 = vmatpush1.msra.mxu0 0.0
    %242 = vmatprep.subr.mxu0 0.0
    %243 = vmatpush1.msra.mxu0 0.0
    %244 = vmatprep.subr.mxu0 0.0
    %245 = vmatpush1.msra.mxu0 0.0
    %246 = vmatprep.subr.mxu0 0.0
    %247 = vmatpush1.msra.mxu0 0.0
    %248 = vmatprep.subr.mxu0 0.0
    %249 = vmatpush1.msra.mxu0 0.0
    %250 = vmatprep.subr.mxu0 0.0
    %251 = vmatpush1.msra.mxu0 0.0
    %252 = vmatprep.subr.mxu0 0.0
    %253 = vmatpush1.msra.mxu0 0.0
    %254 = vmatprep.subr.mxu0 0.0
    %255 = vmatpush1.msra.mxu0 0.0
    %256 = vmatprep.subr.mxu0 0.0
    %257 = vmatpush1.msra.mxu0 0.0
    %258 = vmatprep.subr.mxu0 0.0
    %259 = vmatpush1.msra.mxu0 %v139
    %260 = vmatprep.subr.mxu0 0.0
    %261 = vmatpush1.msra.mxu0 %v138
    %262 = vmatprep.subr.mxu0 0.0
    %263 = vmatpush1.msra.mxu0 %v137
    %264 = vmatprep.subr.mxu0 0.0
    %265 = vmatpush1.msra.mxu0 %v136
    %266 = vmatprep.subr.mxu0 0.0
    %267 = vmatpush2.msra.mxu0 0.0
    %268 = vmatprep.subr.mxu0 0.0
    %269 = vmatpush2.msra.mxu0 0.0
    %270 = vmatprep.subr.mxu0 0.0
    %271 = vmatpush2.msra.mxu0 0.0
    %272 = vmatprep.subr.mxu0 0.0
    %273 = vmatpush2.msra.mxu0 0.0
    %274 = vmatprep.subr.mxu0 0.0
    %275 = vmatpush2.msra.mxu0 0.0
    %276 = vmatprep.subr.mxu0 0.0
    %277 = vmatpush2.msra.mxu0 0.0
    %278 = vmatprep.subr.mxu0 0.0
    %279 = vmatpush2.msra.mxu0 0.0
    %280 = vmatprep.subr.mxu0 0.0
    %281 = vmatpush2.msra.mxu0 0.0
    %282 = vmatprep.subr.mxu0 0.0
    %283 = vmatpush2.msra.mxu0 0.0
    %284 = vmatprep.subr.mxu0 0.0
    %285 = vmatpush2.msra.mxu0 0.0
    %286 = vmatprep.subr.mxu0 0.0
    %287 = vmatpush2.msra.mxu0 0.0
    %288 = vmatprep.subr.mxu0 0.0
    %289 = vmatpush2.msra.mxu0 0.0
    %290 = vmatprep.subr.mxu0 0.0
    %291 = vmatpush2.msra.mxu0 0.0
    %292 = vmatprep.subr.mxu0 0.0
    %293 = vmatpush2.msra.mxu0 0.0
    %294 = vmatprep.subr.mxu0 0.0
    %295 = vmatpush2.msra.mxu0 0.0
    %296 = vmatprep.subr.mxu0 0.0
    %297 = vmatpush2.msra.mxu0 0.0
    %298 = vmatprep.mubr.f32.mxu0 0.0
    %299 = vmatmul.mubr.f32.gmra.mxu0 %v232
    %v300 = vpop.f32.mrf.mxu0
    %v301 = vadd.f32 0.0, %v300
    %v302 = vpop.f32.mrf.mxu0
    %303 = vdwg.mxu0
    %v304 = vadd.f32 %v215, %v301
    %v305 = vmul.f32 %v304, 0.5
    %v306 = vtanh.pop %v305
    %v307 = vmul.f32 %v306, 0.5
    %v308 = vadd.f32 %v307, 0.5
    %v309 = vtanh.pop %v304
    %v310 = vmul.f32 %v308, 0.0
    %312 = vrot.lane.b32.xlu0 %v309, 64
    %v313 = vpop.permute.xlu0 %312
    %v315 = vmul.f32 %v308, %v313
    %317 = vrot.lane.b32.xlu0 %v315, 32
    %v318 = vpop.permute.xlu0 %317
    %v320 = vadd.f32 %v310, %v318
    %v321 = vtanh.pop %v320
    %323 = vrot.lane.b32.xlu0 %v321, 64
    %v324 = vpop.permute.xlu0 %323
    %v326 = vmul.f32 %v308, %v324
    %v327 = vsel %vm229, 1, 0
    %328 = vset.pattern.permute.xlu0 0
    %329 = vperm.xlu0 %328, %v327
    %v330 = vpop.permute.xlu0 %329
    %vm331 = vcmp.eq.s32.totalorder %v330, 1
    %v332 = vsel %vm331, %v326, 0.0
    %v333 = vsel %vm331, %v320, 0.0
    %335 = vrot.lane.b32.xlu0 %v332, 32
    %v336 = vpop.permute.xlu0 %335
    %vm338 = vcmask 257024
    %339 = vst.msk [vmem:[#allocation2] sm:$0xf] %vm338, %v336
    %vm340 = vcmp.gt.s32.totalorder %v135, 1
    %v341 = vsel %vm230, %v336, 0
    %343 = vmatprep.subr.mxu0 0.0
    %344 = vmatpush1.msra.mxu0 0.0
    %345 = vmatprep.subr.mxu0 0.0
    %346 = vmatpush1.msra.mxu0 0.0
    %347 = vmatprep.subr.mxu0 0.0
    %348 = vmatpush1.msra.mxu0 0.0
    %349 = vmatprep.subr.mxu0 0.0
    %350 = vmatpush1.msra.mxu0 0.0
    %351 = vmatprep.subr.mxu0 0.0
    %352 = vmatpush1.msra.mxu0 0.0
    %353 = vmatprep.subr.mxu0 0.0
    %354 = vmatpush1.msra.mxu0 0.0
    %355 = vmatprep.subr.mxu0 0.0
    %356 = vmatpush1.msra.mxu0 0.0
    %357 = vmatprep.subr.mxu0 0.0
    %358 = vmatpush1.msra.mxu0 0.0
    %359 = vmatprep.subr.mxu0 0.0
    %360 = vmatpush1.msra.mxu0 0.0
    %361 = vmatprep.subr.mxu0 0.0
    %362 = vmatpush1.msra.mxu0 0.0
    %363 = vmatprep.subr.mxu0 0.0
    %364 = vmatpush1.msra.mxu0 0.0
    %365 = vmatprep.subr.mxu0 0.0
    %366 = vmatpush1.msra.mxu0 0.0
    %367 = vmatprep.subr.mxu0 0.0
    %368 = vmatpush1.msra.mxu0 %v139
    %369 = vmatprep.subr.mxu0 0.0
    %370 = vmatpush1.msra.mxu0 %v138
    %371 = vmatprep.subr.mxu0 0.0
    %372 = vmatpush1.msra.mxu0 %v137
    %373 = vmatprep.subr.mxu0 0.0
    %374 = vmatpush1.msra.mxu0 %v136
    %375 = vmatprep.subr.mxu0 0.0
    %376 = vmatpush2.msra.mxu0 0.0
    %377 = vmatprep.subr.mxu0 0.0
    %378 = vmatpush2.msra.mxu0 0.0
    %379 = vmatprep.subr.mxu0 0.0
    %380 = vmatpush2.msra.mxu0 0.0
    %381 = vmatprep.subr.mxu0 0.0
    %382 = vmatpush2.msra.mxu0 0.0
    %383 = vmatprep.subr.mxu0 0.0
    %384 = vmatpush2.msra.mxu0 0.0
    %385 = vmatprep.subr.mxu0 0.0
    %386 = vmatpush2.msra.mxu0 0.0
    %387 = vmatprep.subr.mxu0 0.0
    %388 = vmatpush2.msra.mxu0 0.0
    %389 = vmatprep.subr.mxu0 0.0
    %390 = vmatpush2.msra.mxu0 0.0
    %391 = vmatprep.subr.mxu0 0.0
    %392 = vmatpush2.msra.mxu0 0.0
    %393 = vmatprep.subr.mxu0 0.0
    %394 = vmatpush2.msra.mxu0 0.0
    %395 = vmatprep.subr.mxu0 0.0
    %396 = vmatpush2.msra.mxu0 0.0
    %397 = vmatprep.subr.mxu0 0.0
    %398 = vmatpush2.msra.mxu0 0.0
    %399 = vmatprep.subr.mxu0 0.0
    %400 = vmatpush2.msra.mxu0 0.0
    %401 = vmatprep.subr.mxu0 0.0
    %402 = vmatpush2.msra.mxu0 0.0
    %403 = vmatprep.subr.mxu0 0.0
    %404 = vmatpush2.msra.mxu0 0.0
    %405 = vmatprep.subr.mxu0 0.0
    %406 = vmatpush2.msra.mxu0 0.0
    %407 = vmatprep.mubr.f32.mxu0 0.0
    %408 = vmatmul.mubr.f32.gmra.mxu0 %v341
    %v409 = vpop.f32.mrf.mxu0
    %v410 = vadd.f32 0.0, %v409
    %v411 = vpop.f32.mrf.mxu0
    %412 = vdwg.mxu0
    %v414 = vrot.slane %v410, 4
    %v416 = vadd.f32 %v215, %v414
    %v417 = vmul.f32 %v416, 0.5
    %v418 = vtanh.pop %v417
    %v419 = vmul.f32 %v418, 0.5
    %v420 = vadd.f32 %v419, 0.5
    %v421 = vtanh.pop %v416
    %v423 = vrot.slane %v333, 4
    %v425 = vmul.f32 %v420, %v423
    %427 = vrot.lane.b32.xlu0 %v421, 64
    %v428 = vpop.permute.xlu0 %427
    %v430 = vmul.f32 %v420, %v428
    %432 = vrot.lane.b32.xlu0 %v430, 32
    %v433 = vpop.permute.xlu0 %432
    %v435 = vadd.f32 %v425, %v433
    %v436 = vtanh.pop %v435
    %438 = vrot.lane.b32.xlu0 %v436, 64
    %v439 = vpop.permute.xlu0 %438
    %v441 = vmul.f32 %v420, %v439
    %v442 = vsel %vm340, 1, 0
    %443 = vset.pattern.permute.xlu0 0
    %444 = vperm.xlu0 %443, %v442
    %v445 = vpop.permute.xlu0 %444
    %vm446 = vcmp.eq.s32.totalorder %v445, 1
    %v448 = vrot.slane %v441, 4
    %449 = vrot.lane.b32.xlu0 %v448, 32
    %v450 = vpop.permute.xlu0 %449
    %v452 = vsel %vm446, %v450, %v336
    %v454 = vrot.slane %v435, 4
    %455 = vrot.lane.b32.xlu0 %v454, 96
    %v456 = vpop.permute.xlu0 %455
    %458 = vrot.lane.b32.xlu0 %v333, 96
    %v459 = vpop.permute.xlu0 %458
    %v461 = vsel %vm446, %v456, %v459
    %462 = vst.msk [vmem:[#allocation2 + $0x4] sm:$0xf] %vm338, %v452
    %vm463 = vcmp.gt.s32.totalorder %v135, 2
    %v465 = vsel %vm230, %v452, 0
    %467 = vmatprep.subr.mxu0 0.0
    %468 = vmatpush1.msra.mxu0 0.0
    %469 = vmatprep.subr.mxu0 0.0
    %470 = vmatpush1.msra.mxu0 0.0
    %471 = vmatprep.subr.mxu0 0.0
    %472 = vmatpush1.msra.mxu0 0.0
    %473 = vmatprep.subr.mxu0 0.0
    %474 = vmatpush1.msra.mxu0 0.0
    %475 = vmatprep.subr.mxu0 0.0
    %476 = vmatpush1.msra.mxu0 0.0
    %477 = vmatprep.subr.mxu0 0.0
    %478 = vmatpush1.msra.mxu0 0.0
    %479 = vmatprep.subr.mxu0 0.0
    %480 = vmatpush1.msra.mxu0 0.0
    %481 = vmatprep.subr.mxu0 0.0
    %482 = vmatpush1.msra.mxu0 0.0
    %483 = vmatprep.subr.mxu0 0.0
    %484 = vmatpush1.msra.mxu0 0.0
    %485 = vmatprep.subr.mxu0 0.0
    %486 = vmatpush1.msra.mxu0 0.0
    %487 = vmatprep.subr.mxu0 0.0
    %488 = vmatpush1.msra.mxu0 0.0
    %489 = vmatprep.subr.mxu0 0.0
    %490 = vmatpush1.msra.mxu0 0.0
    %491 = vmatprep.subr.mxu0 0.0
    %492 = vmatpush1.msra.mxu0 %v139
    %493 = vmatprep.subr.mxu0 0.0
    %494 = vmatpush1.msra.mxu0 %v138
    %495 = vmatprep.subr.mxu0 0.0
    %496 = vmatpush1.msra.mxu0 %v137
    %497 = vmatprep.subr.mxu0 0.0
    %498 = vmatpush1.msra.mxu0 %v136
    %499 = vmatprep.subr.mxu0 0.0
    %500 = vmatpush2.msra.mxu0 0.0
    %501 = vmatprep.subr.mxu0 0.0
    %502 = vmatpush2.msra.mxu0 0.0
    %503 = vmatprep.subr.mxu0 0.0
    %504 = vmatpush2.msra.mxu0 0.0
    %505 = vmatprep.subr.mxu0 0.0
    %506 = vmatpush2.msra.mxu0 0.0
    %507 = vmatprep.subr.mxu0 0.0
    %508 = vmatpush2.msra.mxu0 0.0
    %509 = vmatprep.subr.mxu0 0.0
    %510 = vmatpush2.msra.mxu0 0.0
    %511 = vmatprep.subr.mxu0 0.0
    %512 = vmatpush2.msra.mxu0 0.0
    %513 = vmatprep.subr.mxu0 0.0
    %514 = vmatpush2.msra.mxu0 0.0
    %515 = vmatprep.subr.mxu0 0.0
    %516 = vmatpush2.msra.mxu0 0.0
    %517 = vmatprep.subr.mxu0 0.0
    %518 = vmatpush2.msra.mxu0 0.0
    %519 = vmatprep.subr.mxu0 0.0
    %520 = vmatpush2.msra.mxu0 0.0
    %521 = vmatprep.subr.mxu0 0.0
    %522 = vmatpush2.msra.mxu0 0.0
    %523 = vmatprep.subr.mxu0 0.0
    %524 = vmatpush2.msra.mxu0 0.0
    %525 = vmatprep.subr.mxu0 0.0
    %526 = vmatpush2.msra.mxu0 0.0
    %527 = vmatprep.subr.mxu0 0.0
    %528 = vmatpush2.msra.mxu0 0.0
    %529 = vmatprep.subr.mxu0 0.0
    %530 = vmatpush2.msra.mxu0 0.0
    %531 = vmatprep.mubr.f32.mxu0 0.0
    %532 = vmatmul.mubr.f32.gmra.mxu0 %v465
    %v533 = vpop.f32.mrf.mxu0
    %v534 = vadd.f32 0.0, %v533
    %v535 = vpop.f32.mrf.mxu0
    %536 = vdwg.mxu0
    %v537 = vadd.f32 %v218, %v534
    %v538 = vmul.f32 %v537, 0.5
    %v539 = vtanh.pop %v538
    %v540 = vmul.f32 %v539, 0.5
    %v541 = vadd.f32 %v540, 0.5
    %v542 = vtanh.pop %v537
    %544 = vrot.lane.b32.xlu0 %v461, 32
    %v545 = vpop.permute.xlu0 %544
    %v547 = vmul.f32 %v541, %v545
    %549 = vrot.lane.b32.xlu0 %v542, 64
    %v550 = vpop.permute.xlu0 %549
    %v552 = vmul.f32 %v541, %v550
    %554 = vrot.lane.b32.xlu0 %v552, 32
    %v555 = vpop.permute.xlu0 %554
    %v557 = vadd.f32 %v547, %v555
    %v558 = vtanh.pop %v557
    %560 = vrot.lane.b32.xlu0 %v558, 64
    %v561 = vpop.permute.xlu0 %560
    %v563 = vmul.f32 %v541, %v561
    %v564 = vsel %vm463, 1, 0
    %565 = vset.pattern.permute.xlu0 0
    %566 = vperm.xlu0 %565, %v564
    %v567 = vpop.permute.xlu0 %566
    %vm568 = vcmp.eq.s32.totalorder %v567, 1
    %569 = vrot.lane.b32.xlu0 %v452, 96
    %v570 = vpop.permute.xlu0 %569
    %v572 = vsel %vm568, %v563, %v570
    %v573 = vsel %vm568, %v557, %v545
    %575 = vrot.lane.b32.xlu0 %v572, 32
    %v576 = vpop.permute.xlu0 %575
    %578 = vst.msk [vmem:[#allocation2 + $0x8] sm:$0xf] %vm338, %v576
    %vm579 = vcmp.gt.s32.totalorder %v135, 3
    %v580 = vsel %vm230, %v576, 0
    %582 = vmatprep.subr.mxu0 0.0
    %583 = vmatpush1.msra.mxu0 0.0
    %584 = vmatprep.subr.mxu0 0.0
    %585 = vmatpush1.msra.mxu0 0.0
    %586 = vmatprep.subr.mxu0 0.0
    %587 = vmatpush1.msra.mxu0 0.0
    %588 = vmatprep.subr.mxu0 0.0
    %589 = vmatpush1.msra.mxu0 0.0
    %590 = vmatprep.subr.mxu0 0.0
    %591 = vmatpush1.msra.mxu0 0.0
    %592 = vmatprep.subr.mxu0 0.0
    %593 = vmatpush1.msra.mxu0 0.0
    %594 = vmatprep.subr.mxu0 0.0
    %595 = vmatpush1.msra.mxu0 0.0
    %596 = vmatprep.subr.mxu0 0.0
    %597 = vmatpush1.msra.mxu0 0.0
    %598 = vmatprep.subr.mxu0 0.0
    %599 = vmatpush1.msra.mxu0 0.0
    %600 = vmatprep.subr.mxu0 0.0
    %601 = vmatpush1.msra.mxu0 0.0
    %602 = vmatprep.subr.mxu0 0.0
    %603 = vmatpush1.msra.mxu0 0.0
    %604 = vmatprep.subr.mxu0 0.0
    %605 = vmatpush1.msra.mxu0 0.0
    %606 = vmatprep.subr.mxu0 0.0
    %607 = vmatpush1.msra.mxu0 %v139
    %608 = vmatprep.subr.mxu0 0.0
    %609 = vmatpush1.msra.mxu0 %v138
    %610 = vmatprep.subr.mxu0 0.0
    %611 = vmatpush1.msra.mxu0 %v137
    %612 = vmatprep.subr.mxu0 0.0
    %613 = vmatpush1.msra.mxu0 %v136
    %614 = vmatprep.subr.mxu0 0.0
    %615 = vmatpush2.msra.mxu0 0.0
    %616 = vmatprep.subr.mxu0 0.0
    %617 = vmatpush2.msra.mxu0 0.0
    %618 = vmatprep.subr.mxu0 0.0
    %619 = vmatpush2.msra.mxu0 0.0
    %620 = vmatprep.subr.mxu0 0.0
    %621 = vmatpush2.msra.mxu0 0.0
    %622 = vmatprep.subr.mxu0 0.0
    %623 = vmatpush2.msra.mxu0 0.0
    %624 = vmatprep.subr.mxu0 0.0
    %625 = vmatpush2.msra.mxu0 0.0
    %626 = vmatprep.subr.mxu0 0.0
    %627 = vmatpush2.msra.mxu0 0.0
    %628 = vmatprep.subr.mxu0 0.0
    %629 = vmatpush2.msra.mxu0 0.0
    %630 = vmatprep.subr.mxu0 0.0
    %631 = vmatpush2.msra.mxu0 0.0
    %632 = vmatprep.subr.mxu0 0.0
    %633 = vmatpush2.msra.mxu0 0.0
    %634 = vmatprep.subr.mxu0 0.0
    %635 = vmatpush2.msra.mxu0 0.0
    %636 = vmatprep.subr.mxu0 0.0
    %637 = vmatpush2.msra.mxu0 0.0
    %638 = vmatprep.subr.mxu0 0.0
    %639 = vmatpush2.msra.mxu0 0.0
    %640 = vmatprep.subr.mxu0 0.0
    %641 = vmatpush2.msra.mxu0 0.0
    %642 = vmatprep.subr.mxu0 0.0
    %643 = vmatpush2.msra.mxu0 0.0
    %644 = vmatprep.subr.mxu0 0.0
    %645 = vmatpush2.msra.mxu0 0.0
    %646 = vmatprep.mubr.f32.mxu0 0.0
    %647 = vmatmul.mubr.f32.gmra.mxu0 %v580
    %v648 = vpop.f32.mrf.mxu0
    %v649 = vadd.f32 0.0, %v648
    %v650 = vpop.f32.mrf.mxu0
    %651 = vdwg.mxu0
    %v653 = vrot.slane %v649, 4
    %v655 = vadd.f32 %v218, %v653
    %v656 = vmul.f32 %v655, 0.5
    %v657 = vtanh.pop %v656
    %v658 = vmul.f32 %v657, 0.5
    %v659 = vadd.f32 %v658, 0.5
    %v660 = vtanh.pop %v655
    %v662 = vrot.slane %v573, 4
    %v664 = vmul.f32 %v659, %v662
    %666 = vrot.lane.b32.xlu0 %v660, 64
    %v667 = vpop.permute.xlu0 %666
    %v669 = vmul.f32 %v659, %v667
    %671 = vrot.lane.b32.xlu0 %v669, 32
    %v672 = vpop.permute.xlu0 %671
    %v674 = vadd.f32 %v664, %v672
    %v675 = vtanh.pop %v674
    %677 = vrot.lane.b32.xlu0 %v675, 64
    %v678 = vpop.permute.xlu0 %677
    %v680 = vmul.f32 %v659, %v678
    %v681 = vsel %vm579, 1, 0
    %682 = vset.pattern.permute.xlu0 0
    %683 = vperm.xlu0 %682, %v681
    %v684 = vpop.permute.xlu0 %683
    %vm685 = vcmp.eq.s32.totalorder %v684, 1
    %v687 = vrot.slane %v680, 4
    %688 = vrot.lane.b32.xlu0 %v687, 32
    %v689 = vpop.permute.xlu0 %688
    %v691 = vsel %vm685, %v689, %v576
    %v693 = vrot.slane %v674, 4
    %694 = vrot.lane.b32.xlu0 %v693, 96
    %v695 = vpop.permute.xlu0 %694
    %697 = vrot.lane.b32.xlu0 %v573, 96
    %v698 = vpop.permute.xlu0 %697
    %v700 = vsel %vm685, %v695, %v698
    %701 = vst.msk [vmem:[#allocation2 + $0xc] sm:$0xf] %vm338, %v691
    %vm702 = vcmp.gt.s32.totalorder %v135, 4
    %v704 = vsel %vm230, %v691, 0
    %706 = vmatprep.subr.mxu0 0.0
    %707 = vmatpush1.msra.mxu0 0.0
    %708 = vmatprep.subr.mxu0 0.0
    %709 = vmatpush1.msra.mxu0 0.0
    %710 = vmatprep.subr.mxu0 0.0
    %711 = vmatpush1.msra.mxu0 0.0
    %712 = vmatprep.subr.mxu0 0.0
    %713 = vmatpush1.msra.mxu0 0.0
    %714 = vmatprep.subr.mxu0 0.0
    %715 = vmatpush1.msra.mxu0 0.0
    %716 = vmatprep.subr.mxu0 0.0
    %717 = vmatpush1.msra.mxu0 0.0
    %718 = vmatprep.subr.mxu0 0.0
    %719 = vmatpush1.msra.mxu0 0.0
    %720 = vmatprep.subr.mxu0 0.0
    %721 = vmatpush1.msra.mxu0 0.0
    %722 = vmatprep.subr.mxu0 0.0
    %723 = vmatpush1.msra.mxu0 0.0
    %724 = vmatprep.subr.mxu0 0.0
    %725 = vmatpush1.msra.mxu0 0.0
    %726 = vmatprep.subr.mxu0 0.0
    %727 = vmatpush1.msra.mxu0 0.0
    %728 = vmatprep.subr.mxu0 0.0
    %729 = vmatpush1.msra.mxu0 0.0
    %730 = vmatprep.subr.mxu0 0.0
    %731 = vmatpush1.msra.mxu0 %v139
    %732 = vmatprep.subr.mxu0 0.0
    %733 = vmatpush1.msra.mxu0 %v138
    %734 = vmatprep.subr.mxu0 0.0
    %735 = vmatpush1.msra.mxu0 %v137
    %736 = vmatprep.subr.mxu0 0.0
    %737 = vmatpush1.msra.mxu0 %v136
    %738 = vmatprep.subr.mxu0 0.0
    %739 = vmatpush2.msra.mxu0 0.0
    %740 = vmatprep.subr.mxu0 0.0
    %741 = vmatpush2.msra.mxu0 0.0
    %742 = vmatprep.subr.mxu0 0.0
    %743 = vmatpush2.msra.mxu0 0.0
    %744 = vmatprep.subr.mxu0 0.0
    %745 = vmatpush2.msra.mxu0 0.0
    %746 = vmatprep.subr.mxu0 0.0
    %747 = vmatpush2.msra.mxu0 0.0
    %748 = vmatprep.subr.mxu0 0.0
    %749 = vmatpush2.msra.mxu0 0.0
    %750 = vmatprep.subr.mxu0 0.0
    %751 = vmatpush2.msra.mxu0 0.0
    %752 = vmatprep.subr.mxu0 0.0
    %753 = vmatpush2.msra.mxu0 0.0
    %754 = vmatprep.subr.mxu0 0.0
    %755 = vmatpush2.msra.mxu0 0.0
    %756 = vmatprep.subr.mxu0 0.0
    %757 = vmatpush2.msra.mxu0 0.0
    %758 = vmatprep.subr.mxu0 0.0
    %759 = vmatpush2.msra.mxu0 0.0
    %760 = vmatprep.subr.mxu0 0.0
    %761 = vmatpush2.msra.mxu0 0.0
    %762 = vmatprep.subr.mxu0 0.0
    %763 = vmatpush2.msra.mxu0 0.0
    %764 = vmatprep.subr.mxu0 0.0
    %765 = vmatpush2.msra.mxu0 0.0
    %766 = vmatprep.subr.mxu0 0.0
    %767 = vmatpush2.msra.mxu0 0.0
    %768 = vmatprep.subr.mxu0 0.0
    %769 = vmatpush2.msra.mxu0 0.0
    %770 = vmatprep.mubr.f32.mxu0 0.0
    %771 = vmatmul.mubr.f32.gmra.mxu0 %v704
    %v772 = vpop.f32.mrf.mxu0
    %v773 = vadd.f32 0.0, %v772
    %v774 = vpop.f32.mrf.mxu0
    %775 = vdwg.mxu0
    %v776 = vadd.f32 %v223, %v773
    %v777 = vmul.f32 %v776, 0.5
    %v778 = vtanh.pop %v777
    %v779 = vmul.f32 %v778, 0.5
    %v780 = vadd.f32 %v779, 0.5
    %v781 = vtanh.pop %v776
    %783 = vrot.lane.b32.xlu0 %v700, 32
    %v784 = vpop.permute.xlu0 %783
    %v786 = vmul.f32 %v780, %v784
    %788 = vrot.lane.b32.xlu0 %v781, 64
    %v789 = vpop.permute.xlu0 %788
    %v791 = vmul.f32 %v780, %v789
    %793 = vrot.lane.b32.xlu0 %v791, 32
    %v794 = vpop.permute.xlu0 %793
    %v796 = vadd.f32 %v786, %v794
    %v797 = vtanh.pop %v796
    %799 = vrot.lane.b32.xlu0 %v797, 64
    %v800 = vpop.permute.xlu0 %799
    %v802 = vmul.f32 %v780, %v800
    %v803 = vsel %vm702, 1, 0
    %804 = vset.pattern.permute.xlu0 0
    %805 = vperm.xlu0 %804, %v803
    %v806 = vpop.permute.xlu0 %805
    %vm807 = vcmp.eq.s32.totalorder %v806, 1
    %808 = vrot.lane.b32.xlu0 %v691, 96
    %v809 = vpop.permute.xlu0 %808
    %v811 = vsel %vm807, %v802, %v809
    %v812 = vsel %vm807, %v796, %v784
    %814 = vrot.lane.b32.xlu0 %v811, 32
    %v815 = vpop.permute.xlu0 %814
    %817 = vst.msk [vmem:[#allocation2 + $0x10] sm:$0xf] %vm338, %v815
    %vm818 = vcmp.gt.s32.totalorder %v135, 5
    %v819 = vsel %vm230, %v815, 0
    %821 = vmatprep.subr.mxu0 0.0
    %822 = vmatpush1.msra.mxu0 0.0
    %823 = vmatprep.subr.mxu0 0.0
    %824 = vmatpush1.msra.mxu0 0.0
    %825 = vmatprep.subr.mxu0 0.0
    %826 = vmatpush1.msra.mxu0 0.0
    %827 = vmatprep.subr.mxu0 0.0
    %828 = vmatpush1.msra.mxu0 0.0
    %829 = vmatprep.subr.mxu0 0.0
    %830 = vmatpush1.msra.mxu0 0.0
    %831 = vmatprep.subr.mxu0 0.0
    %832 = vmatpush1.msra.mxu0 0.0
    %833 = vmatprep.subr.mxu0 0.0
    %834 = vmatpush1.msra.mxu0 0.0
    %835 = vmatprep.subr.mxu0 0.0
    %836 = vmatpush1.msra.mxu0 0.0
    %837 = vmatprep.subr.mxu0 0.0
    %838 = vmatpush1.msra.mxu0 0.0
    %839 = vmatprep.subr.mxu0 0.0
    %840 = vmatpush1.msra.mxu0 0.0
    %841 = vmatprep.subr.mxu0 0.0
    %842 = vmatpush1.msra.mxu0 0.0
    %843 = vmatprep.subr.mxu0 0.0
    %844 = vmatpush1.msra.mxu0 0.0
    %845 = vmatprep.subr.mxu0 0.0
    %846 = vmatpush1.msra.mxu0 %v139
    %847 = vmatprep.subr.mxu0 0.0
    %848 = vmatpush1.msra.mxu0 %v138
    %849 = vmatprep.subr.mxu0 0.0
    %850 = vmatpush1.msra.mxu0 %v137
    %851 = vmatprep.subr.mxu0 0.0
    %852 = vmatpush1.msra.mxu0 %v136
    %853 = vmatprep.subr.mxu0 0.0
    %854 = vmatpush2.msra.mxu0 0.0
    %855 = vmatprep.subr.mxu0 0.0
    %856 = vmatpush2.msra.mxu0 0.0
    %857 = vmatprep.subr.mxu0 0.0
    %858 = vmatpush2.msra.mxu0 0.0
    %859 = vmatprep.subr.mxu0 0.0
    %860 = vmatpush2.msra.mxu0 0.0
    %861 = vmatprep.subr.mxu0 0.0
    %862 = vmatpush2.msra.mxu0 0.0
    %863 = vmatprep.subr.mxu0 0.0
    %864 = vmatpush2.msra.mxu0 0.0
    %865 = vmatprep.subr.mxu0 0.0
    %866 = vmatpush2.msra.mxu0 0.0
    %867 = vmatprep.subr.mxu0 0.0
    %868 = vmatpush2.msra.mxu0 0.0
    %869 = vmatprep.subr.mxu0 0.0
    %870 = vmatpush2.msra.mxu0 0.0
    %871 = vmatprep.subr.mxu0 0.0
    %872 = vmatpush2.msra.mxu0 0.0
    %873 = vmatprep.subr.mxu0 0.0
    %874 = vmatpush2.msra.mxu0 0.0
    %875 = vmatprep.subr.mxu0 0.0
    %876 = vmatpush2.msra.mxu0 0.0
    %877 = vmatprep.subr.mxu0 0.0
    %878 = vmatpush2.msra.mxu0 0.0
    %879 = vmatprep.subr.mxu0 0.0
    %880 = vmatpush2.msra.mxu0 0.0
    %881 = vmatprep.subr.mxu0 0.0
    %882 = vmatpush2.msra.mxu0 0.0
    %883 = vmatprep.subr.mxu0 0.0
    %884 = vmatpush2.msra.mxu0 0.0
    %885 = vmatprep.mubr.f32.mxu0 0.0
    %886 = vmatmul.mubr.f32.gmra.mxu0 %v819
    %v887 = vpop.f32.mrf.mxu0
    %v888 = vadd.f32 0.0, %v887
    %v889 = vpop.f32.mrf.mxu0
    %890 = vdwg.mxu0
    %v892 = vrot.slane %v888, 4
    %v894 = vadd.f32 %v223, %v892
    %v895 = vmul.f32 %v894, 0.5
    %v896 = vtanh.pop %v895
    %v897 = vmul.f32 %v896, 0.5
    %v898 = vadd.f32 %v897, 0.5
    %v899 = vtanh.pop %v894
    %v901 = vrot.slane %v812, 4
    %v903 = vmul.f32 %v898, %v901
    %905 = vrot.lane.b32.xlu0 %v899, 64
    %v906 = vpop.permute.xlu0 %905
    %v908 = vmul.f32 %v898, %v906
    %910 = vrot.lane.b32.xlu0 %v908, 32
    %v911 = vpop.permute.xlu0 %910
    %v913 = vadd.f32 %v903, %v911
    %v914 = vtanh.pop %v913
    %916 = vrot.lane.b32.xlu0 %v914, 64
    %v917 = vpop.permute.xlu0 %916
    %v919 = vmul.f32 %v898, %v917
    %v920 = vsel %vm818, 1, 0
    %921 = vset.pattern.permute.xlu0 0
    %922 = vperm.xlu0 %921, %v920
    %v923 = vpop.permute.xlu0 %922
    %vm924 = vcmp.eq.s32.totalorder %v923, 1
    %v926 = vrot.slane %v919, 4
    %927 = vrot.lane.b32.xlu0 %v926, 32
    %v928 = vpop.permute.xlu0 %927
    %v930 = vsel %vm924, %v928, %v815
    %v932 = vrot.slane %v913, 4
    %933 = vrot.lane.b32.xlu0 %v932, 96
    %v934 = vpop.permute.xlu0 %933
    %936 = vrot.lane.b32.xlu0 %v812, 96
    %v937 = vpop.permute.xlu0 %936
    %v939 = vsel %vm924, %v934, %v937
    %940 = vst.msk [vmem:[#allocation2 + $0x14] sm:$0xf] %vm338, %v930
    %vm941 = vcmp.gt.s32.totalorder %v135, 6
    %v943 = vsel %vm230, %v930, 0
    %945 = vmatprep.subr.mxu0 0.0
    %946 = vmatpush1.msra.mxu0 0.0
    %947 = vmatprep.subr.mxu0 0.0
    %948 = vmatpush1.msra.mxu0 0.0
    %949 = vmatprep.subr.mxu0 0.0
    %950 = vmatpush1.msra.mxu0 0.0
    %951 = vmatprep.subr.mxu0 0.0
    %952 = vmatpush1.msra.mxu0 0.0
    %953 = vmatprep.subr.mxu0 0.0
    %954 = vmatpush1.msra.mxu0 0.0
    %955 = vmatprep.subr.mxu0 0.0
    %956 = vmatpush1.msra.mxu0 0.0
    %957 = vmatprep.subr.mxu0 0.0
    %958 = vmatpush1.msra.mxu0 0.0
    %959 = vmatprep.subr.mxu0 0.0
    %960 = vmatpush1.msra.mxu0 0.0
    %961 = vmatprep.subr.mxu0 0.0
    %962 = vmatpush1.msra.mxu0 0.0
    %963 = vmatprep.subr.mxu0 0.0
    %964 = vmatpush1.msra.mxu0 0.0
    %965 = vmatprep.subr.mxu0 0.0
    %966 = vmatpush1.msra.mxu0 0.0
    %967 = vmatprep.subr.mxu0 0.0
    %968 = vmatpush1.msra.mxu0 0.0
    %969 = vmatprep.subr.mxu0 0.0
    %970 = vmatpush1.msra.mxu0 %v139
    %971 = vmatprep.subr.mxu0 0.0
    %972 = vmatpush1.msra.mxu0 %v138
    %973 = vmatprep.subr.mxu0 0.0
    %974 = vmatpush1.msra.mxu0 %v137
    %975 = vmatprep.subr.mxu0 0.0
    %976 = vmatpush1.msra.mxu0 %v136
    %977 = vmatprep.subr.mxu0 0.0
    %978 = vmatpush2.msra.mxu0 0.0
    %979 = vmatprep.subr.mxu0 0.0
    %980 = vmatpush2.msra.mxu0 0.0
    %981 = vmatprep.subr.mxu0 0.0
    %982 = vmatpush2.msra.mxu0 0.0
    %983 = vmatprep.subr.mxu0 0.0
    %984 = vmatpush2.msra.mxu0 0.0
    %985 = vmatprep.subr.mxu0 0.0
    %986 = vmatpush2.msra.mxu0 0.0
    %987 = vmatprep.subr.mxu0 0.0
    %988 = vmatpush2.msra.mxu0 0.0
    %989 = vmatprep.subr.mxu0 0.0
    %990 = vmatpush2.msra.mxu0 0.0
    %991 = vmatprep.subr.mxu0 0.0
    %992 = vmatpush2.msra.mxu0 0.0
    %993 = vmatprep.subr.mxu0 0.0
    %994 = vmatpush2.msra.mxu0 0.0
    %995 = vmatprep.subr.mxu0 0.0
    %996 = vmatpush2.msra.mxu0 0.0
    %997 = vmatprep.subr.mxu0 0.0
    %998 = vmatpush2.msra.mxu0 0.0
    %999 = vmatprep.subr.mxu0 0.0
    %1000 = vmatpush2.msra.mxu0 0.0
    %1001 = vmatprep.subr.mxu0 0.0
    %1002 = vmatpush2.msra.mxu0 0.0
    %1003 = vmatprep.subr.mxu0 0.0
    %1004 = vmatpush2.msra.mxu0 0.0
    %1005 = vmatprep.subr.mxu0 0.0
    %1006 = vmatpush2.msra.mxu0 0.0
    %1007 = vmatprep.subr.mxu0 0.0
    %1008 = vmatpush2.msra.mxu0 0.0
    %1009 = vmatprep.mubr.f32.mxu0 0.0
    %1010 = vmatmul.mubr.f32.gmra.mxu0 %v943
    %v1011 = vpop.f32.mrf.mxu0
    %v1012 = vadd.f32 0.0, %v1011
    %v1013 = vpop.f32.mrf.mxu0
    %1014 = vdwg.mxu0
    %v1015 = vadd.f32 %v226, %v1012
    %v1016 = vmul.f32 %v1015, 0.5
    %v1017 = vtanh.pop %v1016
    %v1018 = vmul.f32 %v1017, 0.5
    %v1019 = vadd.f32 %v1018, 0.5
    %v1020 = vtanh.pop %v1015
    %1022 = vrot.lane.b32.xlu0 %v939, 32
    %v1023 = vpop.permute.xlu0 %1022
    %v1025 = vmul.f32 %v1019, %v1023
    %1027 = vrot.lane.b32.xlu0 %v1020, 64
    %v1028 = vpop.permute.xlu0 %1027
    %v1030 = vmul.f32 %v1019, %v1028
    %1032 = vrot.lane.b32.xlu0 %v1030, 32
    %v1033 = vpop.permute.xlu0 %1032
    %v1035 = vadd.f32 %v1025, %v1033
    %v1036 = vtanh.pop %v1035
    %1038 = vrot.lane.b32.xlu0 %v1036, 64
    %v1039 = vpop.permute.xlu0 %1038
    %v1041 = vmul.f32 %v1019, %v1039
    %v1042 = vsel %vm941, 1, 0
    %1043 = vset.pattern.permute.xlu0 0
    %1044 = vperm.xlu0 %1043, %v1042
    %v1045 = vpop.permute.xlu0 %1044
    %vm1046 = vcmp.eq.s32.totalorder %v1045, 1
    %1047 = vrot.lane.b32.xlu0 %v930, 96
    %v1048 = vpop.permute.xlu0 %1047
    %v1050 = vsel %vm1046, %v1041, %v1048
    %v1051 = vsel %vm1046, %v1035, %v1023
    %1053 = vrot.lane.b32.xlu0 %v1050, 32
    %v1054 = vpop.permute.xlu0 %1053
    %1056 = vst.msk [vmem:[#allocation2 + $0x18] sm:$0xf] %vm338, %v1054
    %vm1057 = vcmp.gt.s32.totalorder %v135, 7
    %v1058 = vsel %vm230, %v1054, 0
    %1060 = vmatprep.subr.mxu0 0.0
    %1061 = vmatpush1.msra.mxu0 0.0
    %1062 = vmatprep.subr.mxu0 0.0
    %1063 = vmatpush1.msra.mxu0 0.0
    %1064 = vmatprep.subr.mxu0 0.0
    %1065 = vmatpush1.msra.mxu0 0.0
    %1066 = vmatprep.subr.mxu0 0.0
    %1067 = vmatpush1.msra.mxu0 0.0
    %1068 = vmatprep.subr.mxu0 0.0
    %1069 = vmatpush1.msra.mxu0 0.0
    %1070 = vmatprep.subr.mxu0 0.0
    %1071 = vmatpush1.msra.mxu0 0.0
    %1072 = vmatprep.subr.mxu0 0.0
    %1073 = vmatpush1.msra.mxu0 0.0
    %1074 = vmatprep.subr.mxu0 0.0
    %1075 = vmatpush1.msra.mxu0 0.0
    %1076 = vmatprep.subr.mxu0 0.0
    %1077 = vmatpush1.msra.mxu0 0.0
    %1078 = vmatprep.subr.mxu0 0.0
    %1079 = vmatpush1.msra.mxu0 0.0
    %1080 = vmatprep.subr.mxu0 0.0
    %1081 = vmatpush1.msra.mxu0 0.0
    %1082 = vmatprep.subr.mxu0 0.0
    %1083 = vmatpush1.msra.mxu0 0.0
    %1084 = vmatprep.subr.mxu0 0.0
    %1085 = vmatpush1.msra.mxu0 %v139
    %1086 = vmatprep.subr.mxu0 0.0
    %1087 = vmatpush1.msra.mxu0 %v138
    %1088 = vmatprep.subr.mxu0 0.0
    %1089 = vmatpush1.msra.mxu0 %v137
    %1090 = vmatprep.subr.mxu0 0.0
    %1091 = vmatpush1.msra.mxu0 %v136
    %1092 = vmatprep.subr.mxu0 0.0
    %1093 = vmatpush2.msra.mxu0 0.0
    %1094 = vmatprep.subr.mxu0 0.0
    %1095 = vmatpush2.msra.mxu0 0.0
    %1096 = vmatprep.subr.mxu0 0.0
    %1097 = vmatpush2.msra.mxu0 0.0
    %1098 = vmatprep.subr.mxu0 0.0
    %1099 = vmatpush2.msra.mxu0 0.0
    %1100 = vmatprep.subr.mxu0 0.0
    %1101 = vmatpush2.msra.mxu0 0.0
    %1102 = vmatprep.subr.mxu0 0.0
    %1103 = vmatpush2.msra.mxu0 0.0
    %1104 = vmatprep.subr.mxu0 0.0
    %1105 = vmatpush2.msra.mxu0 0.0
    %1106 = vmatprep.subr.mxu0 0.0
    %1107 = vmatpush2.msra.mxu0 0.0
    %1108 = vmatprep.subr.mxu0 0.0
    %1109 = vmatpush2.msra.mxu0 0.0
    %1110 = vmatprep.subr.mxu0 0.0
    %1111 = vmatpush2.msra.mxu0 0.0
    %1112 = vmatprep.subr.mxu0 0.0
    %1113 = vmatpush2.msra.mxu0 0.0
    %1114 = vmatprep.subr.mxu0 0.0
    %1115 = vmatpush2.msra.mxu0 0.0
    %1116 = vmatprep.subr.mxu0 0.0
    %1117 = vmatpush2.msra.mxu0 0.0
    %1118 = vmatprep.subr.mxu0 0.0
    %1119 = vmatpush2.msra.mxu0 0.0
    %1120 = vmatprep.subr.mxu0 0.0
    %1121 = vmatpush2.msra.mxu0 0.0
    %1122 = vmatprep.subr.mxu0 0.0
    %1123 = vmatpush2.msra.mxu0 0.0
    %1124 = vmatprep.mubr.f32.mxu0 0.0
    %1125 = vmatmul.mubr.f32.gmra.mxu0 %v1058
    %v1126 = vpop.f32.mrf.mxu0
    %v1127 = vadd.f32 0.0, %v1126
    %v1128 = vpop.f32.mrf.mxu0
    %1129 = vdwg.mxu0
    %v1131 = vrot.slane %v1127, 4
    %v1133 = vadd.f32 %v226, %v1131
    %v1134 = vmul.f32 %v1133, 0.5
    %v1135 = vtanh.pop %v1134
    %v1136 = vmul.f32 %v1135, 0.5
    %v1137 = vadd.f32 %v1136, 0.5
    %v1138 = vtanh.pop %v1133
    %v1140 = vrot.slane %v1051, 4
    %v1142 = vmul.f32 %v1137, %v1140
    %1144 = vrot.lane.b32.xlu0 %v1138, 64
    %v1145 = vpop.permute.xlu0 %1144
    %v1147 = vmul.f32 %v1137, %v1145
    %1149 = vrot.lane.b32.xlu0 %v1147, 32
    %v1150 = vpop.permute.xlu0 %1149
    %v1152 = vadd.f32 %v1142, %v1150
    %v1153 = vtanh.pop %v1152
    %1155 = vrot.lane.b32.xlu0 %v1153, 64
    %v1156 = vpop.permute.xlu0 %1155
    %v1158 = vmul.f32 %v1137, %v1156
    %v1159 = vsel %vm1057, 1, 0
    %1160 = vset.pattern.permute.xlu0 0
    %1161 = vperm.xlu0 %1160, %v1159
    %v1162 = vpop.permute.xlu0 %1161
    %vm1163 = vcmp.eq.s32.totalorder %v1162, 1
    %v1165 = vrot.slane %v1158, 4
    %1166 = vrot.lane.b32.xlu0 %v1165, 32
    %v1167 = vpop.permute.xlu0 %1166
    %v1169 = vsel %vm1163, %v1167, %v1054
    %1170 = vst.msk [vmem:[#allocation2 + $0x1c] sm:$0xf] %vm338, %v1169
    %v1171 = vld [vmem:[#allocation2] sm:$0xff]
    %v1172 = vld [vmem:[#allocation2 + $0x8] sm:$0xff]
    %v1173 = vld [vmem:[#allocation2 + $0x10] sm:$0xff]
    %v1174 = vld [vmem:[#allocation2 + $0x18] sm:$0xff]
    %v1175 = vpack.c.bf16 %v1172, %v1171
    %v1176 = vpack.c.bf16 %v1174, %v1173
    %v1177 = vld [vmem:[#allocation6] sm:$0xf]
    %v1178 = vld [vmem:[#allocation6 + $0x4] sm:$0xf]
    %v1179 = vld [vmem:[#allocation6 + $0x8] sm:$0xf]
    %v1180 = vld [vmem:[#allocation6 + $0xc] sm:$0xf]
    %v1181 = vld [vmem:[#allocation9] sm:$0x1]
    %v1183 = vlaneseq
    %v1184 = vshrl.u32 %v1183, 7
    %v1185 = vsub.s32 0, %v1184
    %v1186 = vrot.slane %v1181, %v1185
    %v1192 = vunpack.c.l.b16 %v1177
    %v1193 = vunpack.c.l.b16 %v1178
    %v1194 = vunpack.c.l.b16 %v1179
    %v1195 = vunpack.c.l.b16 %v1180
    %v1196 = vpack.c.b16 %v1193, %v1192
    %v1197 = vpack.c.b16 %v1195, %v1194
    %v1201 = vsel %vm230, %v1175, 0
    %v1204 = vsel %vm230, %v1176, 0
    %1206 = vmatprep.subr.bf16.mxu0 0
    %1207 = vmatpush1.bf16.msra.mxu0 0
    %1208 = vmatprep.subr.bf16.mxu0 0
    %1209 = vmatpush1.bf16.msra.mxu0 0
    %1210 = vmatprep.subr.bf16.mxu0 0
    %1211 = vmatpush1.bf16.msra.mxu0 0
    %1212 = vmatprep.subr.bf16.mxu0 0
    %1213 = vmatpush1.bf16.msra.mxu0 0
    %1214 = vmatprep.subr.bf16.mxu0 0
    %1215 = vmatpush1.bf16.msra.mxu0 0
    %1216 = vmatprep.subr.bf16.mxu0 0
    %1217 = vmatpush1.bf16.msra.mxu0 0
    %1218 = vmatprep.subr.bf16.mxu0 0
    %1219 = vmatpush1.bf16.msra.mxu0 %v1197
    %1220 = vmatprep.subr.bf16.mxu0 0
    %1221 = vmatpush1.bf16.msra.mxu0 %v1196
    %1222 = vmatprep.subr.bf16.mxu0 0
    %1223 = vmatpush2.bf16.msra.mxu0 0
    %1224 = vmatprep.subr.bf16.mxu0 0
    %1225 = vmatpush2.bf16.msra.mxu0 0
    %1226 = vmatprep.subr.bf16.mxu0 0
    %1227 = vmatpush2.bf16.msra.mxu0 0
    %1228 = vmatprep.subr.bf16.mxu0 0
    %1229 = vmatpush2.bf16.msra.mxu0 0
    %1230 = vmatprep.subr.bf16.mxu0 0
    %1231 = vmatpush2.bf16.msra.mxu0 0
    %1232 = vmatprep.subr.bf16.mxu0 0
    %1233 = vmatpush2.bf16.msra.mxu0 0
    %1234 = vmatprep.subr.bf16.mxu0 0
    %1235 = vmatpush2.bf16.msra.mxu0 0
    %1236 = vmatprep.subr.bf16.mxu0 0
    %1237 = vmatpush2.bf16.msra.mxu0 0
    %1238 = vmatprep.mubr.bf16.mxu0 0
    %1239 = vmatmul.mubr.bf16.gmra.mxu0 %v1201
    %v1240 = vpop.f32.mrf.mxu0
    %v1241 = vadd.f32 %v1186, %v1240
    %v1242 = vpop.f32.mrf.mxu0
    %v1243 = vpop.f32.mrf.mxu0
    %v1244 = vadd.f32 %v1186, %v1243
    %v1245 = vpop.f32.mrf.mxu0
    %1246 = vmatprep.mubr.bf16.mxu0 0
    %1247 = vmatmul.mubr.bf16.gmra.mxu0 %v1204
    %v1248 = vpop.f32.mrf.mxu0
    %v1249 = vadd.f32 %v1186, %v1248
    %v1250 = vpop.f32.mrf.mxu0
    %v1251 = vpop.f32.mrf.mxu0
    %v1252 = vadd.f32 %v1186, %v1251
    %v1253 = vpop.f32.mrf.mxu0
    %1254 = vdwg.mxu0
    %1255 = vmatprep.subr.mxu0 0.0
    %1256 = vmatpush1.msra.mxu0 0.0
    %1257 = vmatprep.subr.mxu0 0.0
    %1258 = vmatpush1.msra.mxu0 0.0
    %1259 = vmatprep.subr.mxu0 0.0
    %1260 = vmatpush1.msra.mxu0 0.0
    %1261 = vmatprep.subr.mxu0 0.0
    %1262 = vmatpush1.msra.mxu0 0.0
    %1263 = vmatprep.subr.mxu0 0.0
    %1264 = vmatpush1.msra.mxu0 0.0
    %1265 = vmatprep.subr.mxu0 0.0
    %1266 = vmatpush1.msra.mxu0 0.0
    %1267 = vmatprep.subr.mxu0 0.0
    %1268 = vmatpush1.msra.mxu0 0.0
    %1269 = vmatprep.subr.mxu0 0.0
    %1270 = vmatpush1.msra.mxu0 0.0
    %1271 = vmatprep.subr.mxu0 0.0
    %1272 = vmatpush1.msra.mxu0 0.0
    %1273 = vmatprep.subr.mxu0 0.0
    %1274 = vmatpush1.msra.mxu0 0.0
    %1275 = vmatprep.subr.mxu0 0.0
    %1276 = vmatpush1.msra.mxu0 0.0
    %1277 = vmatprep.subr.mxu0 0.0
    %1278 = vmatpush1.msra.mxu0 0.0
    %1279 = vmatprep.subr.mxu0 0.0
    %1280 = vmatpush1.msra.mxu0 %v143
    %1281 = vmatprep.subr.mxu0 0.0
    %1282 = vmatpush1.msra.mxu0 %v142
    %1283 = vmatprep.subr.mxu0 0.0
    %1284 = vmatpush1.msra.mxu0 %v141
    %1285 = vmatprep.subr.mxu0 0.0
    %1286 = vmatpush1.msra.mxu0 %v140
    %1287 = vmatprep.subr.mxu0 0.0
    %1288 = vmatpush2.msra.mxu0 0.0
    %1289 = vmatprep.subr.mxu0 0.0
    %1290 = vmatpush2.msra.mxu0 0.0
    %1291 = vmatprep.subr.mxu0 0.0
    %1292 = vmatpush2.msra.mxu0 0.0
    %1293 = vmatprep.subr.mxu0 0.0
    %1294 = vmatpush2.msra.mxu0 0.0
    %1295 = vmatprep.subr.mxu0 0.0
    %1296 = vmatpush2.msra.mxu0 0.0
    %1297 = vmatprep.subr.mxu0 0.0
    %1298 = vmatpush2.msra.mxu0 0.0
    %1299 = vmatprep.subr.mxu0 0.0
    %1300 = vmatpush2.msra.mxu0 0.0
    %1301 = vmatprep.subr.mxu0 0.0
    %1302 = vmatpush2.msra.mxu0 0.0
    %1303 = vmatprep.subr.mxu0 0.0
    %1304 = vmatpush2.msra.mxu0 0.0
    %1305 = vmatprep.subr.mxu0 0.0
    %1306 = vmatpush2.msra.mxu0 0.0
    %1307 = vmatprep.subr.mxu0 0.0
    %1308 = vmatpush2.msra.mxu0 0.0
    %1309 = vmatprep.subr.mxu0 0.0
    %1310 = vmatpush2.msra.mxu0 0.0
    %1311 = vmatprep.subr.mxu0 0.0
    %1312 = vmatpush2.msra.mxu0 0.0
    %1313 = vmatprep.subr.mxu0 0.0
    %1314 = vmatpush2.msra.mxu0 0.0
    %1315 = vmatprep.subr.mxu0 0.0
    %1316 = vmatpush2.msra.mxu0 0.0
    %1317 = vmatprep.subr.mxu0 0.0
    %1318 = vmatpush2.msra.mxu0 0.0
    %1319 = vmatprep.mubr.f32.mxu0 0.0
    %1320 = vmatmul.mubr.f32.gmra.mxu0 %v232
    %v1321 = vpop.f32.mrf.mxu0
    %v1322 = vadd.f32 0.0, %v1321
    %v1323 = vpop.f32.mrf.mxu0
    %1324 = vdwg.mxu0
    %v1325 = vadd.f32 %v1241, %v1322
    %v1326 = vmul.f32 %v1325, 0.5
    %v1327 = vtanh.pop %v1326
    %v1328 = vmul.f32 %v1327, 0.5
    %v1329 = vadd.f32 %v1328, 0.5
    %v1330 = vtanh.pop %v1325
    %v1331 = vmul.f32 %v1329, 0.0
    %1333 = vrot.lane.b32.xlu0 %v1330, 64
    %v1334 = vpop.permute.xlu0 %1333
    %v1336 = vmul.f32 %v1329, %v1334
    %1338 = vrot.lane.b32.xlu0 %v1336, 32
    %v1339 = vpop.permute.xlu0 %1338
    %v1341 = vadd.f32 %v1331, %v1339
    %v1342 = vtanh.pop %v1341
    %1344 = vrot.lane.b32.xlu0 %v1342, 64
    %v1345 = vpop.permute.xlu0 %1344
    %v1347 = vmul.f32 %v1329, %v1345
    %v1348 = vsel %vm331, %v1347, 0.0
    %v1349 = vsel %vm331, %v1341, 0.0
    %1351 = vrot.lane.b32.xlu0 %v1348, 32
    %v1352 = vpop.permute.xlu0 %1351
    %v1353 = vsel %vm230, %v1352, 0
    %1355 = vmatprep.subr.mxu0 0.0
    %1356 = vmatpush1.msra.mxu0 0.0
    %1357 = vmatprep.subr.mxu0 0.0
    %1358 = vmatpush1.msra.mxu0 0.0
    %1359 = vmatprep.subr.mxu0 0.0
    %1360 = vmatpush1.msra.mxu0 0.0
    %1361 = vmatprep.subr.mxu0 0.0
    %1362 = vmatpush1.msra.mxu0 0.0
    %1363 = vmatprep.subr.mxu0 0.0
    %1364 = vmatpush1.msra.mxu0 0.0
    %1365 = vmatprep.subr.mxu0 0.0
    %1366 = vmatpush1.msra.mxu0 0.0
    %1367 = vmatprep.subr.mxu0 0.0
    %1368 = vmatpush1.msra.mxu0 0.0
    %1369 = vmatprep.subr.mxu0 0.0
    %1370 = vmatpush1.msra.mxu0 0.0
    %1371 = vmatprep.subr.mxu0 0.0
    %1372 = vmatpush1.msra.mxu0 0.0
    %1373 = vmatprep.subr.mxu0 0.0
    %1374 = vmatpush1.msra.mxu0 0.0
    %1375 = vmatprep.subr.mxu0 0.0
    %1376 = vmatpush1.msra.mxu0 0.0
    %1377 = vmatprep.subr.mxu0 0.0
    %1378 = vmatpush1.msra.mxu0 0.0
    %1379 = vmatprep.subr.mxu0 0.0
    %1380 = vmatpush1.msra.mxu0 %v143
    %1381 = vmatprep.subr.mxu0 0.0
    %1382 = vmatpush1.msra.mxu0 %v142
    %1383 = vmatprep.subr.mxu0 0.0
    %1384 = vmatpush1.msra.mxu0 %v141
    %1385 = vmatprep.subr.mxu0 0.0
    %1386 = vmatpush1.msra.mxu0 %v140
    %1387 = vmatprep.subr.mxu0 0.0
    %1388 = vmatpush2.msra.mxu0 0.0
    %1389 = vmatprep.subr.mxu0 0.0
    %1390 = vmatpush2.msra.mxu0 0.0
    %1391 = vmatprep.subr.mxu0 0.0
    %1392 = vmatpush2.msra.mxu0 0.0
    %1393 = vmatprep.subr.mxu0 0.0
    %1394 = vmatpush2.msra.mxu0 0.0
    %1395 = vmatprep.subr.mxu0 0.0
    %1396 = vmatpush2.msra.mxu0 0.0
    %1397 = vmatprep.subr.mxu0 0.0
    %1398 = vmatpush2.msra.mxu0 0.0
    %1399 = vmatprep.subr.mxu0 0.0
    %1400 = vmatpush2.msra.mxu0 0.0
    %1401 = vmatprep.subr.mxu0 0.0
    %1402 = vmatpush2.msra.mxu0 0.0
    %1403 = vmatprep.subr.mxu0 0.0
    %1404 = vmatpush2.msra.mxu0 0.0
    %1405 = vmatprep.subr.mxu0 0.0
    %1406 = vmatpush2.msra.mxu0 0.0
    %1407 = vmatprep.subr.mxu0 0.0
    %1408 = vmatpush2.msra.mxu0 0.0
    %1409 = vmatprep.subr.mxu0 0.0
    %1410 = vmatpush2.msra.mxu0 0.0
    %1411 = vmatprep.subr.mxu0 0.0
    %1412 = vmatpush2.msra.mxu0 0.0
    %1413 = vmatprep.subr.mxu0 0.0
    %1414 = vmatpush2.msra.mxu0 0.0
    %1415 = vmatprep.subr.mxu0 0.0
    %1416 = vmatpush2.msra.mxu0 0.0
    %1417 = vmatprep.subr.mxu0 0.0
    %1418 = vmatpush2.msra.mxu0 0.0
    %1419 = vmatprep.mubr.f32.mxu0 0.0
    %1420 = vmatmul.mubr.f32.gmra.mxu0 %v1353
    %v1421 = vpop.f32.mrf.mxu0
    %v1422 = vadd.f32 0.0, %v1421
    %v1423 = vpop.f32.mrf.mxu0
    %1424 = vdwg.mxu0
    %v1426 = vrot.slane %v1422, 4
    %v1428 = vadd.f32 %v1241, %v1426
    %v1429 = vmul.f32 %v1428, 0.5
    %v1430 = vtanh.pop %v1429
    %v1431 = vmul.f32 %v1430, 0.5
    %v1432 = vadd.f32 %v1431, 0.5
    %v1433 = vtanh.pop %v1428
    %v1435 = vrot.slane %v1349, 4
    %v1437 = vmul.f32 %v1432, %v1435
    %1439 = vrot.lane.b32.xlu0 %v1433, 64
    %v1440 = vpop.permute.xlu0 %1439
    %v1442 = vmul.f32 %v1432, %v1440
    %1444 = vrot.lane.b32.xlu0 %v1442, 32
    %v1445 = vpop.permute.xlu0 %1444
    %v1447 = vadd.f32 %v1437, %v1445
    %v1448 = vtanh.pop %v1447
    %1450 = vrot.lane.b32.xlu0 %v1448, 64
    %v1451 = vpop.permute.xlu0 %1450
    %v1453 = vmul.f32 %v1432, %v1451
    %v1455 = vrot.slane %v1453, 4
    %1456 = vrot.lane.b32.xlu0 %v1455, 32
    %v1457 = vpop.permute.xlu0 %1456
    %v1460 = vsel %vm446, %v1457, %v1352
    %v1462 = vrot.slane %v1447, 4
    %1463 = vrot.lane.b32.xlu0 %v1462, 96
    %v1464 = vpop.permute.xlu0 %1463
    %1466 = vrot.lane.b32.xlu0 %v1349, 96
    %v1467 = vpop.permute.xlu0 %1466
    %v1469 = vsel %vm446, %v1464, %v1467
    %v1471 = vsel %vm230, %v1460, 0
    %1473 = vmatprep.subr.mxu0 0.0
    %1474 = vmatpush1.msra.mxu0 0.0
    %1475 = vmatprep.subr.mxu0 0.0
    %1476 = vmatpush1.msra.mxu0 0.0
    %1477 = vmatprep.subr.mxu0 0.0
    %1478 = vmatpush1.msra.mxu0 0.0
    %1479 = vmatprep.subr.mxu0 0.0
    %1480 = vmatpush1.msra.mxu0 0.0
    %1481 = vmatprep.subr.mxu0 0.0
    %1482 = vmatpush1.msra.mxu0 0.0
    %1483 = vmatprep.subr.mxu0 0.0
    %1484 = vmatpush1.msra.mxu0 0.0
    %1485 = vmatprep.subr.mxu0 0.0
    %1486 = vmatpush1.msra.mxu0 0.0
    %1487 = vmatprep.subr.mxu0 0.0
    %1488 = vmatpush1.msra.mxu0 0.0
    %1489 = vmatprep.subr.mxu0 0.0
    %1490 = vmatpush1.msra.mxu0 0.0
    %1491 = vmatprep.subr.mxu0 0.0
    %1492 = vmatpush1.msra.mxu0 0.0
    %1493 = vmatprep.subr.mxu0 0.0
    %1494 = vmatpush1.msra.mxu0 0.0
    %1495 = vmatprep.subr.mxu0 0.0
    %1496 = vmatpush1.msra.mxu0 0.0
    %1497 = vmatprep.subr.mxu0 0.0
    %1498 = vmatpush1.msra.mxu0 %v143
    %1499 = vmatprep.subr.mxu0 0.0
    %1500 = vmatpush1.msra.mxu0 %v142
    %1501 = vmatprep.subr.mxu0 0.0
    %1502 = vmatpush1.msra.mxu0 %v141
    %1503 = vmatprep.subr.mxu0 0.0
    %1504 = vmatpush1.msra.mxu0 %v140
    %1505 = vmatprep.subr.mxu0 0.0
    %1506 = vmatpush2.msra.mxu0 0.0
    %1507 = vmatprep.subr.mxu0 0.0
    %1508 = vmatpush2.msra.mxu0 0.0
    %1509 = vmatprep.subr.mxu0 0.0
    %1510 = vmatpush2.msra.mxu0 0.0
    %1511 = vmatprep.subr.mxu0 0.0
    %1512 = vmatpush2.msra.mxu0 0.0
    %1513 = vmatprep.subr.mxu0 0.0
    %1514 = vmatpush2.msra.mxu0 0.0
    %1515 = vmatprep.subr.mxu0 0.0
    %1516 = vmatpush2.msra.mxu0 0.0
    %1517 = vmatprep.subr.mxu0 0.0
    %1518 = vmatpush2.msra.mxu0 0.0
    %1519 = vmatprep.subr.mxu0 0.0
    %1520 = vmatpush2.msra.mxu0 0.0
    %1521 = vmatprep.subr.mxu0 0.0
    %1522 = vmatpush2.msra.mxu0 0.0
    %1523 = vmatprep.subr.mxu0 0.0
    %1524 = vmatpush2.msra.mxu0 0.0
    %1525 = vmatprep.subr.mxu0 0.0
    %1526 = vmatpush2.msra.mxu0 0.0
    %1527 = vmatprep.subr.mxu0 0.0
    %1528 = vmatpush2.msra.mxu0 0.0
    %1529 = vmatprep.subr.mxu0 0.0
    %1530 = vmatpush2.msra.mxu0 0.0
    %1531 = vmatprep.subr.mxu0 0.0
    %1532 = vmatpush2.msra.mxu0 0.0
    %1533 = vmatprep.subr.mxu0 0.0
    %1534 = vmatpush2.msra.mxu0 0.0
    %1535 = vmatprep.subr.mxu0 0.0
    %1536 = vmatpush2.msra.mxu0 0.0
    %1537 = vmatprep.mubr.f32.mxu0 0.0
    %1538 = vmatmul.mubr.f32.gmra.mxu0 %v1471
    %v1539 = vpop.f32.mrf.mxu0
    %v1540 = vadd.f32 0.0, %v1539
    %v1541 = vpop.f32.mrf.mxu0
    %1542 = vdwg.mxu0
    %v1543 = vadd.f32 %v1244, %v1540
    %v1544 = vmul.f32 %v1543, 0.5
    %v1545 = vtanh.pop %v1544
    %v1546 = vmul.f32 %v1545, 0.5
    %v1547 = vadd.f32 %v1546, 0.5
    %v1548 = vtanh.pop %v1543
    %1550 = vrot.lane.b32.xlu0 %v1469, 32
    %v1551 = vpop.permute.xlu0 %1550
    %v1553 = vmul.f32 %v1547, %v1551
    %1555 = vrot.lane.b32.xlu0 %v1548, 64
    %v1556 = vpop.permute.xlu0 %1555
    %v1558 = vmul.f32 %v1547, %v1556
    %1560 = vrot.lane.b32.xlu0 %v1558, 32
    %v1561 = vpop.permute.xlu0 %1560
    %v1563 = vadd.f32 %v1553, %v1561
    %v1564 = vtanh.pop %v1563
    %1566 = vrot.lane.b32.xlu0 %v1564, 64
    %v1567 = vpop.permute.xlu0 %1566
    %v1569 = vmul.f32 %v1547, %v1567
    %1570 = vrot.lane.b32.xlu0 %v1460, 96
    %v1571 = vpop.permute.xlu0 %1570
    %v1573 = vsel %vm568, %v1569, %v1571
    %v1574 = vsel %vm568, %v1563, %v1551
    %1576 = vrot.lane.b32.xlu0 %v1573, 32
    %v1577 = vpop.permute.xlu0 %1576
    %v1578 = vsel %vm230, %v1577, 0
    %1580 = vmatprep.subr.mxu0 0.0
    %1581 = vmatpush1.msra.mxu0 0.0
    %1582 = vmatprep.subr.mxu0 0.0
    %1583 = vmatpush1.msra.mxu0 0.0
    %1584 = vmatprep.subr.mxu0 0.0
    %1585 = vmatpush1.msra.mxu0 0.0
    %1586 = vmatprep.subr.mxu0 0.0
    %1587 = vmatpush1.msra.mxu0 0.0
    %1588 = vmatprep.subr.mxu0 0.0
    %1589 = vmatpush1.msra.mxu0 0.0
    %1590 = vmatprep.subr.mxu0 0.0
    %1591 = vmatpush1.msra.mxu0 0.0
    %1592 = vmatprep.subr.mxu0 0.0
    %1593 = vmatpush1.msra.mxu0 0.0
    %1594 = vmatprep.subr.mxu0 0.0
    %1595 = vmatpush1.msra.mxu0 0.0
    %1596 = vmatprep.subr.mxu0 0.0
    %1597 = vmatpush1.msra.mxu0 0.0
    %1598 = vmatprep.subr.mxu0 0.0
    %1599 = vmatpush1.msra.mxu0 0.0
    %1600 = vmatprep.subr.mxu0 0.0
    %1601 = vmatpush1.msra.mxu0 0.0
    %1602 = vmatprep.subr.mxu0 0.0
    %1603 = vmatpush1.msra.mxu0 0.0
    %1604 = vmatprep.subr.mxu0 0.0
    %1605 = vmatpush1.msra.mxu0 %v143
    %1606 = vmatprep.subr.mxu0 0.0
    %1607 = vmatpush1.msra.mxu0 %v142
    %1608 = vmatprep.subr.mxu0 0.0
    %1609 = vmatpush1.msra.mxu0 %v141
    %1610 = vmatprep.subr.mxu0 0.0
    %1611 = vmatpush1.msra.mxu0 %v140
    %1612 = vmatprep.subr.mxu0 0.0
    %1613 = vmatpush2.msra.mxu0 0.0
    %1614 = vmatprep.subr.mxu0 0.0
    %1615 = vmatpush2.msra.mxu0 0.0
    %1616 = vmatprep.subr.mxu0 0.0
    %1617 = vmatpush2.msra.mxu0 0.0
    %1618 = vmatprep.subr.mxu0 0.0
    %1619 = vmatpush2.msra.mxu0 0.0
    %1620 = vmatprep.subr.mxu0 0.0
    %1621 = vmatpush2.msra.mxu0 0.0
    %1622 = vmatprep.subr.mxu0 0.0
    %1623 = vmatpush2.msra.mxu0 0.0
    %1624 = vmatprep.subr.mxu0 0.0
    %1625 = vmatpush2.msra.mxu0 0.0
    %1626 = vmatprep.subr.mxu0 0.0
    %1627 = vmatpush2.msra.mxu0 0.0
    %1628 = vmatprep.subr.mxu0 0.0
    %1629 = vmatpush2.msra.mxu0 0.0
    %1630 = vmatprep.subr.mxu0 0.0
    %1631 = vmatpush2.msra.mxu0 0.0
    %1632 = vmatprep.subr.mxu0 0.0
    %1633 = vmatpush2.msra.mxu0 0.0
    %1634 = vmatprep.subr.mxu0 0.0
    %1635 = vmatpush2.msra.mxu0 0.0
    %1636 = vmatprep.subr.mxu0 0.0
    %1637 = vmatpush2.msra.mxu0 0.0
    %1638 = vmatprep.subr.mxu0 0.0
    %1639 = vmatpush2.msra.mxu0 0.0
    %1640 = vmatprep.subr.mxu0 0.0
    %1641 = vmatpush2.msra.mxu0 0.0
    %1642 = vmatprep.subr.mxu0 0.0
    %1643 = vmatpush2.msra.mxu0 0.0
    %1644 = vmatprep.mubr.f32.mxu0 0.0
    %1645 = vmatmul.mubr.f32.gmra.mxu0 %v1578
    %v1646 = vpop.f32.mrf.mxu0
    %v1647 = vadd.f32 0.0, %v1646
    %v1648 = vpop.f32.mrf.mxu0
    %1649 = vdwg.mxu0
    %v1651 = vrot.slane %v1647, 4
    %v1653 = vadd.f32 %v1244, %v1651
    %v1654 = vmul.f32 %v1653, 0.5
    %v1655 = vtanh.pop %v1654
    %v1656 = vmul.f32 %v1655, 0.5
    %v1657 = vadd.f32 %v1656, 0.5
    %v1658 = vtanh.pop %v1653
    %v1660 = vrot.slane %v1574, 4
    %v1662 = vmul.f32 %v1657, %v1660
    %1664 = vrot.lane.b32.xlu0 %v1658, 64
    %v1665 = vpop.permute.xlu0 %1664
    %v1667 = vmul.f32 %v1657, %v1665
    %1669 = vrot.lane.b32.xlu0 %v1667, 32
    %v1670 = vpop.permute.xlu0 %1669
    %v1672 = vadd.f32 %v1662, %v1670
    %v1673 = vtanh.pop %v1672
    %1675 = vrot.lane.b32.xlu0 %v1673, 64
    %v1676 = vpop.permute.xlu0 %1675
    %v1678 = vmul.f32 %v1657, %v1676
    %v1680 = vrot.slane %v1678, 4
    %1681 = vrot.lane.b32.xlu0 %v1680, 32
    %v1682 = vpop.permute.xlu0 %1681
    %v1685 = vsel %vm685, %v1682, %v1577
    %v1687 = vrot.slane %v1672, 4
    %1688 = vrot.lane.b32.xlu0 %v1687, 96
    %v1689 = vpop.permute.xlu0 %1688
    %1691 = vrot.lane.b32.xlu0 %v1574, 96
    %v1692 = vpop.permute.xlu0 %1691
    %v1694 = vsel %vm685, %v1689, %v1692
    %v1696 = vsel %vm230, %v1685, 0
    %1698 = vmatprep.subr.mxu0 0.0
    %1699 = vmatpush1.msra.mxu0 0.0
    %1700 = vmatprep.subr.mxu0 0.0
    %1701 = vmatpush1.msra.mxu0 0.0
    %1702 = vmatprep.subr.mxu0 0.0
    %1703 = vmatpush1.msra.mxu0 0.0
    %1704 = vmatprep.subr.mxu0 0.0
    %1705 = vmatpush1.msra.mxu0 0.0
    %1706 = vmatprep.subr.mxu0 0.0
    %1707 = vmatpush1.msra.mxu0 0.0
    %1708 = vmatprep.subr.mxu0 0.0
    %1709 = vmatpush1.msra.mxu0 0.0
    %1710 = vmatprep.subr.mxu0 0.0
    %1711 = vmatpush1.msra.mxu0 0.0
    %1712 = vmatprep.subr.mxu0 0.0
    %1713 = vmatpush1.msra.mxu0 0.0
    %1714 = vmatprep.subr.mxu0 0.0
    %1715 = vmatpush1.msra.mxu0 0.0
    %1716 = vmatprep.subr.mxu0 0.0
    %1717 = vmatpush1.msra.mxu0 0.0
    %1718 = vmatprep.subr.mxu0 0.0
    %1719 = vmatpush1.msra.mxu0 0.0
    %1720 = vmatprep.subr.mxu0 0.0
    %1721 = vmatpush1.msra.mxu0 0.0
    %1722 = vmatprep.subr.mxu0 0.0
    %1723 = vmatpush1.msra.mxu0 %v143
    %1724 = vmatprep.subr.mxu0 0.0
    %1725 = vmatpush1.msra.mxu0 %v142
    %1726 = vmatprep.subr.mxu0 0.0
    %1727 = vmatpush1.msra.mxu0 %v141
    %1728 = vmatprep.subr.mxu0 0.0
    %1729 = vmatpush1.msra.mxu0 %v140
    %1730 = vmatprep.subr.mxu0 0.0
    %1731 = vmatpush2.msra.mxu0 0.0
    %1732 = vmatprep.subr.mxu0 0.0
    %1733 = vmatpush2.msra.mxu0 0.0
    %1734 = vmatprep.subr.mxu0 0.0
    %1735 = vmatpush2.msra.mxu0 0.0
    %1736 = vmatprep.subr.mxu0 0.0
    %1737 = vmatpush2.msra.mxu0 0.0
    %1738 = vmatprep.subr.mxu0 0.0
    %1739 = vmatpush2.msra.mxu0 0.0
    %1740 = vmatprep.subr.mxu0 0.0
    %1741 = vmatpush2.msra.mxu0 0.0
    %1742 = vmatprep.subr.mxu0 0.0
    %1743 = vmatpush2.msra.mxu0 0.0
    %1744 = vmatprep.subr.mxu0 0.0
    %1745 = vmatpush2.msra.mxu0 0.0
    %1746 = vmatprep.subr.mxu0 0.0
    %1747 = vmatpush2.msra.mxu0 0.0
    %1748 = vmatprep.subr.mxu0 0.0
    %1749 = vmatpush2.msra.mxu0 0.0
    %1750 = vmatprep.subr.mxu0 0.0
    %1751 = vmatpush2.msra.mxu0 0.0
    %1752 = vmatprep.subr.mxu0 0.0
    %1753 = vmatpush2.msra.mxu0 0.0
    %1754 = vmatprep.subr.mxu0 0.0
    %1755 = vmatpush2.msra.mxu0 0.0
    %1756 = vmatprep.subr.mxu0 0.0
    %1757 = vmatpush2.msra.mxu0 0.0
    %1758 = vmatprep.subr.mxu0 0.0
    %1759 = vmatpush2.msra.mxu0 0.0
    %1760 = vmatprep.subr.mxu0 0.0
    %1761 = vmatpush2.msra.mxu0 0.0
    %1762 = vmatprep.mubr.f32.mxu0 0.0
    %1763 = vmatmul.mubr.f32.gmra.mxu0 %v1696
    %v1764 = vpop.f32.mrf.mxu0
    %v1765 = vadd.f32 0.0, %v1764
    %v1766 = vpop.f32.mrf.mxu0
    %1767 = vdwg.mxu0
    %v1768 = vadd.f32 %v1249, %v1765
    %v1769 = vmul.f32 %v1768, 0.5
    %v1770 = vtanh.pop %v1769
    %v1771 = vmul.f32 %v1770, 0.5
    %v1772 = vadd.f32 %v1771, 0.5
    %v1773 = vtanh.pop %v1768
    %1775 = vrot.lane.b32.xlu0 %v1694, 32
    %v1776 = vpop.permute.xlu0 %1775
    %v1778 = vmul.f32 %v1772, %v1776
    %1780 = vrot.lane.b32.xlu0 %v1773, 64
    %v1781 = vpop.permute.xlu0 %1780
    %v1783 = vmul.f32 %v1772, %v1781
    %1785 = vrot.lane.b32.xlu0 %v1783, 32
    %v1786 = vpop.permute.xlu0 %1785
    %v1788 = vadd.f32 %v1778, %v1786
    %v1789 = vtanh.pop %v1788
    %1791 = vrot.lane.b32.xlu0 %v1789, 64
    %v1792 = vpop.permute.xlu0 %1791
    %v1794 = vmul.f32 %v1772, %v1792
    %1795 = vrot.lane.b32.xlu0 %v1685, 96
    %v1796 = vpop.permute.xlu0 %1795
    %v1798 = vsel %vm807, %v1794, %v1796
    %v1799 = vsel %vm807, %v1788, %v1776
    %1801 = vrot.lane.b32.xlu0 %v1798, 32
    %v1802 = vpop.permute.xlu0 %1801
    %v1803 = vsel %vm230, %v1802, 0
    %1805 = vmatprep.subr.mxu0 0.0
    %1806 = vmatpush1.msra.mxu0 0.0
    %1807 = vmatprep.subr.mxu0 0.0
    %1808 = vmatpush1.msra.mxu0 0.0
    %1809 = vmatprep.subr.mxu0 0.0
    %1810 = vmatpush1.msra.mxu0 0.0
    %1811 = vmatprep.subr.mxu0 0.0
    %1812 = vmatpush1.msra.mxu0 0.0
    %1813 = vmatprep.subr.mxu0 0.0
    %1814 = vmatpush1.msra.mxu0 0.0
    %1815 = vmatprep.subr.mxu0 0.0
    %1816 = vmatpush1.msra.mxu0 0.0
    %1817 = vmatprep.subr.mxu0 0.0
    %1818 = vmatpush1.msra.mxu0 0.0
    %1819 = vmatprep.subr.mxu0 0.0
    %1820 = vmatpush1.msra.mxu0 0.0
    %1821 = vmatprep.subr.mxu0 0.0
    %1822 = vmatpush1.msra.mxu0 0.0
    %1823 = vmatprep.subr.mxu0 0.0
    %1824 = vmatpush1.msra.mxu0 0.0
    %1825 = vmatprep.subr.mxu0 0.0
    %1826 = vmatpush1.msra.mxu0 0.0
    %1827 = vmatprep.subr.mxu0 0.0
    %1828 = vmatpush1.msra.mxu0 0.0
    %1829 = vmatprep.subr.mxu0 0.0
    %1830 = vmatpush1.msra.mxu0 %v143
    %1831 = vmatprep.subr.mxu0 0.0
    %1832 = vmatpush1.msra.mxu0 %v142
    %1833 = vmatprep.subr.mxu0 0.0
    %1834 = vmatpush1.msra.mxu0 %v141
    %1835 = vmatprep.subr.mxu0 0.0
    %1836 = vmatpush1.msra.mxu0 %v140
    %1837 = vmatprep.subr.mxu0 0.0
    %1838 = vmatpush2.msra.mxu0 0.0
    %1839 = vmatprep.subr.mxu0 0.0
    %1840 = vmatpush2.msra.mxu0 0.0
    %1841 = vmatprep.subr.mxu0 0.0
    %1842 = vmatpush2.msra.mxu0 0.0
    %1843 = vmatprep.subr.mxu0 0.0
    %1844 = vmatpush2.msra.mxu0 0.0
    %1845 = vmatprep.subr.mxu0 0.0
    %1846 = vmatpush2.msra.mxu0 0.0
    %1847 = vmatprep.subr.mxu0 0.0
    %1848 = vmatpush2.msra.mxu0 0.0
    %1849 = vmatprep.subr.mxu0 0.0
    %1850 = vmatpush2.msra.mxu0 0.0
    %1851 = vmatprep.subr.mxu0 0.0
    %1852 = vmatpush2.msra.mxu0 0.0
    %1853 = vmatprep.subr.mxu0 0.0
    %1854 = vmatpush2.msra.mxu0 0.0
    %1855 = vmatprep.subr.mxu0 0.0
    %1856 = vmatpush2.msra.mxu0 0.0
    %1857 = vmatprep.subr.mxu0 0.0
    %1858 = vmatpush2.msra.mxu0 0.0
    %1859 = vmatprep.subr.mxu0 0.0
    %1860 = vmatpush2.msra.mxu0 0.0
    %1861 = vmatprep.subr.mxu0 0.0
    %1862 = vmatpush2.msra.mxu0 0.0
    %1863 = vmatprep.subr.mxu0 0.0
    %1864 = vmatpush2.msra.mxu0 0.0
    %1865 = vmatprep.subr.mxu0 0.0
    %1866 = vmatpush2.msra.mxu0 0.0
    %1867 = vmatprep.subr.mxu0 0.0
    %1868 = vmatpush2.msra.mxu0 0.0
    %1869 = vmatprep.mubr.f32.mxu0 0.0
    %1870 = vmatmul.mubr.f32.gmra.mxu0 %v1803
    %v1871 = vpop.f32.mrf.mxu0
    %v1872 = vadd.f32 0.0, %v1871
    %v1873 = vpop.f32.mrf.mxu0
    %1874 = vdwg.mxu0
    %v1876 = vrot.slane %v1872, 4
    %v1878 = vadd.f32 %v1249, %v1876
    %v1879 = vmul.f32 %v1878, 0.5
    %v1880 = vtanh.pop %v1879
    %v1881 = vmul.f32 %v1880, 0.5
    %v1882 = vadd.f32 %v1881, 0.5
    %v1883 = vtanh.pop %v1878
    %v1885 = vrot.slane %v1799, 4
    %v1887 = vmul.f32 %v1882, %v1885
    %1889 = vrot.lane.b32.xlu0 %v1883, 64
    %v1890 = vpop.permute.xlu0 %1889
    %v1892 = vmul.f32 %v1882, %v1890
    %1894 = vrot.lane.b32.xlu0 %v1892, 32
    %v1895 = vpop.permute.xlu0 %1894
    %v1897 = vadd.f32 %v1887, %v1895
    %v1898 = vtanh.pop %v1897
    %1900 = vrot.lane.b32.xlu0 %v1898, 64
    %v1901 = vpop.permute.xlu0 %1900
    %v1903 = vmul.f32 %v1882, %v1901
    %v1905 = vrot.slane %v1903, 4
    %1906 = vrot.lane.b32.xlu0 %v1905, 32
    %v1907 = vpop.permute.xlu0 %1906
    %v1910 = vsel %vm924, %v1907, %v1802
    %v1912 = vrot.slane %v1897, 4
    %1913 = vrot.lane.b32.xlu0 %v1912, 96
    %v1914 = vpop.permute.xlu0 %1913
    %1916 = vrot.lane.b32.xlu0 %v1799, 96
    %v1917 = vpop.permute.xlu0 %1916
    %v1919 = vsel %vm924, %v1914, %v1917
    %v1921 = vsel %vm230, %v1910, 0
    %1923 = vmatprep.subr.mxu0 0.0
    %1924 = vmatpush1.msra.mxu0 0.0
    %1925 = vmatprep.subr.mxu0 0.0
    %1926 = vmatpush1.msra.mxu0 0.0
    %1927 = vmatprep.subr.mxu0 0.0
    %1928 = vmatpush1.msra.mxu0 0.0
    %1929 = vmatprep.subr.mxu0 0.0
    %1930 = vmatpush1.msra.mxu0 0.0
    %1931 = vmatprep.subr.mxu0 0.0
    %1932 = vmatpush1.msra.mxu0 0.0
    %1933 = vmatprep.subr.mxu0 0.0
    %1934 = vmatpush1.msra.mxu0 0.0
    %1935 = vmatprep.subr.mxu0 0.0
    %1936 = vmatpush1.msra.mxu0 0.0
    %1937 = vmatprep.subr.mxu0 0.0
    %1938 = vmatpush1.msra.mxu0 0.0
    %1939 = vmatprep.subr.mxu0 0.0
    %1940 = vmatpush1.msra.mxu0 0.0
    %1941 = vmatprep.subr.mxu0 0.0
    %1942 = vmatpush1.msra.mxu0 0.0
    %1943 = vmatprep.subr.mxu0 0.0
    %1944 = vmatpush1.msra.mxu0 0.0
    %1945 = vmatprep.subr.mxu0 0.0
    %1946 = vmatpush1.msra.mxu0 0.0
    %1947 = vmatprep.subr.mxu0 0.0
    %1948 = vmatpush1.msra.mxu0 %v143
    %1949 = vmatprep.subr.mxu0 0.0
    %1950 = vmatpush1.msra.mxu0 %v142
    %1951 = vmatprep.subr.mxu0 0.0
    %1952 = vmatpush1.msra.mxu0 %v141
    %1953 = vmatprep.subr.mxu0 0.0
    %1954 = vmatpush1.msra.mxu0 %v140
    %1955 = vmatprep.subr.mxu0 0.0
    %1956 = vmatpush2.msra.mxu0 0.0
    %1957 = vmatprep.subr.mxu0 0.0
    %1958 = vmatpush2.msra.mxu0 0.0
    %1959 = vmatprep.subr.mxu0 0.0
    %1960 = vmatpush2.msra.mxu0 0.0
    %1961 = vmatprep.subr.mxu0 0.0
    %1962 = vmatpush2.msra.mxu0 0.0
    %1963 = vmatprep.subr.mxu0 0.0
    %1964 = vmatpush2.msra.mxu0 0.0
    %1965 = vmatprep.subr.mxu0 0.0
    %1966 = vmatpush2.msra.mxu0 0.0
    %1967 = vmatprep.subr.mxu0 0.0
    %1968 = vmatpush2.msra.mxu0 0.0
    %1969 = vmatprep.subr.mxu0 0.0
    %1970 = vmatpush2.msra.mxu0 0.0
    %1971 = vmatprep.subr.mxu0 0.0
    %1972 = vmatpush2.msra.mxu0 0.0
    %1973 = vmatprep.subr.mxu0 0.0
    %1974 = vmatpush2.msra.mxu0 0.0
    %1975 = vmatprep.subr.mxu0 0.0
    %1976 = vmatpush2.msra.mxu0 0.0
    %1977 = vmatprep.subr.mxu0 0.0
    %1978 = vmatpush2.msra.mxu0 0.0
    %1979 = vmatprep.subr.mxu0 0.0
    %1980 = vmatpush2.msra.mxu0 0.0
    %1981 = vmatprep.subr.mxu0 0.0
    %1982 = vmatpush2.msra.mxu0 0.0
    %1983 = vmatprep.subr.mxu0 0.0
    %1984 = vmatpush2.msra.mxu0 0.0
    %1985 = vmatprep.subr.mxu0 0.0
    %1986 = vmatpush2.msra.mxu0 0.0
    %1987 = vmatprep.mubr.f32.mxu0 0.0
    %1988 = vmatmul.mubr.f32.gmra.mxu0 %v1921
    %v1989 = vpop.f32.mrf.mxu0
    %v1990 = vadd.f32 0.0, %v1989
    %v1991 = vpop.f32.mrf.mxu0
    %1992 = vdwg.mxu0
    %v1993 = vadd.f32 %v1252, %v1990
    %v1994 = vmul.f32 %v1993, 0.5
    %v1995 = vtanh.pop %v1994
    %v1996 = vmul.f32 %v1995, 0.5
    %v1997 = vadd.f32 %v1996, 0.5
    %v1998 = vtanh.pop %v1993
    %2000 = vrot.lane.b32.xlu0 %v1919, 32
    %v2001 = vpop.permute.xlu0 %2000
    %v2003 = vmul.f32 %v1997, %v2001
    %2005 = vrot.lane.b32.xlu0 %v1998, 64
    %v2006 = vpop.permute.xlu0 %2005
    %v2008 = vmul.f32 %v1997, %v2006
    %2010 = vrot.lane.b32.xlu0 %v2008, 32
    %v2011 = vpop.permute.xlu0 %2010
    %v2013 = vadd.f32 %v2003, %v2011
    %v2014 = vtanh.pop %v2013
    %2016 = vrot.lane.b32.xlu0 %v2014, 64
    %v2017 = vpop.permute.xlu0 %2016
    %v2019 = vmul.f32 %v1997, %v2017
    %2020 = vrot.lane.b32.xlu0 %v1910, 96
    %v2021 = vpop.permute.xlu0 %2020
    %v2023 = vsel %vm1046, %v2019, %v2021
    %v2024 = vsel %vm1046, %v2013, %v2001
    %2026 = vrot.lane.b32.xlu0 %v2023, 32
    %v2027 = vpop.permute.xlu0 %2026
    %v2028 = vsel %vm230, %v2027, 0
    %2030 = vmatprep.subr.mxu0 0.0
    %2031 = vmatpush1.msra.mxu0 0.0
    %2032 = vmatprep.subr.mxu0 0.0
    %2033 = vmatpush1.msra.mxu0 0.0
    %2034 = vmatprep.subr.mxu0 0.0
    %2035 = vmatpush1.msra.mxu0 0.0
    %2036 = vmatprep.subr.mxu0 0.0
    %2037 = vmatpush1.msra.mxu0 0.0
    %2038 = vmatprep.subr.mxu0 0.0
    %2039 = vmatpush1.msra.mxu0 0.0
    %2040 = vmatprep.subr.mxu0 0.0
    %2041 = vmatpush1.msra.mxu0 0.0
    %2042 = vmatprep.subr.mxu0 0.0
    %2043 = vmatpush1.msra.mxu0 0.0
    %2044 = vmatprep.subr.mxu0 0.0
    %2045 = vmatpush1.msra.mxu0 0.0
    %2046 = vmatprep.subr.mxu0 0.0
    %2047 = vmatpush1.msra.mxu0 0.0
    %2048 = vmatprep.subr.mxu0 0.0
    %2049 = vmatpush1.msra.mxu0 0.0
    %2050 = vmatprep.subr.mxu0 0.0
    %2051 = vmatpush1.msra.mxu0 0.0
    %2052 = vmatprep.subr.mxu0 0.0
    %2053 = vmatpush1.msra.mxu0 0.0
    %2054 = vmatprep.subr.mxu0 0.0
    %2055 = vmatpush1.msra.mxu0 %v143
    %2056 = vmatprep.subr.mxu0 0.0
    %2057 = vmatpush1.msra.mxu0 %v142
    %2058 = vmatprep.subr.mxu0 0.0
    %2059 = vmatpush1.msra.mxu0 %v141
    %2060 = vmatprep.subr.mxu0 0.0
    %2061 = vmatpush1.msra.mxu0 %v140
    %2062 = vmatprep.subr.mxu0 0.0
    %2063 = vmatpush2.msra.mxu0 0.0
    %2064 = vmatprep.subr.mxu0 0.0
    %2065 = vmatpush2.msra.mxu0 0.0
    %2066 = vmatprep.subr.mxu0 0.0
    %2067 = vmatpush2.msra.mxu0 0.0
    %2068 = vmatprep.subr.mxu0 0.0
    %2069 = vmatpush2.msra.mxu0 0.0
    %2070 = vmatprep.subr.mxu0 0.0
    %2071 = vmatpush2.msra.mxu0 0.0
    %2072 = vmatprep.subr.mxu0 0.0
    %2073 = vmatpush2.msra.mxu0 0.0
    %2074 = vmatprep.subr.mxu0 0.0
    %2075 = vmatpush2.msra.mxu0 0.0
    %2076 = vmatprep.subr.mxu0 0.0
    %2077 = vmatpush2.msra.mxu0 0.0
    %2078 = vmatprep.subr.mxu0 0.0
    %2079 = vmatpush2.msra.mxu0 0.0
    %2080 = vmatprep.subr.mxu0 0.0
    %2081 = vmatpush2.msra.mxu0 0.0
    %2082 = vmatprep.subr.mxu0 0.0
    %2083 = vmatpush2.msra.mxu0 0.0
    %2084 = vmatprep.subr.mxu0 0.0
    %2085 = vmatpush2.msra.mxu0 0.0
    %2086 = vmatprep.subr.mxu0 0.0
    %2087 = vmatpush2.msra.mxu0 0.0
    %2088 = vmatprep.subr.mxu0 0.0
    %2089 = vmatpush2.msra.mxu0 0.0
    %2090 = vmatprep.subr.mxu0 0.0
    %2091 = vmatpush2.msra.mxu0 0.0
    %2092 = vmatprep.subr.mxu0 0.0
    %2093 = vmatpush2.msra.mxu0 0.0
    %2094 = vmatprep.mubr.f32.mxu0 0.0
    %2095 = vmatmul.mubr.f32.gmra.mxu0 %v2028
    %v2096 = vpop.f32.mrf.mxu0
    %v2097 = vadd.f32 0.0, %v2096
    %v2098 = vpop.f32.mrf.mxu0
    %2099 = vdwg.mxu0
    %v2101 = vrot.slane %v2097, 4
    %v2103 = vadd.f32 %v1252, %v2101
    %v2104 = vmul.f32 %v2103, 0.5
    %v2105 = vtanh.pop %v2104
    %v2106 = vmul.f32 %v2105, 0.5
    %v2107 = vadd.f32 %v2106, 0.5
    %v2108 = vtanh.pop %v2103
    %v2110 = vrot.slane %v2024, 4
    %v2112 = vmul.f32 %v2107, %v2110
    %2114 = vrot.lane.b32.xlu0 %v2108, 64
    %v2115 = vpop.permute.xlu0 %2114
    %v2117 = vmul.f32 %v2107, %v2115
    %2119 = vrot.lane.b32.xlu0 %v2117, 32
    %v2120 = vpop.permute.xlu0 %2119
    %v2122 = vadd.f32 %v2112, %v2120
    %v2123 = vtanh.pop %v2122
    %2125 = vrot.lane.b32.xlu0 %v2123, 64
    %v2126 = vpop.permute.xlu0 %2125
    %v2128 = vmul.f32 %v2107, %v2126
    %v2130 = vrot.slane %v2128, 4
    %2131 = vrot.lane.b32.xlu0 %v2130, 32
    %v2132 = vpop.permute.xlu0 %2131
    %v2135 = vsel %vm1163, %v2132, %v2027
    %v2136 = vpack.c.bf16 %v2135, %v2135
    %v2137 = vld [vmem:[%s8] sm:$0xff]
    %v2138 = vld [vmem:[%s8 + $0x8] sm:$0xff]
    %v2139 = vld [vmem:[%s8 + $0x10] sm:$0xff]
    %v2140 = vld [vmem:[%s8 + $0x18] sm:$0xff]
    %v2141 = vld [vmem:[%s8 + $0x20] sm:$0xff]
    %v2142 = vld [vmem:[%s8 + $0x28] sm:$0xff]
    %v2143 = vld [vmem:[%s8 + $0x30] sm:$0xff]
    %v2144 = vld [vmem:[%s8 + $0x38] sm:$0xff]
    %v2145 = vld [vmem:[#allocation11] sm:$0xf]
    %v2147 = vlaneseq
    %v2148 = vshrl.u32 %v2147, 7
    %v2149 = vsub.s32 0, %v2148
    %v2150 = vrot.slane %v2145, %v2149
    %v2151 = vlaneseq
    %v2152 = vshrl.u32 %v2151, 7
    %v2153 = vsub.s32 1, %v2152
    %v2154 = vrot.slane %v2145, %v2153
    %v2155 = vlaneseq
    %v2156 = vshrl.u32 %v2155, 7
    %v2157 = vsub.s32 2, %v2156
    %v2158 = vrot.slane %v2145, %v2157
    %v2159 = vlaneseq
    %v2160 = vshrl.u32 %v2159, 7
    %v2161 = vsub.s32 3, %v2160
    %v2162 = vrot.slane %v2145, %v2161
    %v2175 = vunpack.c.l.b16 %v2137
    %v2176 = vunpack.c.h.b16 %v2137
    %v2177 = vunpack.c.l.b16 %v2138
    %v2178 = vunpack.c.h.b16 %v2138
    %v2179 = vunpack.c.l.b16 %v2139
    %v2180 = vunpack.c.h.b16 %v2139
    %v2181 = vunpack.c.l.b16 %v2140
    %v2182 = vunpack.c.h.b16 %v2140
    %v2183 = vunpack.c.l.b16 %v2141
    %v2184 = vunpack.c.h.b16 %v2141
    %v2185 = vunpack.c.l.b16 %v2142
    %v2186 = vunpack.c.h.b16 %v2142
    %v2187 = vunpack.c.l.b16 %v2143
    %v2188 = vunpack.c.h.b16 %v2143
    %v2189 = vunpack.c.l.b16 %v2144
    %v2190 = vunpack.c.h.b16 %v2144
    %v2191 = vpack.c.b16 %v2179, %v2175
    %v2192 = vpack.c.b16 %v2180, %v2176
    %v2193 = vpack.c.b16 %v2181, %v2177
    %v2194 = vpack.c.b16 %v2182, %v2178
    %v2195 = vpack.c.b16 %v2187, %v2183
    %v2196 = vpack.c.b16 %v2188, %v2184
    %v2197 = vpack.c.b16 %v2189, %v2185
    %v2198 = vpack.c.b16 %v2190, %v2186
    %v2208 = vsel %vm230, %v2136, 0
    %2210 = vmatprep.subr.bf16.mxu0 0
    %2211 = vmatpush1.bf16.msra.mxu0 0
    %2212 = vmatprep.subr.bf16.mxu0 0
    %2213 = vmatpush1.bf16.msra.mxu0 0
    %2214 = vmatprep.subr.bf16.mxu0 0
    %2215 = vmatpush1.bf16.msra.mxu0 0
    %2216 = vmatprep.subr.bf16.mxu0 0
    %2217 = vmatpush1.bf16.msra.mxu0 0
    %2218 = vmatprep.subr.bf16.mxu0 0
    %2219 = vmatpush1.bf16.msra.mxu0 0
    %2220 = vmatprep.subr.bf16.mxu0 0
    %2221 = vmatpush1.bf16.msra.mxu0 0
    %2222 = vmatprep.subr.bf16.mxu0 %v2196
    %2223 = vmatpush1.bf16.msra.mxu0 %v2195
    %2224 = vmatprep.subr.bf16.mxu0 %v2192
    %2225 = vmatpush1.bf16.msra.mxu0 %v2191
    %2226 = vmatprep.subr.bf16.mxu0 0
    %2227 = vmatpush2.bf16.msra.mxu0 0
    %2228 = vmatprep.subr.bf16.mxu0 0
    %2229 = vmatpush2.bf16.msra.mxu0 0
    %2230 = vmatprep.subr.bf16.mxu0 0
    %2231 = vmatpush2.bf16.msra.mxu0 0
    %2232 = vmatprep.subr.bf16.mxu0 0
    %2233 = vmatpush2.bf16.msra.mxu0 0
    %2234 = vmatprep.subr.bf16.mxu0 0
    %2235 = vmatpush2.bf16.msra.mxu0 0
    %2236 = vmatprep.subr.bf16.mxu0 0
    %2237 = vmatpush2.bf16.msra.mxu0 0
    %2238 = vmatprep.subr.bf16.mxu0 0
    %2239 = vmatpush2.bf16.msra.mxu0 0
    %2240 = vmatprep.subr.bf16.mxu0 0
    %2241 = vmatpush2.bf16.msra.mxu0 0
    %2242 = vmatprep.mubr.bf16.mxu0 0
    %2243 = vmatmul.mubr.bf16.gmra.mxu0 %v2208
    %v2244 = vpop.f32.mrf.mxu0
    %v2245 = vadd.f32 %v2150, %v2244
    %v2246 = vpop.f32.mrf.mxu0
    %v2247 = vadd.f32 %v2154, %v2246
    %v2248 = vpop.f32.mrf.mxu0
    %v2249 = vpop.f32.mrf.mxu0
    %2250 = vdwg.mxu0
    %2251 = vmatprep.subr.bf16.mxu0 0
    %2252 = vmatpush1.bf16.msra.mxu0 0
    %2253 = vmatprep.subr.bf16.mxu0 0
    %2254 = vmatpush1.bf16.msra.mxu0 0
    %2255 = vmatprep.subr.bf16.mxu0 0
    %2256 = vmatpush1.bf16.msra.mxu0 0
    %2257 = vmatprep.subr.bf16.mxu0 0
    %2258 = vmatpush1.bf16.msra.mxu0 0
    %2259 = vmatprep.subr.bf16.mxu0 0
    %2260 = vmatpush1.bf16.msra.mxu0 0
    %2261 = vmatprep.subr.bf16.mxu0 0
    %2262 = vmatpush1.bf16.msra.mxu0 0
    %2263 = vmatprep.subr.bf16.mxu0 %v2198
    %2264 = vmatpush1.bf16.msra.mxu0 %v2197
    %2265 = vmatprep.subr.bf16.mxu0 %v2194
    %2266 = vmatpush1.bf16.msra.mxu0 %v2193
    %2267 = vmatprep.subr.bf16.mxu0 0
    %2268 = vmatpush2.bf16.msra.mxu0 0
    %2269 = vmatprep.subr.bf16.mxu0 0
    %2270 = vmatpush2.bf16.msra.mxu0 0
    %2271 = vmatprep.subr.bf16.mxu0 0
    %2272 = vmatpush2.bf16.msra.mxu0 0
    %2273 = vmatprep.subr.bf16.mxu0 0
    %2274 = vmatpush2.bf16.msra.mxu0 0
    %2275 = vmatprep.subr.bf16.mxu0 0
    %2276 = vmatpush2.bf16.msra.mxu0 0
    %2277 = vmatprep.subr.bf16.mxu0 0
    %2278 = vmatpush2.bf16.msra.mxu0 0
    %2279 = vmatprep.subr.bf16.mxu0 0
    %2280 = vmatpush2.bf16.msra.mxu0 0
    %2281 = vmatprep.subr.bf16.mxu0 0
    %2282 = vmatpush2.bf16.msra.mxu0 0
    %2283 = vmatprep.mubr.bf16.mxu0 0
    %2284 = vmatmul.mubr.bf16.gmra.mxu0 %v2208
    %v2285 = vpop.f32.mrf.mxu0
    %v2286 = vadd.f32 %v2158, %v2285
    %v2287 = vpop.f32.mrf.mxu0
    %v2288 = vadd.f32 %v2162, %v2287
    %v2289 = vpop.f32.mrf.mxu0
    %v2290 = vpop.f32.mrf.mxu0
    %2291 = vdwg.mxu0
    %vm2292 = vcmp.ge.f32.partialorder %v2245, 0.0
    %vm2293 = vcmp.ge.f32.partialorder %v2247, 0.0
    %vm2294 = vcmp.ge.f32.partialorder %v2286, 0.0
    %vm2295 = vcmp.ge.f32.partialorder %v2288, 0.0
    %v2296 = vmul.f32 %v2245, 0.05
    %v2297 = vmul.f32 %v2247, 0.05
    %v2298 = vmul.f32 %v2286, 0.05
    %v2299 = vmul.f32 %v2288, 0.05
    %v2300 = vsel %vm2292, %v2245, %v2296
    %v2301 = vsel %vm2293, %v2247, %v2297
    %v2302 = vsel %vm2294, %v2286, %v2298
    %v2303 = vsel %vm2295, %v2288, %v2299
    %v2304 = vpack.c.bf16 %v2300, %v2300
    %v2305 = vpack.c.bf16 %v2301, %v2301
    %v2306 = vpack.c.bf16 %v2302, %v2302
    %v2307 = vpack.c.bf16 %v2303, %v2303
    %v2308 = vld [vmem:[#allocation12] sm:$0xf]
    %v2309 = vld [vmem:[#allocation12 + $0x4] sm:$0xf]
    %v2310 = vld [vmem:[#allocation12 + $0x8] sm:$0xf]
    %v2311 = vld [vmem:[#allocation12 + $0xc] sm:$0xf]
    %v2312 = vld [vmem:[#allocation12 + $0x10] sm:$0xf]
    %v2313 = vld [vmem:[#allocation12 + $0x14] sm:$0xf]
    %v2314 = vld [vmem:[#allocation12 + $0x18] sm:$0xf]
    %v2315 = vld [vmem:[#allocation12 + $0x1c] sm:$0xf]
    %v2316 = vld [vmem:[#allocation12 + $0x20] sm:$0xf]
    %v2317 = vld [vmem:[#allocation12 + $0x24] sm:$0xf]
    %v2318 = vld [vmem:[#allocation12 + $0x28] sm:$0xf]
    %v2319 = vld [vmem:[#allocation12 + $0x2c] sm:$0xf]
    %v2320 = vld [vmem:[#allocation12 + $0x30] sm:$0xf]
    %v2321 = vld [vmem:[#allocation12 + $0x34] sm:$0xf]
    %v2322 = vld [vmem:[#allocation12 + $0x38] sm:$0xf]
    %v2323 = vld [vmem:[#allocation12 + $0x3c] sm:$0xf]
    %v2324 = vld [vmem:[#allocation12 + $0x40] sm:$0xf]
    %v2325 = vld [vmem:[#allocation12 + $0x44] sm:$0xf]
    %v2326 = vld [vmem:[#allocation12 + $0x48] sm:$0xf]
    %v2327 = vld [vmem:[#allocation12 + $0x4c] sm:$0xf]
    %v2328 = vld [vmem:[#allocation12 + $0x50] sm:$0xf]
    %v2329 = vld [vmem:[#allocation12 + $0x54] sm:$0xf]
    %v2330 = vld [vmem:[#allocation12 + $0x58] sm:$0xf]
    %v2331 = vld [vmem:[#allocation12 + $0x5c] sm:$0xf]
    %v2332 = vld [vmem:[#allocation12 + $0x60] sm:$0xf]
    %v2333 = vld [vmem:[#allocation12 + $0x64] sm:$0xf]
    %v2334 = vld [vmem:[#allocation12 + $0x68] sm:$0xf]
    %v2335 = vld [vmem:[#allocation12 + $0x6c] sm:$0xf]
    %v2336 = vld [vmem:[#allocation12 + $0x70] sm:$0xf]
    %v2337 = vld [vmem:[#allocation12 + $0x74] sm:$0xf]
    %v2338 = vld [vmem:[#allocation12 + $0x78] sm:$0xf]
    %v2339 = vld [vmem:[#allocation12 + $0x7c] sm:$0xf]
    %v2340 = vld [vmem:[#allocation12 + $0x80] sm:$0xf]
    %v2341 = vld [vmem:[#allocation12 + $0x84] sm:$0xf]
    %v2342 = vld [vmem:[#allocation12 + $0x88] sm:$0xf]
    %v2343 = vld [vmem:[#allocation12 + $0x8c] sm:$0xf]
    %v2344 = vld [vmem:[#allocation12 + $0x90] sm:$0xf]
    %v2345 = vld [vmem:[#allocation12 + $0x94] sm:$0xf]
    %v2346 = vld [vmem:[#allocation12 + $0x98] sm:$0xf]
    %v2347 = vld [vmem:[#allocation12 + $0x9c] sm:$0xf]
    %v2348 = vld [vmem:[#allocation12 + $0xa0] sm:$0xf]
    %v2349 = vld [vmem:[#allocation12 + $0xa4] sm:$0xf]
    %v2350 = vld [vmem:[#allocation12 + $0xa8] sm:$0xf]
    %v2351 = vld [vmem:[#allocation12 + $0xac] sm:$0xf]
    %v2352 = vld [vmem:[#allocation12 + $0xb0] sm:$0xf]
    %v2353 = vld [vmem:[#allocation12 + $0xb4] sm:$0xf]
    %v2354 = vld [vmem:[#allocation12 + $0xb8] sm:$0xf]
    %v2355 = vld [vmem:[#allocation12 + $0xbc] sm:$0xf]
    %v2356 = vld [vmem:[#allocation12 + $0xc0] sm:$0xf]
    %v2357 = vld [vmem:[#allocation12 + $0xc4] sm:$0xf]
    %v2358 = vld [vmem:[#allocation12 + $0xc8] sm:$0xf]
    %v2359 = vld [vmem:[#allocation12 + $0xcc] sm:$0xf]
    %v2360 = vld [vmem:[#allocation12 + $0xd0] sm:$0xf]
    %v2361 = vld [vmem:[#allocation12 + $0xd4] sm:$0xf]
    %v2362 = vld [vmem:[#allocation12 + $0xd8] sm:$0xf]
    %v2363 = vld [vmem:[#allocation12 + $0xdc] sm:$0xf]
    %v2364 = vld [vmem:[#allocation12 + $0xe0] sm:$0xf]
    %v2365 = vld [vmem:[#allocation12 + $0xe4] sm:$0xf]
    %v2366 = vld [vmem:[#allocation12 + $0xe8] sm:$0xf]
    %v2367 = vld [vmem:[#allocation12 + $0xec] sm:$0xf]
    %v2368 = vld [vmem:[#allocation12 + $0xf0] sm:$0xf]
    %v2369 = vld [vmem:[#allocation12 + $0xf4] sm:$0xf]
    %v2370 = vld [vmem:[#allocation12 + $0xf8] sm:$0xf]
    %v2371 = vld [vmem:[#allocation12 + $0xfc] sm:$0xf]
    %v2372 = vld [vmem:[#allocation14] sm:$0x1]
    %v2374 = vlaneseq
    %v2375 = vshrl.u32 %v2374, 7
    %v2376 = vsub.s32 0, %v2375
    %v2377 = vrot.slane %v2372, %v2376
    %v2443 = vunpack.c.l.b16 %v2308
    %v2444 = vunpack.c.l.b16 %v2309
    %v2445 = vunpack.c.l.b16 %v2310
    %v2446 = vunpack.c.l.b16 %v2311
    %v2447 = vunpack.c.l.b16 %v2312
    %v2448 = vunpack.c.l.b16 %v2313
    %v2449 = vunpack.c.l.b16 %v2314
    %v2450 = vunpack.c.l.b16 %v2315
    %v2451 = vunpack.c.l.b16 %v2316
    %v2452 = vunpack.c.l.b16 %v2317
    %v2453 = vunpack.c.l.b16 %v2318
    %v2454 = vunpack.c.l.b16 %v2319
    %v2455 = vunpack.c.l.b16 %v2320
    %v2456 = vunpack.c.l.b16 %v2321
    %v2457 = vunpack.c.l.b16 %v2322
    %v2458 = vunpack.c.l.b16 %v2323
    %v2459 = vunpack.c.l.b16 %v2324
    %v2460 = vunpack.c.l.b16 %v2325
    %v2461 = vunpack.c.l.b16 %v2326
    %v2462 = vunpack.c.l.b16 %v2327
    %v2463 = vunpack.c.l.b16 %v2328
    %v2464 = vunpack.c.l.b16 %v2329
    %v2465 = vunpack.c.l.b16 %v2330
    %v2466 = vunpack.c.l.b16 %v2331
    %v2467 = vunpack.c.l.b16 %v2332
    %v2468 = vunpack.c.l.b16 %v2333
    %v2469 = vunpack.c.l.b16 %v2334
    %v2470 = vunpack.c.l.b16 %v2335
    %v2471 = vunpack.c.l.b16 %v2336
    %v2472 = vunpack.c.l.b16 %v2337
    %v2473 = vunpack.c.l.b16 %v2338
    %v2474 = vunpack.c.l.b16 %v2339
    %v2475 = vunpack.c.l.b16 %v2340
    %v2476 = vunpack.c.l.b16 %v2341
    %v2477 = vunpack.c.l.b16 %v2342
    %v2478 = vunpack.c.l.b16 %v2343
    %v2479 = vunpack.c.l.b16 %v2344
    %v2480 = vunpack.c.l.b16 %v2345
    %v2481 = vunpack.c.l.b16 %v2346
    %v2482 = vunpack.c.l.b16 %v2347
    %v2483 = vunpack.c.l.b16 %v2348
    %v2484 = vunpack.c.l.b16 %v2349
    %v2485 = vunpack.c.l.b16 %v2350
    %v2486 = vunpack.c.l.b16 %v2351
    %v2487 = vunpack.c.l.b16 %v2352
    %v2488 = vunpack.c.l.b16 %v2353
    %v2489 = vunpack.c.l.b16 %v2354
    %v2490 = vunpack.c.l.b16 %v2355
    %v2491 = vunpack.c.l.b16 %v2356
    %v2492 = vunpack.c.l.b16 %v2357
    %v2493 = vunpack.c.l.b16 %v2358
    %v2494 = vunpack.c.l.b16 %v2359
    %v2495 = vunpack.c.l.b16 %v2360
    %v2496 = vunpack.c.l.b16 %v2361
    %v2497 = vunpack.c.l.b16 %v2362
    %v2498 = vunpack.c.l.b16 %v2363
    %v2499 = vunpack.c.l.b16 %v2364
    %v2500 = vunpack.c.l.b16 %v2365
    %v2501 = vunpack.c.l.b16 %v2366
    %v2502 = vunpack.c.l.b16 %v2367
    %v2503 = vunpack.c.l.b16 %v2368
    %v2504 = vunpack.c.l.b16 %v2369
    %v2505 = vunpack.c.l.b16 %v2370
    %v2506 = vunpack.c.l.b16 %v2371
    %v2507 = vpack.c.b16 %v2444, %v2443
    %v2508 = vpack.c.b16 %v2446, %v2445
    %v2509 = vpack.c.b16 %v2448, %v2447
    %v2510 = vpack.c.b16 %v2450, %v2449
    %v2511 = vpack.c.b16 %v2452, %v2451
    %v2512 = vpack.c.b16 %v2454, %v2453
    %v2513 = vpack.c.b16 %v2456, %v2455
    %v2514 = vpack.c.b16 %v2458, %v2457
    %v2515 = vpack.c.b16 %v2460, %v2459
    %v2516 = vpack.c.b16 %v2462, %v2461
    %v2517 = vpack.c.b16 %v2464, %v2463
    %v2518 = vpack.c.b16 %v2466, %v2465
    %v2519 = vpack.c.b16 %v2468, %v2467
    %v2520 = vpack.c.b16 %v2470, %v2469
    %v2521 = vpack.c.b16 %v2472, %v2471
    %v2522 = vpack.c.b16 %v2474, %v2473
    %v2523 = vpack.c.b16 %v2476, %v2475
    %v2524 = vpack.c.b16 %v2478, %v2477
    %v2525 = vpack.c.b16 %v2480, %v2479
    %v2526 = vpack.c.b16 %v2482, %v2481
    %v2527 = vpack.c.b16 %v2484, %v2483
    %v2528 = vpack.c.b16 %v2486, %v2485
    %v2529 = vpack.c.b16 %v2488, %v2487
    %v2530 = vpack.c.b16 %v2490, %v2489
    %v2531 = vpack.c.b16 %v2492, %v2491
    %v2532 = vpack.c.b16 %v2494, %v2493
    %v2533 = vpack.c.b16 %v2496, %v2495
    %v2534 = vpack.c.b16 %v2498, %v2497
    %v2535 = vpack.c.b16 %v2500, %v2499
    %v2536 = vpack.c.b16 %v2502, %v2501
    %v2537 = vpack.c.b16 %v2504, %v2503
    %v2538 = vpack.c.b16 %v2506, %v2505
    %2571 = vmatprep.subr.bf16.mxu0 0
    %2572 = vmatpush1.bf16.msra.mxu0 %v2514
    %2573 = vmatprep.subr.bf16.mxu0 0
    %2574 = vmatpush1.bf16.msra.mxu0 %v2513
    %2575 = vmatprep.subr.bf16.mxu0 0
    %2576 = vmatpush1.bf16.msra.mxu0 %v2512
    %2577 = vmatprep.subr.bf16.mxu0 0
    %2578 = vmatpush1.bf16.msra.mxu0 %v2511
    %2579 = vmatprep.subr.bf16.mxu0 0
    %2580 = vmatpush1.bf16.msra.mxu0 %v2510
    %2581 = vmatprep.subr.bf16.mxu0 0
    %2582 = vmatpush1.bf16.msra.mxu0 %v2509
    %2583 = vmatprep.subr.bf16.mxu0 0
    %2584 = vmatpush1.bf16.msra.mxu0 %v2508
    %2585 = vmatprep.subr.bf16.mxu0 0
    %2586 = vmatpush1.bf16.msra.mxu0 %v2507
    %2587 = vmatprep.subr.bf16.mxu0 0
    %2588 = vmatpush2.bf16.msra.mxu0 %v2522
    %2589 = vmatprep.subr.bf16.mxu0 0
    %2590 = vmatpush2.bf16.msra.mxu0 %v2521
    %2591 = vmatprep.subr.bf16.mxu0 0
    %2592 = vmatpush2.bf16.msra.mxu0 %v2520
    %2593 = vmatprep.subr.bf16.mxu0 0
    %2594 = vmatpush2.bf16.msra.mxu0 %v2519
    %2595 = vmatprep.subr.bf16.mxu0 0
    %2596 = vmatpush2.bf16.msra.mxu0 %v2518
    %2597 = vmatprep.subr.bf16.mxu0 0
    %2598 = vmatpush2.bf16.msra.mxu0 %v2517
    %2599 = vmatprep.subr.bf16.mxu0 0
    %2600 = vmatpush2.bf16.msra.mxu0 %v2516
    %2601 = vmatprep.subr.bf16.mxu0 0
    %2602 = vmatpush2.bf16.msra.mxu0 %v2515
    %2603 = vmatprep.mubr.bf16.mxu0 %v2305
    %2604 = vmatmul.mubr.bf16.gmra.mxu0 %v2304
    %v2605 = vpop.f32.mrf.mxu0
    %v2606 = vadd.f32 %v2377, %v2605
    %v2607 = vpop.f32.mrf.mxu0
    %v2608 = vpop.f32.mrf.mxu0
    %v2609 = vpop.f32.mrf.mxu0
    %2610 = vdwg.mxu0
    %2611 = vmatprep.subr.bf16.mxu0 0
    %2612 = vmatpush1.bf16.msra.mxu0 %v2530
    %2613 = vmatprep.subr.bf16.mxu0 0
    %2614 = vmatpush1.bf16.msra.mxu0 %v2529
    %2615 = vmatprep.subr.bf16.mxu0 0
    %2616 = vmatpush1.bf16.msra.mxu0 %v2528
    %2617 = vmatprep.subr.bf16.mxu0 0
    %2618 = vmatpush1.bf16.msra.mxu0 %v2527
    %2619 = vmatprep.subr.bf16.mxu0 0
    %2620 = vmatpush1.bf16.msra.mxu0 %v2526
    %2621 = vmatprep.subr.bf16.mxu0 0
    %2622 = vmatpush1.bf16.msra.mxu0 %v2525
    %2623 = vmatprep.subr.bf16.mxu0 0
    %2624 = vmatpush1.bf16.msra.mxu0 %v2524
    %2625 = vmatprep.subr.bf16.mxu0 0
    %2626 = vmatpush1.bf16.msra.mxu0 %v2523
    %2627 = vmatprep.subr.bf16.mxu0 0
    %2628 = vmatpush2.bf16.msra.mxu0 %v2538
    %2629 = vmatprep.subr.bf16.mxu0 0
    %2630 = vmatpush2.bf16.msra.mxu0 %v2537
    %2631 = vmatprep.subr.bf16.mxu0 0
    %2632 = vmatpush2.bf16.msra.mxu0 %v2536
    %2633 = vmatprep.subr.bf16.mxu0 0
    %2634 = vmatpush2.bf16.msra.mxu0 %v2535
    %2635 = vmatprep.subr.bf16.mxu0 0
    %2636 = vmatpush2.bf16.msra.mxu0 %v2534
    %2637 = vmatprep.subr.bf16.mxu0 0
    %2638 = vmatpush2.bf16.msra.mxu0 %v2533
    %2639 = vmatprep.subr.bf16.mxu0 0
    %2640 = vmatpush2.bf16.msra.mxu0 %v2532
    %2641 = vmatprep.subr.bf16.mxu0 0
    %2642 = vmatpush2.bf16.msra.mxu0 %v2531
    %2643 = vmatprep.mubr.bf16.mxu0 %v2307
    %2644 = vmatmul.mubr.bf16.gmra.mxu0 %v2306
    %v2645 = vpop.f32.mrf.mxu0
    %v2646 = vadd.f32 %v2606, %v2645
    %v2647 = vpop.f32.mrf.mxu0
    %v2648 = vpop.f32.mrf.mxu0
    %v2649 = vpop.f32.mrf.mxu0
    %2650 = vdwg.mxu0
    %2651 = vst [vmem:[#allocation15] sm:$0xf] 0.0
    %2652 = vst.msk [vmem:[#allocation15] sm:$0xf] %vm338, %v2135
    %2653 = vst [vmem:[#allocation16] sm:$0xf] %v2646
    // Predicated region
    $region78: #{lstm_model_forward.1} parent=1 // pred_check
      _
    $region79: #{lstm_model_forward.1} parent=1 // pred_check_branch
      %2655 = sbr.rel (0) target = $region81
    $region80: #{lstm_model_forward.1} parent=1 // pred_region
      %s2657 = ssub.s32 64, 64
      %2658 = vsyncadd [#allocation5], %s2657
      %s2660 = sshll.u32 [#allocation15], 4
      %s2661 = int_to_ptr.vmem [resolvable:$true] %s2660
      %2663 = dma.vmem_to_hbm [thread:$0]  %s2661, 64, %s12, [#allocation5]
    $region81: #{lstm_model_forward.1} parent=1 // pred_fallthru
      _
    // Predicated region
    $region82: #{lstm_model_forward.1} parent=1 // pred_check
      _
    $region83: #{lstm_model_forward.1} parent=1 // pred_check_branch
      %2665 = sbr.rel (0) target = $region85
    $region84: #{lstm_model_forward.1} parent=1 // pred_region
      %s2667 = ssub.s32 64, 64
      %2668 = vsyncadd [#allocation17], %s2667
      %s2670 = sshll.u32 [#allocation16], 4
      %s2671 = int_to_ptr.vmem [resolvable:$true] %s2670
      %2673 = dma.vmem_to_hbm [thread:$0]  %s2671, 64, %s13, [#allocation17]
    $region85: #{lstm_model_forward.1} parent=1 // pred_fallthru
      _
    // Predicated region
    $region86: #{lstm_model_forward.1} parent=1 // pred_check
      _
    $region87: #{lstm_model_forward.1} parent=1 // pred_check_branch
      %2675 = sbr.rel (0) target = $region89
    $region88: #{lstm_model_forward.1} parent=1 // pred_region
      %2676 = dma.done [#allocation5], 64
    $region89: #{lstm_model_forward.1} parent=1 // pred_fallthru
      _
    // Predicated region
    $region90: #{lstm_model_forward.1} parent=1 // pred_check
      _
    $region91: #{lstm_model_forward.1} parent=1 // pred_check_branch
      %2678 = sbr.rel (0) target = $region93
    $region92: #{lstm_model_forward.1} parent=1 // pred_region
      %2679 = dma.done [#allocation17], 64
    $region93: #{lstm_model_forward.1} parent=1 // pred_fallthru
      _
    %2680 = vsyncpa [#allocation4], 1
    %2681 = vsyncpa [#allocation7], 1
    %2682 = vsyncpa [#allocation10], 1
    %2683 = vsyncpa [#allocation13], 1
    %2684 = vsyncpa [#allocation5], 1
    %2685 = vsyncpa [#allocation17], 1

</llo_original>
